<compile_context>
chip_gen: v6e
topology: v6e:2x2x1
jax: 0.10.0
libtpu: 0.0.40
codegen_flags: <defaults>
</compile_context>

<pallas_src>
import math

import jax
import jax.numpy as jnp
from jax.experimental import pallas as pl
from jax.experimental.pallas import tpu as pltpu

# ----------------------------- configuration -------------------------------
B = 2            # batch size
S = 8            # BERT sequence length
H = 32           # BERT hidden size (config.hidden_size)
NH = 2           # attention heads
DH = H // NH
INTER = 64       # BERT intermediate size
VOCAB = 50       # BERT vocab (tokenizer_len)
TYPE_VOCAB = 2
W = 8            # word sequence length (max_word_len)
V = 16           # args.vector_dim
G = 16           # args.grnn_dim
D = 2 * G        # BiLSTM output dim / GCN dim
NUM_ENT_TOK = 4  # entity_token_ids per example (so e_token dim = 4*H)
NUM_LABELS = 5   # config.num_relation_labels
RENORM = True    # args.renorm
WORD_VOCAB = 40  # len(args.word2index)
PAD_ID = 1       # padding_idx of words_embedding
FEAT = 4 * D + 5 * H   # 288

F32 = jnp.float32
BF16 = jnp.bfloat16


# ----------------------------- kernel helpers -------------------------------
def _mxu(a, b):
    """bf16-operand MXU matmul with f32 accumulation."""
    return jnp.dot(a.astype(BF16), b.astype(BF16), preferred_element_type=F32)


def _mxu3(eq, a, b):
    return jnp.einsum(eq, a.astype(BF16), b.astype(BF16),
                      preferred_element_type=F32)


def _ln(v, g, b, eps=1e-12):
    mu = jnp.mean(v, axis=-1, keepdims=True)
    var = jnp.mean((v - mu) ** 2, axis=-1, keepdims=True)
    return (v - mu) * jax.lax.rsqrt(var + eps) * g + b


# ----------------------------- the single fused kernel ----------------------
def _fused_kernel(
        ids_ref,                                    # SMEM (B, NUM_ENT_TOK) int32
        x_ref, bias_ref,
        qkvw_ref, qkvb_ref, aow_ref, aob_ref, ln1g_ref, ln1b_ref,
        ffiw_ref, ffib_ref, ffow_ref, ffob_ref, ln2g_ref, ln2b_ref,
        plw_ref, plb_ref,
        xw_ref, wic_ref, bic_ref, whc_ref,
        a1g_ref, a2g_ref, a1d_ref, a2d_ref,
        g1w_ref, g1b_ref, g2w_ref, g2b_ref,
        d1w_ref, d1b_ref, d2w_ref, d2b_ref,
        e1m_ref, e2m_ref, clsw_ref, clsb_ref,
        out_ref,
        h2_ref, wo_ref, feat_ref):
    # ---------------- BERT encoder (single layer) + pooler ----------------
    x = x_ref[...]                                           # (B*S, H)
    qkv = _mxu(x, qkvw_ref[...]) + qkvb_ref[...]             # (B*S, 3H), Q pre-scaled

    def heads(off):
        # stack heads head-major over the batch dim -> (NH*B, S, DH)
        return jnp.concatenate(
            [qkv[:, off + h * DH: off + (h + 1) * DH].reshape(B, S, DH)
             for h in range(NH)], axis=0)

    q, k, v = heads(0), heads(H), heads(2 * H)
    s = _mxu3("nqd,nkd->nqk", q, k) + bias_ref[...]          # (NH*B, S, S)
    p = jax.nn.softmax(s, axis=-1)
    o = _mxu3("nqk,nkd->nqd", p, v)                          # (NH*B, S, DH)
    attn = jnp.concatenate(
        [o[h * B:(h + 1) * B].reshape(B * S, DH) for h in range(NH)], axis=-1)

    h1 = _ln(x + _mxu(attn, aow_ref[...]) + aob_ref[...],
             ln1g_ref[...], ln1b_ref[...])
    # TODO(synk): tanh-approx GELU (HF BERT uses exact erf GELU).
    ff = jax.nn.gelu(_mxu(h1, ffiw_ref[...]) + ffib_ref[...])
    h2 = _ln(h1 + _mxu(ff, ffow_ref[...]) + ffob_ref[...],
             ln2g_ref[...], ln2b_ref[...])
    h2_ref[...] = h2                                         # keep for entity gather

    cls = jnp.concatenate([h2[b * S:b * S + 1, :] for b in range(B)], axis=0)
    pooled = jnp.tanh(_mxu(cls, plw_ref[...]) + plb_ref[...])  # (B, H)

    # ----------- fused bidirectional LSTM (both directions per step) --------
    gx = _mxu(xw_ref[...], wic_ref[...]) + bic_ref[...]        # (W*B, 8G)
    whc = whc_ref[...].astype(BF16)                            # (2G, 8G)
    hcat = jnp.zeros((B, 2 * G), F32)                          # [h_fwd | h_bwd]
    ccat = jnp.zeros((B, 2 * G), F32)
    for t in range(W):                                         # W = 8, unrolled
        gates = gx[t * B:(t + 1) * B, :] + jnp.dot(
            hcat.astype(BF16), whc, preferred_element_type=F32)   # (B, 8G)=(2,128)
        gi = jax.nn.sigmoid(gates[:, 0:2 * G])
        gf = jax.nn.sigmoid(gates[:, 2 * G:4 * G])
        gg = jnp.tanh(gates[:, 4 * G:6 * G])
        go = jax.nn.sigmoid(gates[:, 6 * G:8 * G])
        ccat = gf * ccat + gi * gg
        hcat = go * jnp.tanh(ccat)
        wo_ref[:, t, 0:G] = hcat[:, 0:G]                  # forward hidden @ pos t
        wo_ref[:, W - 1 - t, G:2 * G] = hcat[:, G:2 * G]  # backward hidden @ W-1-t

    # -------- GCN stacks, batched over batch via block-diag adjacencies -----
    wo_flat = wo_ref[...].reshape(B * W, D)                    # (B*W, D)

    def gcn(xv, a_ref, w_ref, b_ref):
        # adjacency is pre-normalized (and layer-1 has valid_filter folded in)
        return jnp.maximum(_mxu(a_ref[...], _mxu(xv, w_ref[...])) + b_ref[...],
                           0.0)

    wg = gcn(gcn(wo_flat, a1g_ref, g1w_ref, g1b_ref), a2g_ref, g2w_ref, g2b_ref)
    wd = gcn(gcn(wo_flat, a1d_ref, d1w_ref, d1b_ref), a2d_ref, d2w_ref, d2b_ref)

    # --------- entity pools + feature assembly (VMEM scratch) + classifier ---
    e1m = e1m_ref[...]                                         # (B, W, 1)
    e2m = e2m_ref[...]
    wg3 = wg.reshape(B, W, D)
    wd3 = wd.reshape(B, W, D)

    def pool(h3, m):
        return jnp.max(h3 * m + (1.0 - m) * (-1000.0), axis=1)  # (B, D)

    feat_ref[:, 0:D] = pool(wg3, e1m)
    feat_ref[:, D:2 * D] = pool(wg3, e2m)
    feat_ref[:, 2 * D:3 * D] = pool(wd3, e1m)
    feat_ref[:, 3 * D:4 * D] = pool(wd3, e2m)
    feat_ref[:, 4 * D:4 * D + H] = pooled
    base = 4 * D + H
    for b in range(B):                                         # B=2, unrolled
        for kk in range(NUM_ENT_TOK):                          # 4, unrolled
            idx = ids_ref[b, kk]                               # SMEM scalar
            row = h2_ref[pl.ds(b * S + idx, 1), :]             # (1, H) dyn gather
            feat_ref[pl.ds(b, 1), pl.ds(base + kk * H, H)] = row

    out_ref[...] = _mxu(feat_ref[...], clsw_ref[...]) + clsb_ref[...]


# ----------------------------- host-side prep -------------------------------
def layer_norm(x, g, b, eps=1e-12):
    mu = jnp.mean(x, axis=-1, keepdims=True)
    var = jnp.mean((x - mu) ** 2, axis=-1, keepdims=True)
    return (x - mu) / jnp.sqrt(var + eps) * g + b


def build_valid_select(word_feature):
    """Selection matrix P s.t. P @ word_out compacts non-pad rows to the front
    (stable order) and zeros the remaining rows — exact `valid_filter` semantics."""
    keep = word_feature != PAD_ID                                     # (B, W)
    order = jnp.argsort(jnp.where(keep, 0, 1), axis=1, stable=True)   # (B, W)
    counts = jnp.sum(keep, axis=1, keepdims=True)
    valid = (jnp.arange(W)[None, :] < counts).astype(F32)             # (B, W)
    return jax.nn.one_hot(order, W, dtype=F32) * valid[:, :, None]    # (B, W, W)


def _interleave_gate_cols(wf, wb):
    """[i_f i_b f_f f_b g_f g_b o_f o_b] column layout (each block G wide)."""
    cols = []
    for gidx in range(4):
        cols.append(wf[:, gidx * G:(gidx + 1) * G])
        cols.append(wb[:, gidx * G:(gidx + 1) * G])
    return jnp.concatenate(cols, axis=-1)


def build_fused_lstm(p):
    """Block-diagonal, gate-interleaved weights so one matmul per step drives
    both LSTM directions on the concatenated [h_fwd | h_bwd] state."""
    zV = jnp.zeros((V, 4 * G), F32)
    zG = jnp.zeros((G, 4 * G), F32)
    wi_c = _interleave_gate_cols(jnp.concatenate([p["lstm_wif"], zV], axis=0),
                                 jnp.concatenate([zV, p["lstm_wib"]], axis=0))
    wh_c = _interleave_gate_cols(jnp.concatenate([p["lstm_whf"], zG], axis=0),
                                 jnp.concatenate([zG, p["lstm_whb"]], axis=0))
    b_c = _interleave_gate_cols(p["lstm_bf"].reshape(1, 4 * G),
                                p["lstm_bb"].reshape(1, 4 * G))
    return wi_c, wh_c, b_c                      # (2V,8G), (2G,8G), (1,8G)


def _block_diag(m):                              # (B, W, W) -> (B*W, B*W)
    out = jnp.zeros((B * W, B * W), F32)
    for b in range(B):
        out = out.at[b * W:(b + 1) * W, b * W:(b + 1) * W].set(m[b])
    return out


def _norm_adj(adj):
    denom = jnp.sum(adj, axis=-1, keepdims=True)
    if RENORM:
        denom = denom + 1.0
    return adj / denom


# ----------------------------- forward --------------------------------------
def model_forward(params, input_ids, attention_masks, segment_ids,
                  entity_token_ids, word_feature, e1_mask, e2_mask,
                  dep_type_matrix, dep_distence_matrix):
    p = params
    scale = 1.0 / math.sqrt(DH)

    # ----- BERT embeddings + LN (gather-heavy; stays in XLA glue) -----
    x = (p["tok_emb"][input_ids] + p["pos_emb"][None, :S, :]
         + p["type_emb"][segment_ids])
    x2d = layer_norm(x, p["emb_ln_g"], p["emb_ln_b"]).reshape(B * S, H).astype(F32)

    # attention prep: head-tiled additive mask, 1/sqrt(dh) folded into Q weights
    bias = (1.0 - attention_masks.astype(F32)) * (-10000.0)           # (B, S)
    bias_nb = jnp.tile(bias[:, None, :], (NH, 1, 1))                  # (NH*B, 1, S)
    qkvw = p["wqkv"].at[:, :H].multiply(scale)
    qkvb = p["bqkv"].at[:H].multiply(scale).reshape(1, 3 * H)

    # word-branch prep
    wemb = p["word_emb"][word_feature]                                 # (B, W, V)
    x_pair = jnp.concatenate([wemb, wemb[:, ::-1, :]], axis=-1)        # (B, W, 2V)
    x_pair_tm = jnp.transpose(x_pair, (1, 0, 2)).reshape(W * B, 2 * V).astype(F32)
    wi_c, wh_c, b_c = build_fused_lstm(p)

    sel = build_valid_select(word_feature)                             # (B, W, W)
    adj_g = jnp.clip(dep_type_matrix[:, 1, :, :], 0.0, 1.0)
    adj_d = dep_distence_matrix
    # dep_type_matrix[:, 0] ("dis" type ids) is extracted but unused by the
    # reference forward.
    ag = _norm_adj(adj_g)
    ad = _norm_adj(adj_d)
    a1g = _block_diag(jnp.einsum("bij,bjk->bik", ag, sel))   # valid_filter folded
    a2g = _block_diag(ag)
    a1d = _block_diag(jnp.einsum("bij,bjk->bik", ad, sel))
    a2d = _block_diag(ad)

    args = [
        entity_token_ids.astype(jnp.int32),
        x2d, bias_nb,
        qkvw, qkvb, p["wo"], p["bo"].reshape(1, H),
        p["ln1_g"].reshape(1, H), p["ln1_b"].reshape(1, H),
        p["wi"], p["bi"].reshape(1, INTER),
        p["wo2"], p["bo2"].reshape(1, H),
        p["ln2_g"].reshape(1, H), p["ln2_b"].reshape(1, H),
        p["wp"], p["bp"].reshape(1, H),
        x_pair_tm, wi_c, b_c, wh_c,
        a1g, a2g, a1d, a2d,
        p["gcn_g1_w"], p["gcn_g1_b"].reshape(1, D),
        p["gcn_g2_w"], p["gcn_g2_b"].reshape(1, D),
        p["gcn_d1_w"], p["gcn_d1_b"].reshape(1, D),
        p["gcn_d2_w"], p["gcn_d2_b"].reshape(1, D),
        e1_mask.reshape(B, W, 1).astype(F32),
        e2_mask.reshape(B, W, 1).astype(F32),
        p["cls_w"], p["cls_b"].reshape(1, NUM_LABELS),
    ]
    in_specs = ([pl.BlockSpec(memory_space=pltpu.MemorySpace.SMEM)]
                + [pl.BlockSpec(memory_space=pltpu.MemorySpace.VMEM)]
                * (len(args) - 1))
    return pl.pallas_call(
        _fused_kernel,
        out_shape=jax.ShapeDtypeStruct((B, NUM_LABELS), F32),
        in_specs=in_specs,
        out_specs=pl.BlockSpec(memory_space=pltpu.MemorySpace.VMEM),
        scratch_shapes=[pltpu.VMEM((B * S, H), F32),    # encoder output
                        pltpu.VMEM((B, W, D), F32),     # BiLSTM word_out
                        pltpu.VMEM((B, FEAT), F32)],    # final feature slab
    )(*args)


# ----------------------------- parameters -----------------------------------
def init_params(key):
    keys = iter(jax.random.split(key, 64))

    def nrm(shape, scale=0.02):
        return (scale * jax.random.normal(next(keys), shape)).astype(F32)

    p = {}
    p["tok_emb"] = nrm((VOCAB, H))
    p["pos_emb"] = nrm((S, H))
    p["type_emb"] = nrm((TYPE_VOCAB, H))
    p["emb_ln_g"] = jnp.ones((H,), F32)
    p["emb_ln_b"] = jnp.zeros((H,), F32)

    p["wqkv"] = nrm((H, 3 * H))            # fused Q|K|V projection
    p["bqkv"] = jnp.zeros((3 * H,), F32)
    p["wo"] = nrm((H, H))
    p["bo"] = jnp.zeros((H,), F32)
    p["ln1_g"] = jnp.ones((H,), F32)
    p["ln1_b"] = jnp.zeros((H,), F32)
    p["wi"] = nrm((H, INTER))
    p["bi"] = jnp.zeros((INTER,), F32)
    p["wo2"] = nrm((INTER, H))
    p["bo2"] = jnp.zeros((H,), F32)
    p["ln2_g"] = jnp.ones((H,), F32)
    p["ln2_b"] = jnp.zeros((H,), F32)
    p["wp"] = nrm((H, H))
    p["bp"] = jnp.zeros((H,), F32)

    word_emb = nrm((WORD_VOCAB, V), 0.1)
    p["word_emb"] = word_emb.at[PAD_ID].set(0.0)       # padding_idx = 1

    lscale = 1.0 / math.sqrt(G)
    p["lstm_wif"] = nrm((V, 4 * G), lscale)
    p["lstm_whf"] = nrm((G, 4 * G), lscale)
    p["lstm_bf"] = jnp.zeros((4 * G,), F32)
    p["lstm_wib"] = nrm((V, 4 * G), lscale)
    p["lstm_whb"] = nrm((G, 4 * G), lscale)
    p["lstm_bb"] = jnp.zeros((4 * G,), F32)

    for n in ["gcn_g1", "gcn_g2", "gcn_d1", "gcn_d2"]:
        p[n + "_w"] = nrm((D, D), 0.1)
        p[n + "_b"] = jnp.zeros((D,), F32)

    p["cls_w"] = nrm((FEAT, NUM_LABELS), 0.05)
    p["cls_b"] = jnp.zeros((NUM_LABELS,), F32)
    return p


# ----------------------------- main ------------------------------------------
if __name__ == "__main__":
    key = jax.random.PRNGKey(0)
    kp, k1, k2, k3, k4, k5 = jax.random.split(key, 6)
    params = init_params(kp)

    input_ids = jax.random.randint(k1, (B, S), 2, VOCAB, dtype=jnp.int32)
    attention_masks = jnp.array([[1, 1, 1, 1, 1, 1, 0, 0],
                                 [1, 1, 1, 1, 1, 1, 1, 1]], F32)
    segment_ids = jnp.zeros((B, S), jnp.int32)
    entity_token_ids = jax.random.randint(k2, (B, NUM_ENT_TOK), 0, S,
                                          dtype=jnp.int32)
    word_feature = jax.random.randint(k3, (B, W), 2, WORD_VOCAB, dtype=jnp.int32)
    word_feature = word_feature.at[0, 6:].set(PAD_ID).at[1, 7:].set(PAD_ID)
    e1_mask = jnp.zeros((B, W), F32).at[:, 1:3].set(1.0)
    e2_mask = jnp.zeros((B, W), F32).at[:, 3:5].set(1.0)
    dep_type_matrix = jax.random.randint(k4, (B, 2, W, W), 0, 4,
                                         dtype=jnp.int32).astype(F32)
    dep_distence_matrix = jax.random.uniform(k5, (B, W, W), F32)

    logits = jax.jit(model_forward)(params, input_ids, attention_masks,
                                    segment_ids, entity_token_ids, word_feature,
                                    e1_mask, e2_mask, dep_type_matrix,
                                    dep_distence_matrix)
    jax.block_until_ready(logits)
    assert logits.shape == (B, NUM_LABELS) and logits.dtype == jnp.float32
    print("KERNEL_OK")
</pallas_src>

<mosaic_0001>
module attributes {stable_mosaic.version = 11 : i64} {
  func.func @_fused_kernel(%arg0: memref<2x4xi32, #tpu.memory_space<smem>>, %arg1: memref<16x32xf32, #tpu.memory_space<vmem>>, %arg2: memref<4x1x8xf32, #tpu.memory_space<vmem>>, %arg3: memref<32x96xf32, #tpu.memory_space<vmem>>, %arg4: memref<1x96xf32, #tpu.memory_space<vmem>>, %arg5: memref<32x32xf32, #tpu.memory_space<vmem>>, %arg6: memref<1x32xf32, #tpu.memory_space<vmem>>, %arg7: memref<1x32xf32, #tpu.memory_space<vmem>>, %arg8: memref<1x32xf32, #tpu.memory_space<vmem>>, %arg9: memref<32x64xf32, #tpu.memory_space<vmem>>, %arg10: memref<1x64xf32, #tpu.memory_space<vmem>>, %arg11: memref<64x32xf32, #tpu.memory_space<vmem>>, %arg12: memref<1x32xf32, #tpu.memory_space<vmem>>, %arg13: memref<1x32xf32, #tpu.memory_space<vmem>>, %arg14: memref<1x32xf32, #tpu.memory_space<vmem>>, %arg15: memref<32x32xf32, #tpu.memory_space<vmem>>, %arg16: memref<1x32xf32, #tpu.memory_space<vmem>>, %arg17: memref<16x32xf32, #tpu.memory_space<vmem>>, %arg18: memref<32x128xf32, #tpu.memory_space<vmem>>, %arg19: memref<1x128xf32, #tpu.memory_space<vmem>>, %arg20: memref<32x128xf32, #tpu.memory_space<vmem>>, %arg21: memref<16x16xf32, #tpu.memory_space<vmem>>, %arg22: memref<16x16xf32, #tpu.memory_space<vmem>>, %arg23: memref<16x16xf32, #tpu.memory_space<vmem>>, %arg24: memref<16x16xf32, #tpu.memory_space<vmem>>, %arg25: memref<32x32xf32, #tpu.memory_space<vmem>>, %arg26: memref<1x32xf32, #tpu.memory_space<vmem>>, %arg27: memref<32x32xf32, #tpu.memory_space<vmem>>, %arg28: memref<1x32xf32, #tpu.memory_space<vmem>>, %arg29: memref<32x32xf32, #tpu.memory_space<vmem>>, %arg30: memref<1x32xf32, #tpu.memory_space<vmem>>, %arg31: memref<32x32xf32, #tpu.memory_space<vmem>>, %arg32: memref<1x32xf32, #tpu.memory_space<vmem>>, %arg33: memref<2x8x1xf32, #tpu.memory_space<vmem>>, %arg34: memref<2x8x1xf32, #tpu.memory_space<vmem>>, %arg35: memref<288x5xf32, #tpu.memory_space<vmem>>, %arg36: memref<1x5xf32, #tpu.memory_space<vmem>>, %arg37: memref<2x5xf32, #tpu.memory_space<vmem>>, %arg38: memref<16x32xf32, #tpu.memory_space<vmem>>, %arg39: memref<2x8x32xf32, #tpu.memory_space<vmem>>, %arg40: memref<2x288xf32, #tpu.memory_space<vmem>>) attributes {dimension_semantics = [], scalar_prefetch = 0 : i64, scratch_operands = 3 : i64, tpu.core_type = #tpu.core_type<tc>} {
    %c0 = arith.constant 0 : index
    %c0_0 = arith.constant 0 : index
    %0 = vector.load %arg1[%c0, %c0_0] : memref<16x32xf32, #tpu.memory_space<vmem>>, vector<16x32xf32>
    %c0_1 = arith.constant 0 : index
    %c0_2 = arith.constant 0 : index
    %1 = vector.load %arg3[%c0_1, %c0_2] : memref<32x96xf32, #tpu.memory_space<vmem>>, vector<32x96xf32>
    %2 = arith.truncf %0 : vector<16x32xf32> to vector<16x32xbf16>
    %3 = arith.truncf %1 : vector<32x96xf32> to vector<32x96xbf16>
    %cst = arith.constant dense<0.000000e+00> : vector<16x96xf32>
    %4 = tpu.matmul %2, %3, %cst {dimension_numbers = #tpu.dot_dimension_numbers<[1], [0], [0], [1], [0, 0, 1, 1], [], []>} : vector<16x32xbf16>, vector<32x96xbf16>, vector<16x96xf32> -> vector<16x96xf32>
    %c0_3 = arith.constant 0 : index
    %c0_4 = arith.constant 0 : index
    %5 = vector.load %arg4[%c0_3, %c0_4] : memref<1x96xf32, #tpu.memory_space<vmem>>, vector<1x96xf32>
    %6 = vector.broadcast %5 : vector<1x96xf32> to vector<16x96xf32>
    %7 = arith.addf %4, %6 : vector<16x96xf32>
    %8 = vector.extract_strided_slice %7 {offsets = [0, 0], sizes = [16, 16], strides = [1, 1]} : vector<16x96xf32> to vector<16x16xf32>
    %9 = vector.shape_cast %8 : vector<16x16xf32> to vector<2x8x16xf32>
    %10 = vector.extract_strided_slice %7 {offsets = [0, 16], sizes = [16, 16], strides = [1, 1]} : vector<16x96xf32> to vector<16x16xf32>
    %11 = vector.shape_cast %10 : vector<16x16xf32> to vector<2x8x16xf32>
    %12 = tpu.concatenate %9, %11 in 0 : vector<2x8x16xf32>, vector<2x8x16xf32> -> vector<4x8x16xf32>
    %13 = vector.extract_strided_slice %7 {offsets = [0, 32], sizes = [16, 16], strides = [1, 1]} : vector<16x96xf32> to vector<16x16xf32>
    %14 = vector.shape_cast %13 : vector<16x16xf32> to vector<2x8x16xf32>
    %15 = vector.extract_strided_slice %7 {offsets = [0, 48], sizes = [16, 16], strides = [1, 1]} : vector<16x96xf32> to vector<16x16xf32>
    %16 = vector.shape_cast %15 : vector<16x16xf32> to vector<2x8x16xf32>
    %17 = tpu.concatenate %14, %16 in 0 : vector<2x8x16xf32>, vector<2x8x16xf32> -> vector<4x8x16xf32>
    %18 = vector.extract_strided_slice %7 {offsets = [0, 64], sizes = [16, 16], strides = [1, 1]} : vector<16x96xf32> to vector<16x16xf32>
    %19 = vector.shape_cast %18 : vector<16x16xf32> to vector<2x8x16xf32>
    %20 = vector.extract_strided_slice %7 {offsets = [0, 80], sizes = [16, 16], strides = [1, 1]} : vector<16x96xf32> to vector<16x16xf32>
    %21 = vector.shape_cast %20 : vector<16x16xf32> to vector<2x8x16xf32>
    %22 = tpu.concatenate %19, %21 in 0 : vector<2x8x16xf32>, vector<2x8x16xf32> -> vector<4x8x16xf32>
    %23 = arith.truncf %12 : vector<4x8x16xf32> to vector<4x8x16xbf16>
    %24 = arith.truncf %17 : vector<4x8x16xf32> to vector<4x8x16xbf16>
    "tpu.trace_start"() <{level = 10 : i32, message = "nqd,nkd->nqk"}> : () -> ()
    %cst_5 = arith.constant dense<0.000000e+00> : vector<4x8x8xf32>
    %25 = tpu.matmul %23, %24, %cst_5 {dimension_numbers = #tpu.dot_dimension_numbers<[2], [2], [1], [1], [0, 0, 0, 1, 1, 1], [0], [0]>} : vector<4x8x16xbf16>, vector<4x8x16xbf16>, vector<4x8x8xf32> -> vector<4x8x8xf32>
    "tpu.trace_stop"() : () -> ()
    %c0_6 = arith.constant 0 : index
    %c0_7 = arith.constant 0 : index
    %c0_8 = arith.constant 0 : index
    %26 = vector.load %arg2[%c0_6, %c0_7, %c0_8] : memref<4x1x8xf32, #tpu.memory_space<vmem>>, vector<4x1x8xf32>
    %27 = vector.broadcast %26 : vector<4x1x8xf32> to vector<4x8x8xf32>
    %28 = arith.addf %25, %27 : vector<4x8x8xf32>
    %cst_9 = arith.constant dense<0xFF800000> : vector<4x8xf32>
    %29 = vector.multi_reduction <maximumf>, %28, %cst_9 [2] : vector<4x8x8xf32> to vector<4x8xf32>
    %cst_10 = arith.constant 0xFF800000 : f32
    %30 = vector.broadcast %cst_10 : f32 to vector<4x8xf32>
    %31 = arith.maximumf %30, %29 : vector<4x8xf32>
    %32 = vector.shape_cast %31 : vector<4x8xf32> to vector<4x8x1xf32>
    %33 = vector.broadcast %32 : vector<4x8x1xf32> to vector<4x8x8xf32>
    %34 = arith.subf %28, %33 : vector<4x8x8xf32>
    %35 = math.exp %34 : vector<4x8x8xf32>
    %cst_11 = arith.constant dense<0.000000e+00> : vector<4x8xf32>
    %36 = vector.multi_reduction <add>, %35, %cst_11 [2] : vector<4x8x8xf32> to vector<4x8xf32>
    %37 = vector.shape_cast %36 : vector<4x8xf32> to vector<4x8x1xf32>
    %38 = vector.broadcast %37 : vector<4x8x1xf32> to vector<4x8x8xf32>
    %39 = arith.divf %35, %38 : vector<4x8x8xf32>
    %40 = arith.truncf %39 : vector<4x8x8xf32> to vector<4x8x8xbf16>
    %41 = arith.truncf %22 : vector<4x8x16xf32> to vector<4x8x16xbf16>
    "tpu.trace_start"() <{level = 10 : i32, message = "nqk,nkd->nqd"}> : () -> ()
    %cst_12 = arith.constant dense<0.000000e+00> : vector<4x8x16xf32>
    %42 = tpu.matmul %40, %41, %cst_12 {dimension_numbers = #tpu.dot_dimension_numbers<[2], [1], [1], [2], [0, 0, 0, 1, 1, 2], [0], [0]>} : vector<4x8x8xbf16>, vector<4x8x16xbf16>, vector<4x8x16xf32> -> vector<4x8x16xf32>
    "tpu.trace_stop"() : () -> ()
    %43 = vector.extract_strided_slice %42 {offsets = [0, 0, 0], sizes = [2, 8, 16], strides = [1, 1, 1]} : vector<4x8x16xf32> to vector<2x8x16xf32>
    %44 = vector.shape_cast %43 : vector<2x8x16xf32> to vector<16x16xf32>
    %45 = vector.extract_strided_slice %42 {offsets = [2, 0, 0], sizes = [2, 8, 16], strides = [1, 1, 1]} : vector<4x8x16xf32> to vector<2x8x16xf32>
    %46 = vector.shape_cast %45 : vector<2x8x16xf32> to vector<16x16xf32>
    %47 = tpu.concatenate %44, %46 in 1 : vector<16x16xf32>, vector<16x16xf32> -> vector<16x32xf32>
    %c0_13 = arith.constant 0 : index
    %c0_14 = arith.constant 0 : index
    %48 = vector.load %arg5[%c0_13, %c0_14] : memref<32x32xf32, #tpu.memory_space<vmem>>, vector<32x32xf32>
    %49 = arith.truncf %47 : vector<16x32xf32> to vector<16x32xbf16>
    %50 = arith.truncf %48 : vector<32x32xf32> to vector<32x32xbf16>
    %cst_15 = arith.constant dense<0.000000e+00> : vector<16x32xf32>
    %51 = tpu.matmul %49, %50, %cst_15 {dimension_numbers = #tpu.dot_dimension_numbers<[1], [0], [0], [1], [0, 0, 1, 1], [], []>} : vector<16x32xbf16>, vector<32x32xbf16>, vector<16x32xf32> -> vector<16x32xf32>
    %52 = arith.addf %0, %51 : vector<16x32xf32>
    %c0_16 = arith.constant 0 : index
    %c0_17 = arith.constant 0 : index
    %53 = vector.load %arg6[%c0_16, %c0_17] : memref<1x32xf32, #tpu.memory_space<vmem>>, vector<1x32xf32>
    %54 = vector.broadcast %53 : vector<1x32xf32> to vector<16x32xf32>
    %55 = arith.addf %52, %54 : vector<16x32xf32>
    %c0_18 = arith.constant 0 : index
    %c0_19 = arith.constant 0 : index
    %56 = vector.load %arg7[%c0_18, %c0_19] : memref<1x32xf32, #tpu.memory_space<vmem>>, vector<1x32xf32>
    %c0_20 = arith.constant 0 : index
    %c0_21 = arith.constant 0 : index
    %57 = vector.load %arg8[%c0_20, %c0_21] : memref<1x32xf32, #tpu.memory_space<vmem>>, vector<1x32xf32>
    %cst_22 = arith.constant dense<0.000000e+00> : vector<16xf32>
    %58 = vector.multi_reduction <add>, %55, %cst_22 [1] : vector<16x32xf32> to vector<16xf32>
    %59 = vector.shape_cast %58 : vector<16xf32> to vector<16x1xf32>
    %cst_23 = arith.constant 3.200000e+01 : f32
    %60 = vector.broadcast %cst_23 : f32 to vector<16x1xf32>
    %61 = arith.divf %59, %60 : vector<16x1xf32>
    %62 = vector.broadcast %61 : vector<16x1xf32> to vector<16x32xf32>
    %63 = arith.subf %55, %62 : vector<16x32xf32>
    %64 = arith.mulf %63, %63 : vector<16x32xf32>
    %cst_24 = arith.constant dense<0.000000e+00> : vector<16xf32>
    %65 = vector.multi_reduction <add>, %64, %cst_24 [1] : vector<16x32xf32> to vector<16xf32>
    %66 = vector.shape_cast %65 : vector<16xf32> to vector<16x1xf32>
    %cst_25 = arith.constant 3.200000e+01 : f32
    %67 = vector.broadcast %cst_25 : f32 to vector<16x1xf32>
    %68 = arith.divf %66, %67 : vector<16x1xf32>
    %69 = vector.broadcast %61 : vector<16x1xf32> to vector<16x32xf32>
    %70 = arith.subf %55, %69 : vector<16x32xf32>
    %cst_26 = arith.constant 9.99999996E-13 : f32
    %71 = vector.broadcast %cst_26 : f32 to vector<16x1xf32>
    %72 = arith.addf %68, %71 : vector<16x1xf32>
    %73 = math.rsqrt %72 : vector<16x1xf32>
    %74 = vector.broadcast %73 : vector<16x1xf32> to vector<16x32xf32>
    %75 = arith.mulf %70, %74 : vector<16x32xf32>
    %76 = vector.broadcast %56 : vector<1x32xf32> to vector<16x32xf32>
    %77 = arith.mulf %75, %76 : vector<16x32xf32>
    %78 = vector.broadcast %57 : vector<1x32xf32> to vector<16x32xf32>
    %79 = arith.addf %77, %78 : vector<16x32xf32>
    %c0_27 = arith.constant 0 : index
    %c0_28 = arith.constant 0 : index
    %80 = vector.load %arg9[%c0_27, %c0_28] : memref<32x64xf32, #tpu.memory_space<vmem>>, vector<32x64xf32>
    %81 = arith.truncf %79 : vector<16x32xf32> to vector<16x32xbf16>
    %82 = arith.truncf %80 : vector<32x64xf32> to vector<32x64xbf16>
    %cst_29 = arith.constant dense<0.000000e+00> : vector<16x64xf32>
    %83 = tpu.matmul %81, %82, %cst_29 {dimension_numbers = #tpu.dot_dimension_numbers<[1], [0], [0], [1], [0, 0, 1, 1], [], []>} : vector<16x32xbf16>, vector<32x64xbf16>, vector<16x64xf32> -> vector<16x64xf32>
    %c0_30 = arith.constant 0 : index
    %c0_31 = arith.constant 0 : index
    %84 = vector.load %arg10[%c0_30, %c0_31] : memref<1x64xf32, #tpu.memory_space<vmem>>, vector<1x64xf32>
    %85 = vector.broadcast %84 : vector<1x64xf32> to vector<16x64xf32>
    %86 = arith.addf %83, %85 : vector<16x64xf32>
    %87 = arith.mulf %86, %86 : vector<16x64xf32>
    %88 = arith.mulf %86, %87 : vector<16x64xf32>
    %cst_32 = arith.constant 4.471500e-02 : f32
    %89 = vector.broadcast %cst_32 : f32 to vector<16x64xf32>
    %90 = arith.mulf %89, %88 : vector<16x64xf32>
    %91 = arith.addf %86, %90 : vector<16x64xf32>
    %cst_33 = arith.constant 0.797884583 : f32
    %92 = vector.broadcast %cst_33 : f32 to vector<16x64xf32>
    %93 = arith.mulf %92, %91 : vector<16x64xf32>
    %94 = math.tanh %93 : vector<16x64xf32>
    %cst_34 = arith.constant 1.000000e+00 : f32
    %95 = vector.broadcast %cst_34 : f32 to vector<16x64xf32>
    %96 = arith.addf %95, %94 : vector<16x64xf32>
    %cst_35 = arith.constant 5.000000e-01 : f32
    %97 = vector.broadcast %cst_35 : f32 to vector<16x64xf32>
    %98 = arith.mulf %97, %96 : vector<16x64xf32>
    %99 = arith.mulf %86, %98 : vector<16x64xf32>
    %c0_36 = arith.constant 0 : index
    %c0_37 = arith.constant 0 : index
    %100 = vector.load %arg11[%c0_36, %c0_37] : memref<64x32xf32, #tpu.memory_space<vmem>>, vector<64x32xf32>
    %101 = arith.truncf %99 : vector<16x64xf32> to vector<16x64xbf16>
    %102 = arith.truncf %100 : vector<64x32xf32> to vector<64x32xbf16>
    %cst_38 = arith.constant dense<0.000000e+00> : vector<16x32xf32>
    %103 = tpu.matmul %101, %102, %cst_38 {dimension_numbers = #tpu.dot_dimension_numbers<[1], [0], [0], [1], [0, 0, 1, 1], [], []>} : vector<16x64xbf16>, vector<64x32xbf16>, vector<16x32xf32> -> vector<16x32xf32>
    %104 = arith.addf %79, %103 : vector<16x32xf32>
    %c0_39 = arith.constant 0 : index
    %c0_40 = arith.constant 0 : index
    %105 = vector.load %arg12[%c0_39, %c0_40] : memref<1x32xf32, #tpu.memory_space<vmem>>, vector<1x32xf32>
    %106 = vector.broadcast %105 : vector<1x32xf32> to vector<16x32xf32>
    %107 = arith.addf %104, %106 : vector<16x32xf32>
    %c0_41 = arith.constant 0 : index
    %c0_42 = arith.constant 0 : index
    %108 = vector.load %arg13[%c0_41, %c0_42] : memref<1x32xf32, #tpu.memory_space<vmem>>, vector<1x32xf32>
    %c0_43 = arith.constant 0 : index
    %c0_44 = arith.constant 0 : index
    %109 = vector.load %arg14[%c0_43, %c0_44] : memref<1x32xf32, #tpu.memory_space<vmem>>, vector<1x32xf32>
    %cst_45 = arith.constant dense<0.000000e+00> : vector<16xf32>
    %110 = vector.multi_reduction <add>, %107, %cst_45 [1] : vector<16x32xf32> to vector<16xf32>
    %111 = vector.shape_cast %110 : vector<16xf32> to vector<16x1xf32>
    %cst_46 = arith.constant 3.200000e+01 : f32
    %112 = vector.broadcast %cst_46 : f32 to vector<16x1xf32>
    %113 = arith.divf %111, %112 : vector<16x1xf32>
    %114 = vector.broadcast %113 : vector<16x1xf32> to vector<16x32xf32>
    %115 = arith.subf %107, %114 : vector<16x32xf32>
    %116 = arith.mulf %115, %115 : vector<16x32xf32>
    %cst_47 = arith.constant dense<0.000000e+00> : vector<16xf32>
    %117 = vector.multi_reduction <add>, %116, %cst_47 [1] : vector<16x32xf32> to vector<16xf32>
    %118 = vector.shape_cast %117 : vector<16xf32> to vector<16x1xf32>
    %cst_48 = arith.constant 3.200000e+01 : f32
    %119 = vector.broadcast %cst_48 : f32 to vector<16x1xf32>
    %120 = arith.divf %118, %119 : vector<16x1xf32>
    %121 = vector.broadcast %113 : vector<16x1xf32> to vector<16x32xf32>
    %122 = arith.subf %107, %121 : vector<16x32xf32>
    %cst_49 = arith.constant 9.99999996E-13 : f32
    %123 = vector.broadcast %cst_49 : f32 to vector<16x1xf32>
    %124 = arith.addf %120, %123 : vector<16x1xf32>
    %125 = math.rsqrt %124 : vector<16x1xf32>
    %126 = vector.broadcast %125 : vector<16x1xf32> to vector<16x32xf32>
    %127 = arith.mulf %122, %126 : vector<16x32xf32>
    %128 = vector.broadcast %108 : vector<1x32xf32> to vector<16x32xf32>
    %129 = arith.mulf %127, %128 : vector<16x32xf32>
    %130 = vector.broadcast %109 : vector<1x32xf32> to vector<16x32xf32>
    %131 = arith.addf %129, %130 : vector<16x32xf32>
    %c0_50 = arith.constant 0 : index
    %c0_51 = arith.constant 0 : index
    %132 = vector.load %arg38[%c0_50, %c0_51] : memref<16x32xf32, #tpu.memory_space<vmem>>, vector<16x32xf32>
    tpu.vector_store %arg38[%c0_50, %c0_51], %131 {strides = array<i32>} : memref<16x32xf32, #tpu.memory_space<vmem>>, vector<16x32xf32>,
    %133 = vector.extract_strided_slice %131 {offsets = [0, 0], sizes = [1, 32], strides = [1, 1]} : vector<16x32xf32> to vector<1x32xf32>
    %134 = vector.extract_strided_slice %131 {offsets = [8, 0], sizes = [1, 32], strides = [1, 1]} : vector<16x32xf32> to vector<1x32xf32>
    %135 = tpu.concatenate %133, %134 in 0 : vector<1x32xf32>, vector<1x32xf32> -> vector<2x32xf32>
    %c0_52 = arith.constant 0 : index
    %c0_53 = arith.constant 0 : index
    %136 = vector.load %arg15[%c0_52, %c0_53] : memref<32x32xf32, #tpu.memory_space<vmem>>, vector<32x32xf32>
    %137 = arith.truncf %135 : vector<2x32xf32> to vector<2x32xbf16>
    %138 = arith.truncf %136 : vector<32x32xf32> to vector<32x32xbf16>
    %cst_54 = arith.constant dense<0.000000e+00> : vector<2x32xf32>
    %139 = tpu.matmul %137, %138, %cst_54 {dimension_numbers = #tpu.dot_dimension_numbers<[1], [0], [0], [1], [0, 0, 1, 1], [], []>} : vector<2x32xbf16>, vector<32x32xbf16>, vector<2x32xf32> -> vector<2x32xf32>
    %c0_55 = arith.constant 0 : index
    %c0_56 = arith.constant 0 : index
    %140 = vector.load %arg16[%c0_55, %c0_56] : memref<1x32xf32, #tpu.memory_space<vmem>>, vector<1x32xf32>
    %141 = vector.broadcast %140 : vector<1x32xf32> to vector<2x32xf32>
    %142 = arith.addf %139, %141 : vector<2x32xf32>
    %143 = math.tanh %142 : vector<2x32xf32>
    %c0_57 = arith.constant 0 : index
    %c0_58 = arith.constant 0 : index
    %144 = vector.load %arg17[%c0_57, %c0_58] : memref<16x32xf32, #tpu.memory_space<vmem>>, vector<16x32xf32>
    %c0_59 = arith.constant 0 : index
    %c0_60 = arith.constant 0 : index
    %145 = vector.load %arg18[%c0_59, %c0_60] : memref<32x128xf32, #tpu.memory_space<vmem>>, vector<32x128xf32>
    %146 = arith.truncf %144 : vector<16x32xf32> to vector<16x32xbf16>
    %147 = arith.truncf %145 : vector<32x128xf32> to vector<32x128xbf16>
    %cst_61 = arith.constant dense<0.000000e+00> : vector<16x128xf32>
    %148 = tpu.matmul %146, %147, %cst_61 {dimension_numbers = #tpu.dot_dimension_numbers<[1], [0], [0], [1], [0, 0, 1, 1], [], []>} : vector<16x32xbf16>, vector<32x128xbf16>, vector<16x128xf32> -> vector<16x128xf32>
    %c0_62 = arith.constant 0 : index
    %c0_63 = arith.constant 0 : index
    %149 = vector.load %arg19[%c0_62, %c0_63] : memref<1x128xf32, #tpu.memory_space<vmem>>, vector<1x128xf32>
    %150 = vector.broadcast %149 : vector<1x128xf32> to vector<16x128xf32>
    %151 = arith.addf %148, %150 : vector<16x128xf32>
    %c0_64 = arith.constant 0 : index
    %c0_65 = arith.constant 0 : index
    %152 = vector.load %arg20[%c0_64, %c0_65] : memref<32x128xf32, #tpu.memory_space<vmem>>, vector<32x128xf32>
    %153 = arith.truncf %152 : vector<32x128xf32> to vector<32x128xbf16>
    %cst_66 = arith.constant 0.000000e+00 : f32
    %154 = vector.broadcast %cst_66 : f32 to vector<2x32xf32>
    %cst_67 = arith.constant 0.000000e+00 : f32
    %155 = vector.broadcast %cst_67 : f32 to vector<2x32xf32>
    %156 = vector.extract_strided_slice %151 {offsets = [0, 0], sizes = [2, 128], strides = [1, 1]} : vector<16x128xf32> to vector<2x128xf32>
    %157 = arith.truncf %154 : vector<2x32xf32> to vector<2x32xbf16>
    %cst_68 = arith.constant dense<0.000000e+00> : vector<2x128xf32>
    %158 = tpu.matmul %157, %153, %cst_68 {dimension_numbers = #tpu.dot_dimension_numbers<[1], [0], [0], [1], [0, 0, 1, 1], [], []>} : vector<2x32xbf16>, vector<32x128xbf16>, vector<2x128xf32> -> vector<2x128xf32>
    %159 = arith.addf %156, %158 : vector<2x128xf32>
    %160 = vector.extract_strided_slice %159 {offsets = [0, 0], sizes = [2, 32], strides = [1, 1]} : vector<2x128xf32> to vector<2x32xf32>
    %161 = arith.negf %160 : vector<2x32xf32>
    %162 = math.exp %161 : vector<2x32xf32>
    %cst_69 = arith.constant 1.000000e+00 : f32
    %163 = vector.broadcast %cst_69 : f32 to vector<2x32xf32>
    %164 = arith.addf %163, %162 : vector<2x32xf32>
    %165 = arith.divf %163, %164 : vector<2x32xf32>
    %166 = vector.extract_strided_slice %159 {offsets = [0, 32], sizes = [2, 32], strides = [1, 1]} : vector<2x128xf32> to vector<2x32xf32>
    %167 = arith.negf %166 : vector<2x32xf32>
    %168 = math.exp %167 : vector<2x32xf32>
    %cst_70 = arith.constant 1.000000e+00 : f32
    %169 = vector.broadcast %cst_70 : f32 to vector<2x32xf32>
    %170 = arith.addf %169, %168 : vector<2x32xf32>
    %171 = arith.divf %169, %170 : vector<2x32xf32>
    %172 = vector.extract_strided_slice %159 {offsets = [0, 64], sizes = [2, 32], strides = [1, 1]} : vector<2x128xf32> to vector<2x32xf32>
    %173 = math.tanh %172 : vector<2x32xf32>
    %174 = vector.extract_strided_slice %159 {offsets = [0, 96], sizes = [2, 32], strides = [1, 1]} : vector<2x128xf32> to vector<2x32xf32>
    %175 = arith.negf %174 : vector<2x32xf32>
    %176 = math.exp %175 : vector<2x32xf32>
    %cst_71 = arith.constant 1.000000e+00 : f32
    %177 = vector.broadcast %cst_71 : f32 to vector<2x32xf32>
    %178 = arith.addf %177, %176 : vector<2x32xf32>
    %179 = arith.divf %177, %178 : vector<2x32xf32>
    %180 = arith.mulf %171, %155 : vector<2x32xf32>
    %181 = arith.mulf %165, %173 : vector<2x32xf32>
    %182 = arith.addf %180, %181 : vector<2x32xf32>
    %183 = math.tanh %182 : vector<2x32xf32>
    %184 = arith.mulf %179, %183 : vector<2x32xf32>
    %185 = vector.extract_strided_slice %184 {offsets = [0, 0], sizes = [2, 16], strides = [1, 1]} : vector<2x32xf32> to vector<2x16xf32>
    %c0_72 = arith.constant 0 : index
    %c0_73 = arith.constant 0 : index
    %c0_74 = arith.constant 0 : index
    %186 = vector.load %arg39[%c0_72, %c0_73, %c0_74] : memref<2x8x32xf32, #tpu.memory_space<vmem>>, vector<2x1x16xf32>
    %187 = vector.shape_cast %186 : vector<2x1x16xf32> to vector<2x16xf32>
    %188 = vector.shape_cast %185 : vector<2x16xf32> to vector<2x1x16xf32>
    tpu.vector_store %arg39[%c0_72, %c0_73, %c0_74], %188 {strides = array<i32>} : memref<2x8x32xf32, #tpu.memory_space<vmem>>, vector<2x1x16xf32>,
    %189 = vector.extract_strided_slice %184 {offsets = [0, 16], sizes = [2, 16], strides = [1, 1]} : vector<2x32xf32> to vector<2x16xf32>
    %c0_75 = arith.constant 0 : index
    %c7 = arith.constant 7 : index
    %c16 = arith.constant 16 : index
    %190 = vector.load %arg39[%c0_75, %c7, %c16] : memref<2x8x32xf32, #tpu.memory_space<vmem>>, vector<2x1x16xf32>
    %191 = vector.shape_cast %190 : vector<2x1x16xf32> to vector<2x16xf32>
    %192 = vector.shape_cast %189 : vector<2x16xf32> to vector<2x1x16xf32>
    tpu.vector_store %arg39[%c0_75, %c7, %c16], %192 {strides = array<i32>} : memref<2x8x32xf32, #tpu.memory_space<vmem>>, vector<2x1x16xf32>,
    %193 = vector.extract_strided_slice %151 {offsets = [2, 0], sizes = [2, 128], strides = [1, 1]} : vector<16x128xf32> to vector<2x128xf32>
    %194 = arith.truncf %184 : vector<2x32xf32> to vector<2x32xbf16>
    %cst_76 = arith.constant dense<0.000000e+00> : vector<2x128xf32>
    %195 = tpu.matmul %194, %153, %cst_76 {dimension_numbers = #tpu.dot_dimension_numbers<[1], [0], [0], [1], [0, 0, 1, 1], [], []>} : vector<2x32xbf16>, vector<32x128xbf16>, vector<2x128xf32> -> vector<2x128xf32>
    %196 = arith.addf %193, %195 : vector<2x128xf32>
    %197 = vector.extract_strided_slice %196 {offsets = [0, 0], sizes = [2, 32], strides = [1, 1]} : vector<2x128xf32> to vector<2x32xf32>
    %198 = arith.negf %197 : vector<2x32xf32>
    %199 = math.exp %198 : vector<2x32xf32>
    %cst_77 = arith.constant 1.000000e+00 : f32
    %200 = vector.broadcast %cst_77 : f32 to vector<2x32xf32>
    %201 = arith.addf %200, %199 : vector<2x32xf32>
    %202 = arith.divf %200, %201 : vector<2x32xf32>
    %203 = vector.extract_strided_slice %196 {offsets = [0, 32], sizes = [2, 32], strides = [1, 1]} : vector<2x128xf32> to vector<2x32xf32>
    %204 = arith.negf %203 : vector<2x32xf32>
    %205 = math.exp %204 : vector<2x32xf32>
    %cst_78 = arith.constant 1.000000e+00 : f32
    %206 = vector.broadcast %cst_78 : f32 to vector<2x32xf32>
    %207 = arith.addf %206, %205 : vector<2x32xf32>
    %208 = arith.divf %206, %207 : vector<2x32xf32>
    %209 = vector.extract_strided_slice %196 {offsets = [0, 64], sizes = [2, 32], strides = [1, 1]} : vector<2x128xf32> to vector<2x32xf32>
    %210 = math.tanh %209 : vector<2x32xf32>
    %211 = vector.extract_strided_slice %196 {offsets = [0, 96], sizes = [2, 32], strides = [1, 1]} : vector<2x128xf32> to vector<2x32xf32>
    %212 = arith.negf %211 : vector<2x32xf32>
    %213 = math.exp %212 : vector<2x32xf32>
    %cst_79 = arith.constant 1.000000e+00 : f32
    %214 = vector.broadcast %cst_79 : f32 to vector<2x32xf32>
    %215 = arith.addf %214, %213 : vector<2x32xf32>
    %216 = arith.divf %214, %215 : vector<2x32xf32>
    %217 = arith.mulf %208, %182 : vector<2x32xf32>
    %218 = arith.mulf %202, %210 : vector<2x32xf32>
    %219 = arith.addf %217, %218 : vector<2x32xf32>
    %220 = math.tanh %219 : vector<2x32xf32>
    %221 = arith.mulf %216, %220 : vector<2x32xf32>
    %222 = vector.extract_strided_slice %221 {offsets = [0, 0], sizes = [2, 16], strides = [1, 1]} : vector<2x32xf32> to vector<2x16xf32>
    %c0_80 = arith.constant 0 : index
    %c1 = arith.constant 1 : index
    %c0_81 = arith.constant 0 : index
    %223 = vector.load %arg39[%c0_80, %c1, %c0_81] : memref<2x8x32xf32, #tpu.memory_space<vmem>>, vector<2x1x16xf32>
    %224 = vector.shape_cast %223 : vector<2x1x16xf32> to vector<2x16xf32>
    %225 = vector.shape_cast %222 : vector<2x16xf32> to vector<2x1x16xf32>
    tpu.vector_store %arg39[%c0_80, %c1, %c0_81], %225 {strides = array<i32>} : memref<2x8x32xf32, #tpu.memory_space<vmem>>, vector<2x1x16xf32>,
    %226 = vector.extract_strided_slice %221 {offsets = [0, 16], sizes = [2, 16], strides = [1, 1]} : vector<2x32xf32> to vector<2x16xf32>
    %c0_82 = arith.constant 0 : index
    %c6 = arith.constant 6 : index
    %c16_83 = arith.constant 16 : index
    %227 = vector.load %arg39[%c0_82, %c6, %c16_83] : memref<2x8x32xf32, #tpu.memory_space<vmem>>, vector<2x1x16xf32>
    %228 = vector.shape_cast %227 : vector<2x1x16xf32> to vector<2x16xf32>
    %229 = vector.shape_cast %226 : vector<2x16xf32> to vector<2x1x16xf32>
    tpu.vector_store %arg39[%c0_82, %c6, %c16_83], %229 {strides = array<i32>} : memref<2x8x32xf32, #tpu.memory_space<vmem>>, vector<2x1x16xf32>,
    %230 = vector.extract_strided_slice %151 {offsets = [4, 0], sizes = [2, 128], strides = [1, 1]} : vector<16x128xf32> to vector<2x128xf32>
    %231 = arith.truncf %221 : vector<2x32xf32> to vector<2x32xbf16>
    %cst_84 = arith.constant dense<0.000000e+00> : vector<2x128xf32>
    %232 = tpu.matmul %231, %153, %cst_84 {dimension_numbers = #tpu.dot_dimension_numbers<[1], [0], [0], [1], [0, 0, 1, 1], [], []>} : vector<2x32xbf16>, vector<32x128xbf16>, vector<2x128xf32> -> vector<2x128xf32>
    %233 = arith.addf %230, %232 : vector<2x128xf32>
    %234 = vector.extract_strided_slice %233 {offsets = [0, 0], sizes = [2, 32], strides = [1, 1]} : vector<2x128xf32> to vector<2x32xf32>
    %235 = arith.negf %234 : vector<2x32xf32>
    %236 = math.exp %235 : vector<2x32xf32>
    %cst_85 = arith.constant 1.000000e+00 : f32
    %237 = vector.broadcast %cst_85 : f32 to vector<2x32xf32>
    %238 = arith.addf %237, %236 : vector<2x32xf32>
    %239 = arith.divf %237, %238 : vector<2x32xf32>
    %240 = vector.extract_strided_slice %233 {offsets = [0, 32], sizes = [2, 32], strides = [1, 1]} : vector<2x128xf32> to vector<2x32xf32>
    %241 = arith.negf %240 : vector<2x32xf32>
    %242 = math.exp %241 : vector<2x32xf32>
    %cst_86 = arith.constant 1.000000e+00 : f32
    %243 = vector.broadcast %cst_86 : f32 to vector<2x32xf32>
    %244 = arith.addf %243, %242 : vector<2x32xf32>
    %245 = arith.divf %243, %244 : vector<2x32xf32>
    %246 = vector.extract_strided_slice %233 {offsets = [0, 64], sizes = [2, 32], strides = [1, 1]} : vector<2x128xf32> to vector<2x32xf32>
    %247 = math.tanh %246 : vector<2x32xf32>
    %248 = vector.extract_strided_slice %233 {offsets = [0, 96], sizes = [2, 32], strides = [1, 1]} : vector<2x128xf32> to vector<2x32xf32>
    %249 = arith.negf %248 : vector<2x32xf32>
    %250 = math.exp %249 : vector<2x32xf32>
    %cst_87 = arith.constant 1.000000e+00 : f32
    %251 = vector.broadcast %cst_87 : f32 to vector<2x32xf32>
    %252 = arith.addf %251, %250 : vector<2x32xf32>
    %253 = arith.divf %251, %252 : vector<2x32xf32>
    %254 = arith.mulf %245, %219 : vector<2x32xf32>
    %255 = arith.mulf %239, %247 : vector<2x32xf32>
    %256 = arith.addf %254, %255 : vector<2x32xf32>
    %257 = math.tanh %256 : vector<2x32xf32>
    %258 = arith.mulf %253, %257 : vector<2x32xf32>
    %259 = vector.extract_strided_slice %258 {offsets = [0, 0], sizes = [2, 16], strides = [1, 1]} : vector<2x32xf32> to vector<2x16xf32>
    %c0_88 = arith.constant 0 : index
    %c2 = arith.constant 2 : index
    %c0_89 = arith.constant 0 : index
    %260 = vector.load %arg39[%c0_88, %c2, %c0_89] : memref<2x8x32xf32, #tpu.memory_space<vmem>>, vector<2x1x16xf32>
    %261 = vector.shape_cast %260 : vector<2x1x16xf32> to vector<2x16xf32>
    %262 = vector.shape_cast %259 : vector<2x16xf32> to vector<2x1x16xf32>
    tpu.vector_store %arg39[%c0_88, %c2, %c0_89], %262 {strides = array<i32>} : memref<2x8x32xf32, #tpu.memory_space<vmem>>, vector<2x1x16xf32>,
    %263 = vector.extract_strided_slice %258 {offsets = [0, 16], sizes = [2, 16], strides = [1, 1]} : vector<2x32xf32> to vector<2x16xf32>
    %c0_90 = arith.constant 0 : index
    %c5 = arith.constant 5 : index
    %c16_91 = arith.constant 16 : index
    %264 = vector.load %arg39[%c0_90, %c5, %c16_91] : memref<2x8x32xf32, #tpu.memory_space<vmem>>, vector<2x1x16xf32>
    %265 = vector.shape_cast %264 : vector<2x1x16xf32> to vector<2x16xf32>
    %266 = vector.shape_cast %263 : vector<2x16xf32> to vector<2x1x16xf32>
    tpu.vector_store %arg39[%c0_90, %c5, %c16_91], %266 {strides = array<i32>} : memref<2x8x32xf32, #tpu.memory_space<vmem>>, vector<2x1x16xf32>,
    %267 = vector.extract_strided_slice %151 {offsets = [6, 0], sizes = [2, 128], strides = [1, 1]} : vector<16x128xf32> to vector<2x128xf32>
    %268 = arith.truncf %258 : vector<2x32xf32> to vector<2x32xbf16>
    %cst_92 = arith.constant dense<0.000000e+00> : vector<2x128xf32>
    %269 = tpu.matmul %268, %153, %cst_92 {dimension_numbers = #tpu.dot_dimension_numbers<[1], [0], [0], [1], [0, 0, 1, 1], [], []>} : vector<2x32xbf16>, vector<32x128xbf16>, vector<2x128xf32> -> vector<2x128xf32>
    %270 = arith.addf %267, %269 : vector<2x128xf32>
    %271 = vector.extract_strided_slice %270 {offsets = [0, 0], sizes = [2, 32], strides = [1, 1]} : vector<2x128xf32> to vector<2x32xf32>
    %272 = arith.negf %271 : vector<2x32xf32>
    %273 = math.exp %272 : vector<2x32xf32>
    %cst_93 = arith.constant 1.000000e+00 : f32
    %274 = vector.broadcast %cst_93 : f32 to vector<2x32xf32>
    %275 = arith.addf %274, %273 : vector<2x32xf32>
    %276 = arith.divf %274, %275 : vector<2x32xf32>
    %277 = vector.extract_strided_slice %270 {offsets = [0, 32], sizes = [2, 32], strides = [1, 1]} : vector<2x128xf32> to vector<2x32xf32>
    %278 = arith.negf %277 : vector<2x32xf32>
    %279 = math.exp %278 : vector<2x32xf32>
    %cst_94 = arith.constant 1.000000e+00 : f32
    %280 = vector.broadcast %cst_94 : f32 to vector<2x32xf32>
    %281 = arith.addf %280, %279 : vector<2x32xf32>
    %282 = arith.divf %280, %281 : vector<2x32xf32>
    %283 = vector.extract_strided_slice %270 {offsets = [0, 64], sizes = [2, 32], strides = [1, 1]} : vector<2x128xf32> to vector<2x32xf32>
    %284 = math.tanh %283 : vector<2x32xf32>
    %285 = vector.extract_strided_slice %270 {offsets = [0, 96], sizes = [2, 32], strides = [1, 1]} : vector<2x128xf32> to vector<2x32xf32>
    %286 = arith.negf %285 : vector<2x32xf32>
    %287 = math.exp %286 : vector<2x32xf32>
    %cst_95 = arith.constant 1.000000e+00 : f32
    %288 = vector.broadcast %cst_95 : f32 to vector<2x32xf32>
    %289 = arith.addf %288, %287 : vector<2x32xf32>
    %290 = arith.divf %288, %289 : vector<2x32xf32>
    %291 = arith.mulf %282, %256 : vector<2x32xf32>
    %292 = arith.mulf %276, %284 : vector<2x32xf32>
    %293 = arith.addf %291, %292 : vector<2x32xf32>
    %294 = math.tanh %293 : vector<2x32xf32>
    %295 = arith.mulf %290, %294 : vector<2x32xf32>
    %296 = vector.extract_strided_slice %295 {offsets = [0, 0], sizes = [2, 16], strides = [1, 1]} : vector<2x32xf32> to vector<2x16xf32>
    %c0_96 = arith.constant 0 : index
    %c3 = arith.constant 3 : index
    %c0_97 = arith.constant 0 : index
    %297 = vector.load %arg39[%c0_96, %c3, %c0_97] : memref<2x8x32xf32, #tpu.memory_space<vmem>>, vector<2x1x16xf32>
    %298 = vector.shape_cast %297 : vector<2x1x16xf32> to vector<2x16xf32>
    %299 = vector.shape_cast %296 : vector<2x16xf32> to vector<2x1x16xf32>
    tpu.vector_store %arg39[%c0_96, %c3, %c0_97], %299 {strides = array<i32>} : memref<2x8x32xf32, #tpu.memory_space<vmem>>, vector<2x1x16xf32>,
    %300 = vector.extract_strided_slice %295 {offsets = [0, 16], sizes = [2, 16], strides = [1, 1]} : vector<2x32xf32> to vector<2x16xf32>
    %c0_98 = arith.constant 0 : index
    %c4 = arith.constant 4 : index
    %c16_99 = arith.constant 16 : index
    %301 = vector.load %arg39[%c0_98, %c4, %c16_99] : memref<2x8x32xf32, #tpu.memory_space<vmem>>, vector<2x1x16xf32>
    %302 = vector.shape_cast %301 : vector<2x1x16xf32> to vector<2x16xf32>
    %303 = vector.shape_cast %300 : vector<2x16xf32> to vector<2x1x16xf32>
    tpu.vector_store %arg39[%c0_98, %c4, %c16_99], %303 {strides = array<i32>} : memref<2x8x32xf32, #tpu.memory_space<vmem>>, vector<2x1x16xf32>,
    %304 = vector.extract_strided_slice %151 {offsets = [8, 0], sizes = [2, 128], strides = [1, 1]} : vector<16x128xf32> to vector<2x128xf32>
    %305 = arith.truncf %295 : vector<2x32xf32> to vector<2x32xbf16>
    %cst_100 = arith.constant dense<0.000000e+00> : vector<2x128xf32>
    %306 = tpu.matmul %305, %153, %cst_100 {dimension_numbers = #tpu.dot_dimension_numbers<[1], [0], [0], [1], [0, 0, 1, 1], [], []>} : vector<2x32xbf16>, vector<32x128xbf16>, vector<2x128xf32> -> vector<2x128xf32>
    %307 = arith.addf %304, %306 : vector<2x128xf32>
    %308 = vector.extract_strided_slice %307 {offsets = [0, 0], sizes = [2, 32], strides = [1, 1]} : vector<2x128xf32> to vector<2x32xf32>
    %309 = arith.negf %308 : vector<2x32xf32>
    %310 = math.exp %309 : vector<2x32xf32>
    %cst_101 = arith.constant 1.000000e+00 : f32
    %311 = vector.broadcast %cst_101 : f32 to vector<2x32xf32>
    %312 = arith.addf %311, %310 : vector<2x32xf32>
    %313 = arith.divf %311, %312 : vector<2x32xf32>
    %314 = vector.extract_strided_slice %307 {offsets = [0, 32], sizes = [2, 32], strides = [1, 1]} : vector<2x128xf32> to vector<2x32xf32>
    %315 = arith.negf %314 : vector<2x32xf32>
    %316 = math.exp %315 : vector<2x32xf32>
    %cst_102 = arith.constant 1.000000e+00 : f32
    %317 = vector.broadcast %cst_102 : f32 to vector<2x32xf32>
    %318 = arith.addf %317, %316 : vector<2x32xf32>
    %319 = arith.divf %317, %318 : vector<2x32xf32>
    %320 = vector.extract_strided_slice %307 {offsets = [0, 64], sizes = [2, 32], strides = [1, 1]} : vector<2x128xf32> to vector<2x32xf32>
    %321 = math.tanh %320 : vector<2x32xf32>
    %322 = vector.extract_strided_slice %307 {offsets = [0, 96], sizes = [2, 32], strides = [1, 1]} : vector<2x128xf32> to vector<2x32xf32>
    %323 = arith.negf %322 : vector<2x32xf32>
    %324 = math.exp %323 : vector<2x32xf32>
    %cst_103 = arith.constant 1.000000e+00 : f32
    %325 = vector.broadcast %cst_103 : f32 to vector<2x32xf32>
    %326 = arith.addf %325, %324 : vector<2x32xf32>
    %327 = arith.divf %325, %326 : vector<2x32xf32>
    %328 = arith.mulf %319, %293 : vector<2x32xf32>
    %329 = arith.mulf %313, %321 : vector<2x32xf32>
    %330 = arith.addf %328, %329 : vector<2x32xf32>
    %331 = math.tanh %330 : vector<2x32xf32>
    %332 = arith.mulf %327, %331 : vector<2x32xf32>
    %333 = vector.extract_strided_slice %332 {offsets = [0, 0], sizes = [2, 16], strides = [1, 1]} : vector<2x32xf32> to vector<2x16xf32>
    %c0_104 = arith.constant 0 : index
    %c4_105 = arith.constant 4 : index
    %c0_106 = arith.constant 0 : index
    %334 = vector.load %arg39[%c0_104, %c4_105, %c0_106] : memref<2x8x32xf32, #tpu.memory_space<vmem>>, vector<2x1x16xf32>
    %335 = vector.shape_cast %334 : vector<2x1x16xf32> to vector<2x16xf32>
    %336 = vector.shape_cast %333 : vector<2x16xf32> to vector<2x1x16xf32>
    tpu.vector_store %arg39[%c0_104, %c4_105, %c0_106], %336 {strides = array<i32>} : memref<2x8x32xf32, #tpu.memory_space<vmem>>, vector<2x1x16xf32>,
    %337 = vector.extract_strided_slice %332 {offsets = [0, 16], sizes = [2, 16], strides = [1, 1]} : vector<2x32xf32> to vector<2x16xf32>
    %c0_107 = arith.constant 0 : index
    %c3_108 = arith.constant 3 : index
    %c16_109 = arith.constant 16 : index
    %338 = vector.load %arg39[%c0_107, %c3_108, %c16_109] : memref<2x8x32xf32, #tpu.memory_space<vmem>>, vector<2x1x16xf32>
    %339 = vector.shape_cast %338 : vector<2x1x16xf32> to vector<2x16xf32>
    %340 = vector.shape_cast %337 : vector<2x16xf32> to vector<2x1x16xf32>
    tpu.vector_store %arg39[%c0_107, %c3_108, %c16_109], %340 {strides = array<i32>} : memref<2x8x32xf32, #tpu.memory_space<vmem>>, vector<2x1x16xf32>,
    %341 = vector.extract_strided_slice %151 {offsets = [10, 0], sizes = [2, 128], strides = [1, 1]} : vector<16x128xf32> to vector<2x128xf32>
    %342 = arith.truncf %332 : vector<2x32xf32> to vector<2x32xbf16>
    %cst_110 = arith.constant dense<0.000000e+00> : vector<2x128xf32>
    %343 = tpu.matmul %342, %153, %cst_110 {dimension_numbers = #tpu.dot_dimension_numbers<[1], [0], [0], [1], [0, 0, 1, 1], [], []>} : vector<2x32xbf16>, vector<32x128xbf16>, vector<2x128xf32> -> vector<2x128xf32>
    %344 = arith.addf %341, %343 : vector<2x128xf32>
    %345 = vector.extract_strided_slice %344 {offsets = [0, 0], sizes = [2, 32], strides = [1, 1]} : vector<2x128xf32> to vector<2x32xf32>
    %346 = arith.negf %345 : vector<2x32xf32>
    %347 = math.exp %346 : vector<2x32xf32>
    %cst_111 = arith.constant 1.000000e+00 : f32
    %348 = vector.broadcast %cst_111 : f32 to vector<2x32xf32>
    %349 = arith.addf %348, %347 : vector<2x32xf32>
    %350 = arith.divf %348, %349 : vector<2x32xf32>
    %351 = vector.extract_strided_slice %344 {offsets = [0, 32], sizes = [2, 32], strides = [1, 1]} : vector<2x128xf32> to vector<2x32xf32>
    %352 = arith.negf %351 : vector<2x32xf32>
    %353 = math.exp %352 : vector<2x32xf32>
    %cst_112 = arith.constant 1.000000e+00 : f32
    %354 = vector.broadcast %cst_112 : f32 to vector<2x32xf32>
    %355 = arith.addf %354, %353 : vector<2x32xf32>
    %356 = arith.divf %354, %355 : vector<2x32xf32>
    %357 = vector.extract_strided_slice %344 {offsets = [0, 64], sizes = [2, 32], strides = [1, 1]} : vector<2x128xf32> to vector<2x32xf32>
    %358 = math.tanh %357 : vector<2x32xf32>
    %359 = vector.extract_strided_slice %344 {offsets = [0, 96], sizes = [2, 32], strides = [1, 1]} : vector<2x128xf32> to vector<2x32xf32>
    %360 = arith.negf %359 : vector<2x32xf32>
    %361 = math.exp %360 : vector<2x32xf32>
    %cst_113 = arith.constant 1.000000e+00 : f32
    %362 = vector.broadcast %cst_113 : f32 to vector<2x32xf32>
    %363 = arith.addf %362, %361 : vector<2x32xf32>
    %364 = arith.divf %362, %363 : vector<2x32xf32>
    %365 = arith.mulf %356, %330 : vector<2x32xf32>
    %366 = arith.mulf %350, %358 : vector<2x32xf32>
    %367 = arith.addf %365, %366 : vector<2x32xf32>
    %368 = math.tanh %367 : vector<2x32xf32>
    %369 = arith.mulf %364, %368 : vector<2x32xf32>
    %370 = vector.extract_strided_slice %369 {offsets = [0, 0], sizes = [2, 16], strides = [1, 1]} : vector<2x32xf32> to vector<2x16xf32>
    %c0_114 = arith.constant 0 : index
    %c5_115 = arith.constant 5 : index
    %c0_116 = arith.constant 0 : index
    %371 = vector.load %arg39[%c0_114, %c5_115, %c0_116] : memref<2x8x32xf32, #tpu.memory_space<vmem>>, vector<2x1x16xf32>
    %372 = vector.shape_cast %371 : vector<2x1x16xf32> to vector<2x16xf32>
    %373 = vector.shape_cast %370 : vector<2x16xf32> to vector<2x1x16xf32>
    tpu.vector_store %arg39[%c0_114, %c5_115, %c0_116], %373 {strides = array<i32>} : memref<2x8x32xf32, #tpu.memory_space<vmem>>, vector<2x1x16xf32>,
    %374 = vector.extract_strided_slice %369 {offsets = [0, 16], sizes = [2, 16], strides = [1, 1]} : vector<2x32xf32> to vector<2x16xf32>
    %c0_117 = arith.constant 0 : index
    %c2_118 = arith.constant 2 : index
    %c16_119 = arith.constant 16 : index
    %375 = vector.load %arg39[%c0_117, %c2_118, %c16_119] : memref<2x8x32xf32, #tpu.memory_space<vmem>>, vector<2x1x16xf32>
    %376 = vector.shape_cast %375 : vector<2x1x16xf32> to vector<2x16xf32>
    %377 = vector.shape_cast %374 : vector<2x16xf32> to vector<2x1x16xf32>
    tpu.vector_store %arg39[%c0_117, %c2_118, %c16_119], %377 {strides = array<i32>} : memref<2x8x32xf32, #tpu.memory_space<vmem>>, vector<2x1x16xf32>,
    %378 = vector.extract_strided_slice %151 {offsets = [12, 0], sizes = [2, 128], strides = [1, 1]} : vector<16x128xf32> to vector<2x128xf32>
    %379 = arith.truncf %369 : vector<2x32xf32> to vector<2x32xbf16>
    %cst_120 = arith.constant dense<0.000000e+00> : vector<2x128xf32>
    %380 = tpu.matmul %379, %153, %cst_120 {dimension_numbers = #tpu.dot_dimension_numbers<[1], [0], [0], [1], [0, 0, 1, 1], [], []>} : vector<2x32xbf16>, vector<32x128xbf16>, vector<2x128xf32> -> vector<2x128xf32>
    %381 = arith.addf %378, %380 : vector<2x128xf32>
    %382 = vector.extract_strided_slice %381 {offsets = [0, 0], sizes = [2, 32], strides = [1, 1]} : vector<2x128xf32> to vector<2x32xf32>
    %383 = arith.negf %382 : vector<2x32xf32>
    %384 = math.exp %383 : vector<2x32xf32>
    %cst_121 = arith.constant 1.000000e+00 : f32
    %385 = vector.broadcast %cst_121 : f32 to vector<2x32xf32>
    %386 = arith.addf %385, %384 : vector<2x32xf32>
    %387 = arith.divf %385, %386 : vector<2x32xf32>
    %388 = vector.extract_strided_slice %381 {offsets = [0, 32], sizes = [2, 32], strides = [1, 1]} : vector<2x128xf32> to vector<2x32xf32>
    %389 = arith.negf %388 : vector<2x32xf32>
    %390 = math.exp %389 : vector<2x32xf32>
    %cst_122 = arith.constant 1.000000e+00 : f32
    %391 = vector.broadcast %cst_122 : f32 to vector<2x32xf32>
    %392 = arith.addf %391, %390 : vector<2x32xf32>
    %393 = arith.divf %391, %392 : vector<2x32xf32>
    %394 = vector.extract_strided_slice %381 {offsets = [0, 64], sizes = [2, 32], strides = [1, 1]} : vector<2x128xf32> to vector<2x32xf32>
    %395 = math.tanh %394 : vector<2x32xf32>
    %396 = vector.extract_strided_slice %381 {offsets = [0, 96], sizes = [2, 32], strides = [1, 1]} : vector<2x128xf32> to vector<2x32xf32>
    %397 = arith.negf %396 : vector<2x32xf32>
    %398 = math.exp %397 : vector<2x32xf32>
    %cst_123 = arith.constant 1.000000e+00 : f32
    %399 = vector.broadcast %cst_123 : f32 to vector<2x32xf32>
    %400 = arith.addf %399, %398 : vector<2x32xf32>
    %401 = arith.divf %399, %400 : vector<2x32xf32>
    %402 = arith.mulf %393, %367 : vector<2x32xf32>
    %403 = arith.mulf %387, %395 : vector<2x32xf32>
    %404 = arith.addf %402, %403 : vector<2x32xf32>
    %405 = math.tanh %404 : vector<2x32xf32>
    %406 = arith.mulf %401, %405 : vector<2x32xf32>
    %407 = vector.extract_strided_slice %406 {offsets = [0, 0], sizes = [2, 16], strides = [1, 1]} : vector<2x32xf32> to vector<2x16xf32>
    %c0_124 = arith.constant 0 : index
    %c6_125 = arith.constant 6 : index
    %c0_126 = arith.constant 0 : index
    %408 = vector.load %arg39[%c0_124, %c6_125, %c0_126] : memref<2x8x32xf32, #tpu.memory_space<vmem>>, vector<2x1x16xf32>
    %409 = vector.shape_cast %408 : vector<2x1x16xf32> to vector<2x16xf32>
    %410 = vector.shape_cast %407 : vector<2x16xf32> to vector<2x1x16xf32>
    tpu.vector_store %arg39[%c0_124, %c6_125, %c0_126], %410 {strides = array<i32>} : memref<2x8x32xf32, #tpu.memory_space<vmem>>, vector<2x1x16xf32>,
    %411 = vector.extract_strided_slice %406 {offsets = [0, 16], sizes = [2, 16], strides = [1, 1]} : vector<2x32xf32> to vector<2x16xf32>
    %c0_127 = arith.constant 0 : index
    %c1_128 = arith.constant 1 : index
    %c16_129 = arith.constant 16 : index
    %412 = vector.load %arg39[%c0_127, %c1_128, %c16_129] : memref<2x8x32xf32, #tpu.memory_space<vmem>>, vector<2x1x16xf32>
    %413 = vector.shape_cast %412 : vector<2x1x16xf32> to vector<2x16xf32>
    %414 = vector.shape_cast %411 : vector<2x16xf32> to vector<2x1x16xf32>
    tpu.vector_store %arg39[%c0_127, %c1_128, %c16_129], %414 {strides = array<i32>} : memref<2x8x32xf32, #tpu.memory_space<vmem>>, vector<2x1x16xf32>,
    %415 = vector.extract_strided_slice %151 {offsets = [14, 0], sizes = [2, 128], strides = [1, 1]} : vector<16x128xf32> to vector<2x128xf32>
    %416 = arith.truncf %406 : vector<2x32xf32> to vector<2x32xbf16>
    %cst_130 = arith.constant dense<0.000000e+00> : vector<2x128xf32>
    %417 = tpu.matmul %416, %153, %cst_130 {dimension_numbers = #tpu.dot_dimension_numbers<[1], [0], [0], [1], [0, 0, 1, 1], [], []>} : vector<2x32xbf16>, vector<32x128xbf16>, vector<2x128xf32> -> vector<2x128xf32>
    %418 = arith.addf %415, %417 : vector<2x128xf32>
    %419 = vector.extract_strided_slice %418 {offsets = [0, 0], sizes = [2, 32], strides = [1, 1]} : vector<2x128xf32> to vector<2x32xf32>
    %420 = arith.negf %419 : vector<2x32xf32>
    %421 = math.exp %420 : vector<2x32xf32>
    %cst_131 = arith.constant 1.000000e+00 : f32
    %422 = vector.broadcast %cst_131 : f32 to vector<2x32xf32>
    %423 = arith.addf %422, %421 : vector<2x32xf32>
    %424 = arith.divf %422, %423 : vector<2x32xf32>
    %425 = vector.extract_strided_slice %418 {offsets = [0, 32], sizes = [2, 32], strides = [1, 1]} : vector<2x128xf32> to vector<2x32xf32>
    %426 = arith.negf %425 : vector<2x32xf32>
    %427 = math.exp %426 : vector<2x32xf32>
    %cst_132 = arith.constant 1.000000e+00 : f32
    %428 = vector.broadcast %cst_132 : f32 to vector<2x32xf32>
    %429 = arith.addf %428, %427 : vector<2x32xf32>
    %430 = arith.divf %428, %429 : vector<2x32xf32>
    %431 = vector.extract_strided_slice %418 {offsets = [0, 64], sizes = [2, 32], strides = [1, 1]} : vector<2x128xf32> to vector<2x32xf32>
    %432 = math.tanh %431 : vector<2x32xf32>
    %433 = vector.extract_strided_slice %418 {offsets = [0, 96], sizes = [2, 32], strides = [1, 1]} : vector<2x128xf32> to vector<2x32xf32>
    %434 = arith.negf %433 : vector<2x32xf32>
    %435 = math.exp %434 : vector<2x32xf32>
    %cst_133 = arith.constant 1.000000e+00 : f32
    %436 = vector.broadcast %cst_133 : f32 to vector<2x32xf32>
    %437 = arith.addf %436, %435 : vector<2x32xf32>
    %438 = arith.divf %436, %437 : vector<2x32xf32>
    %439 = arith.mulf %430, %404 : vector<2x32xf32>
    %440 = arith.mulf %424, %432 : vector<2x32xf32>
    %441 = arith.addf %439, %440 : vector<2x32xf32>
    %442 = math.tanh %441 : vector<2x32xf32>
    %443 = arith.mulf %438, %442 : vector<2x32xf32>
    %444 = vector.extract_strided_slice %443 {offsets = [0, 0], sizes = [2, 16], strides = [1, 1]} : vector<2x32xf32> to vector<2x16xf32>
    %c0_134 = arith.constant 0 : index
    %c7_135 = arith.constant 7 : index
    %c0_136 = arith.constant 0 : index
    %445 = vector.load %arg39[%c0_134, %c7_135, %c0_136] : memref<2x8x32xf32, #tpu.memory_space<vmem>>, vector<2x1x16xf32>
    %446 = vector.shape_cast %445 : vector<2x1x16xf32> to vector<2x16xf32>
    %447 = vector.shape_cast %444 : vector<2x16xf32> to vector<2x1x16xf32>
    tpu.vector_store %arg39[%c0_134, %c7_135, %c0_136], %447 {strides = array<i32>} : memref<2x8x32xf32, #tpu.memory_space<vmem>>, vector<2x1x16xf32>,
    %448 = vector.extract_strided_slice %443 {offsets = [0, 16], sizes = [2, 16], strides = [1, 1]} : vector<2x32xf32> to vector<2x16xf32>
    %c0_137 = arith.constant 0 : index
    %c0_138 = arith.constant 0 : index
    %c16_139 = arith.constant 16 : index
    %449 = vector.load %arg39[%c0_137, %c0_138, %c16_139] : memref<2x8x32xf32, #tpu.memory_space<vmem>>, vector<2x1x16xf32>
    %450 = vector.shape_cast %449 : vector<2x1x16xf32> to vector<2x16xf32>
    %451 = vector.shape_cast %448 : vector<2x16xf32> to vector<2x1x16xf32>
    tpu.vector_store %arg39[%c0_137, %c0_138, %c16_139], %451 {strides = array<i32>} : memref<2x8x32xf32, #tpu.memory_space<vmem>>, vector<2x1x16xf32>,
    %c0_140 = arith.constant 0 : index
    %c0_141 = arith.constant 0 : index
    %c0_142 = arith.constant 0 : index
    %452 = vector.load %arg39[%c0_140, %c0_141, %c0_142] : memref<2x8x32xf32, #tpu.memory_space<vmem>>, vector<2x8x32xf32>
    %453 = vector.shape_cast %452 : vector<2x8x32xf32> to vector<16x32xf32>
    %c0_143 = arith.constant 0 : index
    %c0_144 = arith.constant 0 : index
    %454 = vector.load %arg21[%c0_143, %c0_144] : memref<16x16xf32, #tpu.memory_space<vmem>>, vector<16x16xf32>
    %c0_145 = arith.constant 0 : index
    %c0_146 = arith.constant 0 : index
    %455 = vector.load %arg25[%c0_145, %c0_146] : memref<32x32xf32, #tpu.memory_space<vmem>>, vector<32x32xf32>
    %456 = arith.truncf %453 : vector<16x32xf32> to vector<16x32xbf16>
    %457 = arith.truncf %455 : vector<32x32xf32> to vector<32x32xbf16>
    %cst_147 = arith.constant dense<0.000000e+00> : vector<16x32xf32>
    %458 = tpu.matmul %456, %457, %cst_147 {dimension_numbers = #tpu.dot_dimension_numbers<[1], [0], [0], [1], [0, 0, 1, 1], [], []>} : vector<16x32xbf16>, vector<32x32xbf16>, vector<16x32xf32> -> vector<16x32xf32>
    %459 = arith.truncf %454 : vector<16x16xf32> to vector<16x16xbf16>
    %460 = arith.truncf %458 : vector<16x32xf32> to vector<16x32xbf16>
    %cst_148 = arith.constant dense<0.000000e+00> : vector<16x32xf32>
    %461 = tpu.matmul %459, %460, %cst_148 {dimension_numbers = #tpu.dot_dimension_numbers<[1], [0], [0], [1], [0, 0, 1, 1], [], []>} : vector<16x16xbf16>, vector<16x32xbf16>, vector<16x32xf32> -> vector<16x32xf32>
    %c0_149 = arith.constant 0 : index
    %c0_150 = arith.constant 0 : index
    %462 = vector.load %arg26[%c0_149, %c0_150] : memref<1x32xf32, #tpu.memory_space<vmem>>, vector<1x32xf32>
    %463 = vector.broadcast %462 : vector<1x32xf32> to vector<16x32xf32>
    %464 = arith.addf %461, %463 : vector<16x32xf32>
    %cst_151 = arith.constant 0.000000e+00 : f32
    %465 = vector.broadcast %cst_151 : f32 to vector<16x32xf32>
    %466 = arith.maximumf %464, %465 : vector<16x32xf32>
    %c0_152 = arith.constant 0 : index
    %c0_153 = arith.constant 0 : index
    %467 = vector.load %arg22[%c0_152, %c0_153] : memref<16x16xf32, #tpu.memory_space<vmem>>, vector<16x16xf32>
    %c0_154 = arith.constant 0 : index
    %c0_155 = arith.constant 0 : index
    %468 = vector.load %arg27[%c0_154, %c0_155] : memref<32x32xf32, #tpu.memory_space<vmem>>, vector<32x32xf32>
    %469 = arith.truncf %466 : vector<16x32xf32> to vector<16x32xbf16>
    %470 = arith.truncf %468 : vector<32x32xf32> to vector<32x32xbf16>
    %cst_156 = arith.constant dense<0.000000e+00> : vector<16x32xf32>
    %471 = tpu.matmul %469, %470, %cst_156 {dimension_numbers = #tpu.dot_dimension_numbers<[1], [0], [0], [1], [0, 0, 1, 1], [], []>} : vector<16x32xbf16>, vector<32x32xbf16>, vector<16x32xf32> -> vector<16x32xf32>
    %472 = arith.truncf %467 : vector<16x16xf32> to vector<16x16xbf16>
    %473 = arith.truncf %471 : vector<16x32xf32> to vector<16x32xbf16>
    %cst_157 = arith.constant dense<0.000000e+00> : vector<16x32xf32>
    %474 = tpu.matmul %472, %473, %cst_157 {dimension_numbers = #tpu.dot_dimension_numbers<[1], [0], [0], [1], [0, 0, 1, 1], [], []>} : vector<16x16xbf16>, vector<16x32xbf16>, vector<16x32xf32> -> vector<16x32xf32>
    %c0_158 = arith.constant 0 : index
    %c0_159 = arith.constant 0 : index
    %475 = vector.load %arg28[%c0_158, %c0_159] : memref<1x32xf32, #tpu.memory_space<vmem>>, vector<1x32xf32>
    %476 = vector.broadcast %475 : vector<1x32xf32> to vector<16x32xf32>
    %477 = arith.addf %474, %476 : vector<16x32xf32>
    %cst_160 = arith.constant 0.000000e+00 : f32
    %478 = vector.broadcast %cst_160 : f32 to vector<16x32xf32>
    %479 = arith.maximumf %477, %478 : vector<16x32xf32>
    %c0_161 = arith.constant 0 : index
    %c0_162 = arith.constant 0 : index
    %480 = vector.load %arg23[%c0_161, %c0_162] : memref<16x16xf32, #tpu.memory_space<vmem>>, vector<16x16xf32>
    %c0_163 = arith.constant 0 : index
    %c0_164 = arith.constant 0 : index
    %481 = vector.load %arg29[%c0_163, %c0_164] : memref<32x32xf32, #tpu.memory_space<vmem>>, vector<32x32xf32>
    %482 = arith.truncf %453 : vector<16x32xf32> to vector<16x32xbf16>
    %483 = arith.truncf %481 : vector<32x32xf32> to vector<32x32xbf16>
    %cst_165 = arith.constant dense<0.000000e+00> : vector<16x32xf32>
    %484 = tpu.matmul %482, %483, %cst_165 {dimension_numbers = #tpu.dot_dimension_numbers<[1], [0], [0], [1], [0, 0, 1, 1], [], []>} : vector<16x32xbf16>, vector<32x32xbf16>, vector<16x32xf32> -> vector<16x32xf32>
    %485 = arith.truncf %480 : vector<16x16xf32> to vector<16x16xbf16>
    %486 = arith.truncf %484 : vector<16x32xf32> to vector<16x32xbf16>
    %cst_166 = arith.constant dense<0.000000e+00> : vector<16x32xf32>
    %487 = tpu.matmul %485, %486, %cst_166 {dimension_numbers = #tpu.dot_dimension_numbers<[1], [0], [0], [1], [0, 0, 1, 1], [], []>} : vector<16x16xbf16>, vector<16x32xbf16>, vector<16x32xf32> -> vector<16x32xf32>
    %c0_167 = arith.constant 0 : index
    %c0_168 = arith.constant 0 : index
    %488 = vector.load %arg30[%c0_167, %c0_168] : memref<1x32xf32, #tpu.memory_space<vmem>>, vector<1x32xf32>
    %489 = vector.broadcast %488 : vector<1x32xf32> to vector<16x32xf32>
    %490 = arith.addf %487, %489 : vector<16x32xf32>
    %cst_169 = arith.constant 0.000000e+00 : f32
    %491 = vector.broadcast %cst_169 : f32 to vector<16x32xf32>
    %492 = arith.maximumf %490, %491 : vector<16x32xf32>
    %c0_170 = arith.constant 0 : index
    %c0_171 = arith.constant 0 : index
    %493 = vector.load %arg24[%c0_170, %c0_171] : memref<16x16xf32, #tpu.memory_space<vmem>>, vector<16x16xf32>
    %c0_172 = arith.constant 0 : index
    %c0_173 = arith.constant 0 : index
    %494 = vector.load %arg31[%c0_172, %c0_173] : memref<32x32xf32, #tpu.memory_space<vmem>>, vector<32x32xf32>
    %495 = arith.truncf %492 : vector<16x32xf32> to vector<16x32xbf16>
    %496 = arith.truncf %494 : vector<32x32xf32> to vector<32x32xbf16>
    %cst_174 = arith.constant dense<0.000000e+00> : vector<16x32xf32>
    %497 = tpu.matmul %495, %496, %cst_174 {dimension_numbers = #tpu.dot_dimension_numbers<[1], [0], [0], [1], [0, 0, 1, 1], [], []>} : vector<16x32xbf16>, vector<32x32xbf16>, vector<16x32xf32> -> vector<16x32xf32>
    %498 = arith.truncf %493 : vector<16x16xf32> to vector<16x16xbf16>
    %499 = arith.truncf %497 : vector<16x32xf32> to vector<16x32xbf16>
    %cst_175 = arith.constant dense<0.000000e+00> : vector<16x32xf32>
    %500 = tpu.matmul %498, %499, %cst_175 {dimension_numbers = #tpu.dot_dimension_numbers<[1], [0], [0], [1], [0, 0, 1, 1], [], []>} : vector<16x16xbf16>, vector<16x32xbf16>, vector<16x32xf32> -> vector<16x32xf32>
    %c0_176 = arith.constant 0 : index
    %c0_177 = arith.constant 0 : index
    %501 = vector.load %arg32[%c0_176, %c0_177] : memref<1x32xf32, #tpu.memory_space<vmem>>, vector<1x32xf32>
    %502 = vector.broadcast %501 : vector<1x32xf32> to vector<16x32xf32>
    %503 = arith.addf %500, %502 : vector<16x32xf32>
    %cst_178 = arith.constant 0.000000e+00 : f32
    %504 = vector.broadcast %cst_178 : f32 to vector<16x32xf32>
    %505 = arith.maximumf %503, %504 : vector<16x32xf32>
    %c0_179 = arith.constant 0 : index
    %c0_180 = arith.constant 0 : index
    %c0_181 = arith.constant 0 : index
    %506 = vector.load %arg33[%c0_179, %c0_180, %c0_181] : memref<2x8x1xf32, #tpu.memory_space<vmem>>, vector<2x8x1xf32>
    %c0_182 = arith.constant 0 : index
    %c0_183 = arith.constant 0 : index
    %c0_184 = arith.constant 0 : index
    %507 = vector.load %arg34[%c0_182, %c0_183, %c0_184] : memref<2x8x1xf32, #tpu.memory_space<vmem>>, vector<2x8x1xf32>
    %508 = vector.shape_cast %479 : vector<16x32xf32> to vector<2x8x32xf32>
    %509 = vector.shape_cast %505 : vector<16x32xf32> to vector<2x8x32xf32>
    %510 = vector.broadcast %506 : vector<2x8x1xf32> to vector<2x8x32xf32>
    %511 = arith.mulf %508, %510 : vector<2x8x32xf32>
    %cst_185 = arith.constant 1.000000e+00 : f32
    %512 = vector.broadcast %cst_185 : f32 to vector<2x8x1xf32>
    %513 = arith.subf %512, %506 : vector<2x8x1xf32>
    %cst_186 = arith.constant -1.000000e+03 : f32
    %514 = vector.broadcast %cst_186 : f32 to vector<2x8x1xf32>
    %515 = arith.mulf %513, %514 : vector<2x8x1xf32>
    %516 = vector.broadcast %515 : vector<2x8x1xf32> to vector<2x8x32xf32>
    %517 = arith.addf %511, %516 : vector<2x8x32xf32>
    %cst_187 = arith.constant dense<0xFF800000> : vector<2x32xf32>
    %518 = vector.multi_reduction <maximumf>, %517, %cst_187 [1] : vector<2x8x32xf32> to vector<2x32xf32>
    %c0_188 = arith.constant 0 : index
    %c0_189 = arith.constant 0 : index
    %519 = vector.load %arg40[%c0_188, %c0_189] : memref<2x288xf32, #tpu.memory_space<vmem>>, vector<2x32xf32>
    tpu.vector_store %arg40[%c0_188, %c0_189], %518 {strides = array<i32>} : memref<2x288xf32, #tpu.memory_space<vmem>>, vector<2x32xf32>,
    %520 = vector.broadcast %507 : vector<2x8x1xf32> to vector<2x8x32xf32>
    %521 = arith.mulf %508, %520 : vector<2x8x32xf32>
    %cst_190 = arith.constant 1.000000e+00 : f32
    %522 = vector.broadcast %cst_190 : f32 to vector<2x8x1xf32>
    %523 = arith.subf %522, %507 : vector<2x8x1xf32>
    %cst_191 = arith.constant -1.000000e+03 : f32
    %524 = vector.broadcast %cst_191 : f32 to vector<2x8x1xf32>
    %525 = arith.mulf %523, %524 : vector<2x8x1xf32>
    %526 = vector.broadcast %525 : vector<2x8x1xf32> to vector<2x8x32xf32>
    %527 = arith.addf %521, %526 : vector<2x8x32xf32>
    %cst_192 = arith.constant dense<0xFF800000> : vector<2x32xf32>
    %528 = vector.multi_reduction <maximumf>, %527, %cst_192 [1] : vector<2x8x32xf32> to vector<2x32xf32>
    %c0_193 = arith.constant 0 : index
    %c32 = arith.constant 32 : index
    %529 = vector.load %arg40[%c0_193, %c32] : memref<2x288xf32, #tpu.memory_space<vmem>>, vector<2x32xf32>
    tpu.vector_store %arg40[%c0_193, %c32], %528 {strides = array<i32>} : memref<2x288xf32, #tpu.memory_space<vmem>>, vector<2x32xf32>,
    %530 = vector.broadcast %506 : vector<2x8x1xf32> to vector<2x8x32xf32>
    %531 = arith.mulf %509, %530 : vector<2x8x32xf32>
    %cst_194 = arith.constant 1.000000e+00 : f32
    %532 = vector.broadcast %cst_194 : f32 to vector<2x8x1xf32>
    %533 = arith.subf %532, %506 : vector<2x8x1xf32>
    %cst_195 = arith.constant -1.000000e+03 : f32
    %534 = vector.broadcast %cst_195 : f32 to vector<2x8x1xf32>
    %535 = arith.mulf %533, %534 : vector<2x8x1xf32>
    %536 = vector.broadcast %535 : vector<2x8x1xf32> to vector<2x8x32xf32>
    %537 = arith.addf %531, %536 : vector<2x8x32xf32>
    %cst_196 = arith.constant dense<0xFF800000> : vector<2x32xf32>
    %538 = vector.multi_reduction <maximumf>, %537, %cst_196 [1] : vector<2x8x32xf32> to vector<2x32xf32>
    %c0_197 = arith.constant 0 : index
    %c64 = arith.constant 64 : index
    %539 = vector.load %arg40[%c0_197, %c64] : memref<2x288xf32, #tpu.memory_space<vmem>>, vector<2x32xf32>
    tpu.vector_store %arg40[%c0_197, %c64], %538 {strides = array<i32>} : memref<2x288xf32, #tpu.memory_space<vmem>>, vector<2x32xf32>,
    %540 = vector.broadcast %507 : vector<2x8x1xf32> to vector<2x8x32xf32>
    %541 = arith.mulf %509, %540 : vector<2x8x32xf32>
    %cst_198 = arith.constant 1.000000e+00 : f32
    %542 = vector.broadcast %cst_198 : f32 to vector<2x8x1xf32>
    %543 = arith.subf %542, %507 : vector<2x8x1xf32>
    %cst_199 = arith.constant -1.000000e+03 : f32
    %544 = vector.broadcast %cst_199 : f32 to vector<2x8x1xf32>
    %545 = arith.mulf %543, %544 : vector<2x8x1xf32>
    %546 = vector.broadcast %545 : vector<2x8x1xf32> to vector<2x8x32xf32>
    %547 = arith.addf %541, %546 : vector<2x8x32xf32>
    %cst_200 = arith.constant dense<0xFF800000> : vector<2x32xf32>
    %548 = vector.multi_reduction <maximumf>, %547, %cst_200 [1] : vector<2x8x32xf32> to vector<2x32xf32>
    %c0_201 = arith.constant 0 : index
    %c96 = arith.constant 96 : index
    %549 = vector.load %arg40[%c0_201, %c96] : memref<2x288xf32, #tpu.memory_space<vmem>>, vector<2x32xf32>
    tpu.vector_store %arg40[%c0_201, %c96], %548 {strides = array<i32>} : memref<2x288xf32, #tpu.memory_space<vmem>>, vector<2x32xf32>,
    %c0_202 = arith.constant 0 : index
    %c128 = arith.constant 128 : index
    %550 = vector.load %arg40[%c0_202, %c128] : memref<2x288xf32, #tpu.memory_space<vmem>>, vector<2x32xf32>
    tpu.vector_store %arg40[%c0_202, %c128], %143 {strides = array<i32>} : memref<2x288xf32, #tpu.memory_space<vmem>>, vector<2x32xf32>,
    %c0_203 = arith.constant 0 : index
    %c0_204 = arith.constant 0 : index
    %551 = memref.load %arg0[%c0_203, %c0_204] : memref<2x4xi32, #tpu.memory_space<smem>>
    %c0_i32 = arith.constant 0 : i32
    %552 = arith.addi %c0_i32, %551 : i32
    %553 = arith.index_cast %552 : i32 to index
    %c0_205 = arith.constant 0 : index
    %554 = vector.load %arg38[%553, %c0_205] : memref<16x32xf32, #tpu.memory_space<vmem>>, vector<1x32xf32>
    %c0_206 = arith.constant 0 : index
    %c160 = arith.constant 160 : index
    %555 = vector.load %arg40[%c0_206, %c160] : memref<2x288xf32, #tpu.memory_space<vmem>>, vector<1x32xf32>
    tpu.vector_store %arg40[%c0_206, %c160], %554 {strides = array<i32>} : memref<2x288xf32, #tpu.memory_space<vmem>>, vector<1x32xf32>,
    %c0_207 = arith.constant 0 : index
    %c1_208 = arith.constant 1 : index
    %556 = memref.load %arg0[%c0_207, %c1_208] : memref<2x4xi32, #tpu.memory_space<smem>>
    %c0_i32_209 = arith.constant 0 : i32
    %557 = arith.addi %c0_i32_209, %556 : i32
    %558 = arith.index_cast %557 : i32 to index
    %c0_210 = arith.constant 0 : index
    %559 = vector.load %arg38[%558, %c0_210] : memref<16x32xf32, #tpu.memory_space<vmem>>, vector<1x32xf32>
    %c0_211 = arith.constant 0 : index
    %c192 = arith.constant 192 : index
    %560 = vector.load %arg40[%c0_211, %c192] : memref<2x288xf32, #tpu.memory_space<vmem>>, vector<1x32xf32>
    tpu.vector_store %arg40[%c0_211, %c192], %559 {strides = array<i32>} : memref<2x288xf32, #tpu.memory_space<vmem>>, vector<1x32xf32>,
    %c0_212 = arith.constant 0 : index
    %c2_213 = arith.constant 2 : index
    %561 = memref.load %arg0[%c0_212, %c2_213] : memref<2x4xi32, #tpu.memory_space<smem>>
    %c0_i32_214 = arith.constant 0 : i32
    %562 = arith.addi %c0_i32_214, %561 : i32
    %563 = arith.index_cast %562 : i32 to index
    %c0_215 = arith.constant 0 : index
    %564 = vector.load %arg38[%563, %c0_215] : memref<16x32xf32, #tpu.memory_space<vmem>>, vector<1x32xf32>
    %c0_216 = arith.constant 0 : index
    %c224 = arith.constant 224 : index
    %565 = vector.load %arg40[%c0_216, %c224] : memref<2x288xf32, #tpu.memory_space<vmem>>, vector<1x32xf32>
    tpu.vector_store %arg40[%c0_216, %c224], %564 {strides = array<i32>} : memref<2x288xf32, #tpu.memory_space<vmem>>, vector<1x32xf32>,
    %c0_217 = arith.constant 0 : index
    %c3_218 = arith.constant 3 : index
    %566 = memref.load %arg0[%c0_217, %c3_218] : memref<2x4xi32, #tpu.memory_space<smem>>
    %c0_i32_219 = arith.constant 0 : i32
    %567 = arith.addi %c0_i32_219, %566 : i32
    %568 = arith.index_cast %567 : i32 to index
    %c0_220 = arith.constant 0 : index
    %569 = vector.load %arg38[%568, %c0_220] : memref<16x32xf32, #tpu.memory_space<vmem>>, vector<1x32xf32>
    %c0_221 = arith.constant 0 : index
    %c256 = arith.constant 256 : index
    %570 = vector.load %arg40[%c0_221, %c256] : memref<2x288xf32, #tpu.memory_space<vmem>>, vector<1x32xf32>
    tpu.vector_store %arg40[%c0_221, %c256], %569 {strides = array<i32>} : memref<2x288xf32, #tpu.memory_space<vmem>>, vector<1x32xf32>,
    %c1_222 = arith.constant 1 : index
    %c0_223 = arith.constant 0 : index
    %571 = memref.load %arg0[%c1_222, %c0_223] : memref<2x4xi32, #tpu.memory_space<smem>>
    %c8_i32 = arith.constant 8 : i32
    %572 = arith.addi %c8_i32, %571 : i32
    %573 = arith.index_cast %572 : i32 to index
    %c0_224 = arith.constant 0 : index
    %574 = vector.load %arg38[%573, %c0_224] : memref<16x32xf32, #tpu.memory_space<vmem>>, vector<1x32xf32>
    %c1_225 = arith.constant 1 : index
    %c160_226 = arith.constant 160 : index
    %575 = vector.load %arg40[%c1_225, %c160_226] : memref<2x288xf32, #tpu.memory_space<vmem>>, vector<1x32xf32>
    tpu.vector_store %arg40[%c1_225, %c160_226], %574 {strides = array<i32>} : memref<2x288xf32, #tpu.memory_space<vmem>>, vector<1x32xf32>,
    %c1_227 = arith.constant 1 : index
    %c1_228 = arith.constant 1 : index
    %576 = memref.load %arg0[%c1_227, %c1_228] : memref<2x4xi32, #tpu.memory_space<smem>>
    %c8_i32_229 = arith.constant 8 : i32
    %577 = arith.addi %c8_i32_229, %576 : i32
    %578 = arith.index_cast %577 : i32 to index
    %c0_230 = arith.constant 0 : index
    %579 = vector.load %arg38[%578, %c0_230] : memref<16x32xf32, #tpu.memory_space<vmem>>, vector<1x32xf32>
    %c1_231 = arith.constant 1 : index
    %c192_232 = arith.constant 192 : index
    %580 = vector.load %arg40[%c1_231, %c192_232] : memref<2x288xf32, #tpu.memory_space<vmem>>, vector<1x32xf32>
    tpu.vector_store %arg40[%c1_231, %c192_232], %579 {strides = array<i32>} : memref<2x288xf32, #tpu.memory_space<vmem>>, vector<1x32xf32>,
    %c1_233 = arith.constant 1 : index
    %c2_234 = arith.constant 2 : index
    %581 = memref.load %arg0[%c1_233, %c2_234] : memref<2x4xi32, #tpu.memory_space<smem>>
    %c8_i32_235 = arith.constant 8 : i32
    %582 = arith.addi %c8_i32_235, %581 : i32
    %583 = arith.index_cast %582 : i32 to index
    %c0_236 = arith.constant 0 : index
    %584 = vector.load %arg38[%583, %c0_236] : memref<16x32xf32, #tpu.memory_space<vmem>>, vector<1x32xf32>
    %c1_237 = arith.constant 1 : index
    %c224_238 = arith.constant 224 : index
    %585 = vector.load %arg40[%c1_237, %c224_238] : memref<2x288xf32, #tpu.memory_space<vmem>>, vector<1x32xf32>
    tpu.vector_store %arg40[%c1_237, %c224_238], %584 {strides = array<i32>} : memref<2x288xf32, #tpu.memory_space<vmem>>, vector<1x32xf32>,
    %c1_239 = arith.constant 1 : index
    %c3_240 = arith.constant 3 : index
    %586 = memref.load %arg0[%c1_239, %c3_240] : memref<2x4xi32, #tpu.memory_space<smem>>
    %c8_i32_241 = arith.constant 8 : i32
    %587 = arith.addi %c8_i32_241, %586 : i32
    %588 = arith.index_cast %587 : i32 to index
    %c0_242 = arith.constant 0 : index
    %589 = vector.load %arg38[%588, %c0_242] : memref<16x32xf32, #tpu.memory_space<vmem>>, vector<1x32xf32>
    %c1_243 = arith.constant 1 : index
    %c256_244 = arith.constant 256 : index
    %590 = vector.load %arg40[%c1_243, %c256_244] : memref<2x288xf32, #tpu.memory_space<vmem>>, vector<1x32xf32>
    tpu.vector_store %arg40[%c1_243, %c256_244], %589 {strides = array<i32>} : memref<2x288xf32, #tpu.memory_space<vmem>>, vector<1x32xf32>,
    %c0_245 = arith.constant 0 : index
    %c0_246 = arith.constant 0 : index
    %591 = vector.load %arg40[%c0_245, %c0_246] : memref<2x288xf32, #tpu.memory_space<vmem>>, vector<2x288xf32>
    %c0_247 = arith.constant 0 : index
    %c0_248 = arith.constant 0 : index
    %592 = vector.load %arg35[%c0_247, %c0_248] : memref<288x5xf32, #tpu.memory_space<vmem>>, vector<288x5xf32>
    %593 = arith.truncf %591 : vector<2x288xf32> to vector<2x288xbf16>
    %594 = arith.truncf %592 : vector<288x5xf32> to vector<288x5xbf16>
    %cst_249 = arith.constant dense<0.000000e+00> : vector<2x5xf32>
    %595 = tpu.matmul %593, %594, %cst_249 {dimension_numbers = #tpu.dot_dimension_numbers<[1], [0], [0], [1], [0, 0, 1, 1], [], []>} : vector<2x288xbf16>, vector<288x5xbf16>, vector<2x5xf32> -> vector<2x5xf32>
    %c0_250 = arith.constant 0 : index
    %c0_251 = arith.constant 0 : index
    %596 = vector.load %arg36[%c0_250, %c0_251] : memref<1x5xf32, #tpu.memory_space<vmem>>, vector<1x5xf32>
    %597 = vector.broadcast %596 : vector<1x5xf32> to vector<2x5xf32>
    %598 = arith.addf %595, %597 : vector<2x5xf32>
    %c0_252 = arith.constant 0 : index
    %c0_253 = arith.constant 0 : index
    %599 = vector.load %arg37[%c0_252, %c0_253] : memref<2x5xf32, #tpu.memory_space<vmem>>, vector<2x5xf32>
    tpu.vector_store %arg37[%c0_252, %c0_253], %598 {strides = array<i32>} : memref<2x5xf32, #tpu.memory_space<vmem>>, vector<2x5xf32>,
    return
  }
}

</mosaic_0001>

<llo_original>
// kernel: model_forward.1
$region0: #{model_forward.1}
  #allocation0 [shape = 'u32[]', space=smem, size = 0x4, offset = 0x4, fixed_abs, tag = 'smem constant byte address 0x4 - core index']
  #allocation1 [shape = 'u32[144,128]{1,0:T(1,128)}', space=vmem, size = 0x12000, scoped, tag = 'internal scratch']
  #allocation2 [shape = 'f32[16,32]{1,0:T(8,128)}', space=vmem, size = 0x2000, scoped, tag = 'scratch operand']
  #allocation3 [shape = 'f32[2,8,32]{2,1,0:T(8,128)}', space=vmem, size = 0x2000, scoped, tag = 'scratch operand']
  #allocation4 [shape = 'f32[2,288]{1,0:T(2,128)}', space=vmem, size = 0xc00, scoped, tag = 'scratch operand']
  %s0 = inlined_call_operand.smem [shape: u32[38], index: -1, kind: input, shape index: {}]
  %s1 = sld [smem:[%s0]]
  %s2 = scalar_lea.smem %s0, 1
  %s3 = sld [smem:[%s2]]
  %s4 = scalar_lea.smem %s0, 2
  %s5 = sld [smem:[%s4]]
  %s6 = scalar_lea.smem %s0, 3
  %s7 = sld [smem:[%s6]]
  %s8 = scalar_lea.smem %s0, 4
  %s9 = sld [smem:[%s8]]
  %s10 = scalar_lea.smem %s0, 5
  %s11 = sld [smem:[%s10]]
  %s12 = scalar_lea.smem %s0, 6
  %s13 = sld [smem:[%s12]]
  %s14 = scalar_lea.smem %s0, 7
  %s15 = sld [smem:[%s14]]
  %s16 = scalar_lea.smem %s0, 8
  %s17 = sld [smem:[%s16]]
  %s18 = scalar_lea.smem %s0, 9
  %s19 = sld [smem:[%s18]]
  %s20 = scalar_lea.smem %s0, 10
  %s21 = sld [smem:[%s20]]
  %s22 = scalar_lea.smem %s0, 11
  %s23 = sld [smem:[%s22]]
  %s24 = scalar_lea.smem %s0, 12
  %s25 = sld [smem:[%s24]]
  %s26 = scalar_lea.smem %s0, 13
  %s27 = sld [smem:[%s26]]
  %s28 = scalar_lea.smem %s0, 14
  %s29 = sld [smem:[%s28]]
  %s30 = scalar_lea.smem %s0, 15
  %s31 = sld [smem:[%s30]]
  %s32 = scalar_lea.smem %s0, 16
  %s33 = sld [smem:[%s32]]
  %s34 = scalar_lea.smem %s0, 17
  %s35 = sld [smem:[%s34]]
  %s36 = scalar_lea.smem %s0, 18
  %s37 = sld [smem:[%s36]]
  %s38 = scalar_lea.smem %s0, 19
  %s39 = sld [smem:[%s38]]
  %s40 = scalar_lea.smem %s0, 20
  %s41 = sld [smem:[%s40]]
  %s42 = scalar_lea.smem %s0, 21
  %s43 = sld [smem:[%s42]]
  %s44 = scalar_lea.smem %s0, 22
  %s45 = sld [smem:[%s44]]
  %s46 = scalar_lea.smem %s0, 23
  %s47 = sld [smem:[%s46]]
  %s48 = scalar_lea.smem %s0, 24
  %s49 = sld [smem:[%s48]]
  %s50 = scalar_lea.smem %s0, 25
  %s51 = sld [smem:[%s50]]
  %s52 = scalar_lea.smem %s0, 26
  %s53 = sld [smem:[%s52]]
  %s54 = scalar_lea.smem %s0, 27
  %s55 = sld [smem:[%s54]]
  %s56 = scalar_lea.smem %s0, 28
  %s57 = sld [smem:[%s56]]
  %s58 = scalar_lea.smem %s0, 29
  %s59 = sld [smem:[%s58]]
  %s60 = scalar_lea.smem %s0, 30
  %s61 = sld [smem:[%s60]]
  %s62 = scalar_lea.smem %s0, 31
  %s63 = sld [smem:[%s62]]
  %s64 = scalar_lea.smem %s0, 32
  %s65 = sld [smem:[%s64]]
  %s66 = scalar_lea.smem %s0, 33
  %s67 = sld [smem:[%s66]]
  %s68 = scalar_lea.smem %s0, 34
  %s69 = sld [smem:[%s68]]
  %s70 = scalar_lea.smem %s0, 35
  %s71 = sld [smem:[%s70]]
  %s72 = scalar_lea.smem %s0, 36
  %s73 = sld [smem:[%s72]]
  %s74 = scalar_lea.smem %s0, 37
  %s75 = sld [smem:[%s74]]
  %s76 = sld [smem:[#allocation0]]
  $region162: #{model_forward.1} parent=0
    _
  %s78 = ssub.s32 1, %s76
  %s79 = scalar_select 0, %s78, %s76
  $region1: #{model_forward.1} parent=0
    #allocation5 [shape = 'u8[1024]{0}', space=smem, size = 0x400, scoped, tag = 'input window, operand 0, single buffered']
    #allocation6 [shape = 's32[1]{0}', space=sflag, size = 0x4, scoped, tag = 'scoped memory for model_forward.1']
    #allocation7 [shape = 's32[1]{0}', space=sflag, size = 0x4, scoped, tag = 'scoped memory for model_forward.1']
    #allocation8 [shape = 'u8[1024]{0}', space=vmem, size = 0x400, scoped, tag = 'output window, operand 0, single buffered']
    %80 = vsyncpa [#allocation7], 0
    %81 = vsyncpa [#allocation6], 0
    // Predicated region
    $region2: #{model_forward.1} parent=1 // pred_check
      _
    $region3: #{model_forward.1} parent=1 // pred_check_branch
      %83 = sbr.rel (0) target = $region5
    $region4: #{model_forward.1} parent=1 // pred_region
      %s85 = ssub.s32 32, 32
      %86 = vsyncadd [#allocation7], %s85
      %s88 = sshll.u32 %s1, 4
      %s89 = int_to_ptr.vmem [resolvable:$true] %s88
      %91 = dma.vmem_to_smem %s89, 32, [#allocation5], [#allocation7]
    $region5: #{model_forward.1} parent=1 // pred_fallthru
      _
    // Predicated region
    $region6: #{model_forward.1} parent=1 // pred_check
      _
    $region7: #{model_forward.1} parent=1 // pred_check_branch
      %93 = sbr.rel (0) target = $region9
    $region8: #{model_forward.1} parent=1 // pred_region
      _
    $region9: #{model_forward.1} parent=1 // pred_fallthru
      _
    // Predicated region
    $region10: #{model_forward.1} parent=1 // pred_check
      _
    $region11: #{model_forward.1} parent=1 // pred_check_branch
      %95 = sbr.rel (0) target = $region13
    $region12: #{model_forward.1} parent=1 // pred_region
      _
    $region13: #{model_forward.1} parent=1 // pred_fallthru
      _
    // Predicated region
    $region14: #{model_forward.1} parent=1 // pred_check
      _
    $region15: #{model_forward.1} parent=1 // pred_check_branch
      %97 = sbr.rel (0) target = $region17
    $region16: #{model_forward.1} parent=1 // pred_region
      _
    $region17: #{model_forward.1} parent=1 // pred_fallthru
      _
    // Predicated region
    $region18: #{model_forward.1} parent=1 // pred_check
      _
    $region19: #{model_forward.1} parent=1 // pred_check_branch
      %99 = sbr.rel (0) target = $region21
    $region20: #{model_forward.1} parent=1 // pred_region
      _
    $region21: #{model_forward.1} parent=1 // pred_fallthru
      _
    // Predicated region
    $region22: #{model_forward.1} parent=1 // pred_check
      _
    $region23: #{model_forward.1} parent=1 // pred_check_branch
      %101 = sbr.rel (0) target = $region25
    $region24: #{model_forward.1} parent=1 // pred_region
      _
    $region25: #{model_forward.1} parent=1 // pred_fallthru
      _
    // Predicated region
    $region26: #{model_forward.1} parent=1 // pred_check
      _
    $region27: #{model_forward.1} parent=1 // pred_check_branch
      %103 = sbr.rel (0) target = $region29
    $region28: #{model_forward.1} parent=1 // pred_region
      _
    $region29: #{model_forward.1} parent=1 // pred_fallthru
      _
    // Predicated region
    $region30: #{model_forward.1} parent=1 // pred_check
      _
    $region31: #{model_forward.1} parent=1 // pred_check_branch
      %105 = sbr.rel (0) target = $region33
    $region32: #{model_forward.1} parent=1 // pred_region
      _
    $region33: #{model_forward.1} parent=1 // pred_fallthru
      _
    // Predicated region
    $region34: #{model_forward.1} parent=1 // pred_check
      _
    $region35: #{model_forward.1} parent=1 // pred_check_branch
      %107 = sbr.rel (0) target = $region37
    $region36: #{model_forward.1} parent=1 // pred_region
      _
    $region37: #{model_forward.1} parent=1 // pred_fallthru
      _
    // Predicated region
    $region38: #{model_forward.1} parent=1 // pred_check
      _
    $region39: #{model_forward.1} parent=1 // pred_check_branch
      %109 = sbr.rel (0) target = $region41
    $region40: #{model_forward.1} parent=1 // pred_region
      _
    $region41: #{model_forward.1} parent=1 // pred_fallthru
      _
    // Predicated region
    $region42: #{model_forward.1} parent=1 // pred_check
      _
    $region43: #{model_forward.1} parent=1 // pred_check_branch
      %111 = sbr.rel (0) target = $region45
    $region44: #{model_forward.1} parent=1 // pred_region
      _
    $region45: #{model_forward.1} parent=1 // pred_fallthru
      _
    // Predicated region
    $region46: #{model_forward.1} parent=1 // pred_check
      _
    $region47: #{model_forward.1} parent=1 // pred_check_branch
      %113 = sbr.rel (0) target = $region49
    $region48: #{model_forward.1} parent=1 // pred_region
      _
    $region49: #{model_forward.1} parent=1 // pred_fallthru
      _
    // Predicated region
    $region50: #{model_forward.1} parent=1 // pred_check
      _
    $region51: #{model_forward.1} parent=1 // pred_check_branch
      %115 = sbr.rel (0) target = $region53
    $region52: #{model_forward.1} parent=1 // pred_region
      _
    $region53: #{model_forward.1} parent=1 // pred_fallthru
      _
    // Predicated region
    $region54: #{model_forward.1} parent=1 // pred_check
      _
    $region55: #{model_forward.1} parent=1 // pred_check_branch
      %117 = sbr.rel (0) target = $region57
    $region56: #{model_forward.1} parent=1 // pred_region
      _
    $region57: #{model_forward.1} parent=1 // pred_fallthru
      _
    // Predicated region
    $region58: #{model_forward.1} parent=1 // pred_check
      _
    $region59: #{model_forward.1} parent=1 // pred_check_branch
      %119 = sbr.rel (0) target = $region61
    $region60: #{model_forward.1} parent=1 // pred_region
      _
    $region61: #{model_forward.1} parent=1 // pred_fallthru
      _
    // Predicated region
    $region62: #{model_forward.1} parent=1 // pred_check
      _
    $region63: #{model_forward.1} parent=1 // pred_check_branch
      %121 = sbr.rel (0) target = $region65
    $region64: #{model_forward.1} parent=1 // pred_region
      _
    $region65: #{model_forward.1} parent=1 // pred_fallthru
      _
    // Predicated region
    $region66: #{model_forward.1} parent=1 // pred_check
      _
    $region67: #{model_forward.1} parent=1 // pred_check_branch
      %123 = sbr.rel (0) target = $region69
    $region68: #{model_forward.1} parent=1 // pred_region
      _
    $region69: #{model_forward.1} parent=1 // pred_fallthru
      _
    // Predicated region
    $region70: #{model_forward.1} parent=1 // pred_check
      _
    $region71: #{model_forward.1} parent=1 // pred_check_branch
      %125 = sbr.rel (0) target = $region73
    $region72: #{model_forward.1} parent=1 // pred_region
      _
    $region73: #{model_forward.1} parent=1 // pred_fallthru
      _
    // Predicated region
    $region74: #{model_forward.1} parent=1 // pred_check
      _
    $region75: #{model_forward.1} parent=1 // pred_check_branch
      %127 = sbr.rel (0) target = $region77
    $region76: #{model_forward.1} parent=1 // pred_region
      _
    $region77: #{model_forward.1} parent=1 // pred_fallthru
      _
    // Predicated region
    $region78: #{model_forward.1} parent=1 // pred_check
      _
    $region79: #{model_forward.1} parent=1 // pred_check_branch
      %129 = sbr.rel (0) target = $region81
    $region80: #{model_forward.1} parent=1 // pred_region
      _
    $region81: #{model_forward.1} parent=1 // pred_fallthru
      _
    // Predicated region
    $region82: #{model_forward.1} parent=1 // pred_check
      _
    $region83: #{model_forward.1} parent=1 // pred_check_branch
      %131 = sbr.rel (0) target = $region85
    $region84: #{model_forward.1} parent=1 // pred_region
      _
    $region85: #{model_forward.1} parent=1 // pred_fallthru
      _
    // Predicated region
    $region86: #{model_forward.1} parent=1 // pred_check
      _
    $region87: #{model_forward.1} parent=1 // pred_check_branch
      %133 = sbr.rel (0) target = $region89
    $region88: #{model_forward.1} parent=1 // pred_region
      _
    $region89: #{model_forward.1} parent=1 // pred_fallthru
      _
    // Predicated region
    $region90: #{model_forward.1} parent=1 // pred_check
      _
    $region91: #{model_forward.1} parent=1 // pred_check_branch
      %135 = sbr.rel (0) target = $region93
    $region92: #{model_forward.1} parent=1 // pred_region
      _
    $region93: #{model_forward.1} parent=1 // pred_fallthru
      _
    // Predicated region
    $region94: #{model_forward.1} parent=1 // pred_check
      _
    $region95: #{model_forward.1} parent=1 // pred_check_branch
      %137 = sbr.rel (0) target = $region97
    $region96: #{model_forward.1} parent=1 // pred_region
      _
    $region97: #{model_forward.1} parent=1 // pred_fallthru
      _
    // Predicated region
    $region98: #{model_forward.1} parent=1 // pred_check
      _
    $region99: #{model_forward.1} parent=1 // pred_check_branch
      %139 = sbr.rel (0) target = $region101
    $region100: #{model_forward.1} parent=1 // pred_region
      _
    $region101: #{model_forward.1} parent=1 // pred_fallthru
      _
    // Predicated region
    $region102: #{model_forward.1} parent=1 // pred_check
      _
    $region103: #{model_forward.1} parent=1 // pred_check_branch
      %141 = sbr.rel (0) target = $region105
    $region104: #{model_forward.1} parent=1 // pred_region
      _
    $region105: #{model_forward.1} parent=1 // pred_fallthru
      _
    // Predicated region
    $region106: #{model_forward.1} parent=1 // pred_check
      _
    $region107: #{model_forward.1} parent=1 // pred_check_branch
      %143 = sbr.rel (0) target = $region109
    $region108: #{model_forward.1} parent=1 // pred_region
      _
    $region109: #{model_forward.1} parent=1 // pred_fallthru
      _
    // Predicated region
    $region110: #{model_forward.1} parent=1 // pred_check
      _
    $region111: #{model_forward.1} parent=1 // pred_check_branch
      %145 = sbr.rel (0) target = $region113
    $region112: #{model_forward.1} parent=1 // pred_region
      _
    $region113: #{model_forward.1} parent=1 // pred_fallthru
      _
    // Predicated region
    $region114: #{model_forward.1} parent=1 // pred_check
      _
    $region115: #{model_forward.1} parent=1 // pred_check_branch
      %147 = sbr.rel (0) target = $region117
    $region116: #{model_forward.1} parent=1 // pred_region
      _
    $region117: #{model_forward.1} parent=1 // pred_fallthru
      _
    // Predicated region
    $region118: #{model_forward.1} parent=1 // pred_check
      _
    $region119: #{model_forward.1} parent=1 // pred_check_branch
      %149 = sbr.rel (0) target = $region121
    $region120: #{model_forward.1} parent=1 // pred_region
      _
    $region121: #{model_forward.1} parent=1 // pred_fallthru
      _
    // Predicated region
    $region122: #{model_forward.1} parent=1 // pred_check
      _
    $region123: #{model_forward.1} parent=1 // pred_check_branch
      %151 = sbr.rel (0) target = $region125
    $region124: #{model_forward.1} parent=1 // pred_region
      _
    $region125: #{model_forward.1} parent=1 // pred_fallthru
      _
    // Predicated region
    $region126: #{model_forward.1} parent=1 // pred_check
      _
    $region127: #{model_forward.1} parent=1 // pred_check_branch
      %153 = sbr.rel (0) target = $region129
    $region128: #{model_forward.1} parent=1 // pred_region
      _
    $region129: #{model_forward.1} parent=1 // pred_fallthru
      _
    // Predicated region
    $region130: #{model_forward.1} parent=1 // pred_check
      _
    $region131: #{model_forward.1} parent=1 // pred_check_branch
      %155 = sbr.rel (0) target = $region133
    $region132: #{model_forward.1} parent=1 // pred_region
      _
    $region133: #{model_forward.1} parent=1 // pred_fallthru
      _
    // Predicated region
    $region134: #{model_forward.1} parent=1 // pred_check
      _
    $region135: #{model_forward.1} parent=1 // pred_check_branch
      %157 = sbr.rel (0) target = $region137
    $region136: #{model_forward.1} parent=1 // pred_region
      _
    $region137: #{model_forward.1} parent=1 // pred_fallthru
      _
    // Predicated region
    $region138: #{model_forward.1} parent=1 // pred_check
      _
    $region139: #{model_forward.1} parent=1 // pred_check_branch
      %159 = sbr.rel (0) target = $region141
    $region140: #{model_forward.1} parent=1 // pred_region
      _
    $region141: #{model_forward.1} parent=1 // pred_fallthru
      _
    // Predicated region
    $region142: #{model_forward.1} parent=1 // pred_check
      _
    $region143: #{model_forward.1} parent=1 // pred_check_branch
      %161 = sbr.rel (0) target = $region145
    $region144: #{model_forward.1} parent=1 // pred_region
      _
    $region145: #{model_forward.1} parent=1 // pred_fallthru
      _
    // Predicated region
    $region146: #{model_forward.1} parent=1 // pred_check
      _
    $region147: #{model_forward.1} parent=1 // pred_check_branch
      %163 = sbr.rel (0) target = $region149
    $region148: #{model_forward.1} parent=1 // pred_region
      _
    $region149: #{model_forward.1} parent=1 // pred_fallthru
      _
    // Predicated region
    $region150: #{model_forward.1} parent=1 // pred_check
      _
    $region151: #{model_forward.1} parent=1 // pred_check_branch
      %165 = sbr.rel (0) target = $region153
    $region152: #{model_forward.1} parent=1 // pred_region
      %166 = dma.done [#allocation7], 32
    $region153: #{model_forward.1} parent=1 // pred_fallthru
      _
    %167 = sfence
    %v169 = vld [vmem:[%s3] sm:$0xff]
    %v170 = vld [vmem:[%s3 + $0x8] sm:$0xff]
    %v171 = vld [vmem:[%s7] sm:$0xff]
    %v172 = vld [vmem:[%s7 + $0x8] sm:$0xff]
    %v173 = vld [vmem:[%s7 + $0x10] sm:$0xff]
    %v174 = vld [vmem:[%s7 + $0x18] sm:$0xff]
    %v175 = vpack.c.bf16 %v170, %v169
    %v176 = vpack.c.bf16 %v172, %v171
    %v177 = vpack.c.bf16 %v174, %v173
    %v178 = vld [vmem:[%s9] sm:$0x1]
    %v180 = vlaneseq
    %v181 = vshrl.u32 %v180, 7
    %v182 = vsub.s32 0, %v181
    %v183 = vrot.slane %v178, %v182
    %vm185 = vcmask 261120
    %v187 = vsel %vm185, %v175, 0
    %189 = vmatprep.subr.bf16.mxu0 0
    %190 = vmatpush1.bf16.msra.mxu0 0
    %191 = vmatprep.subr.bf16.mxu0 0
    %192 = vmatpush1.bf16.msra.mxu0 0
    %193 = vmatprep.subr.bf16.mxu0 0
    %194 = vmatpush1.bf16.msra.mxu0 0
    %195 = vmatprep.subr.bf16.mxu0 0
    %196 = vmatpush1.bf16.msra.mxu0 0
    %197 = vmatprep.subr.bf16.mxu0 0
    %198 = vmatpush1.bf16.msra.mxu0 0
    %199 = vmatprep.subr.bf16.mxu0 0
    %200 = vmatpush1.bf16.msra.mxu0 0
    %201 = vmatprep.subr.bf16.mxu0 0
    %202 = vmatpush1.bf16.msra.mxu0 %v177
    %203 = vmatprep.subr.bf16.mxu0 0
    %204 = vmatpush1.bf16.msra.mxu0 %v176
    %205 = vmatprep.subr.bf16.mxu0 0
    %206 = vmatpush2.bf16.msra.mxu0 0
    %207 = vmatprep.subr.bf16.mxu0 0
    %208 = vmatpush2.bf16.msra.mxu0 0
    %209 = vmatprep.subr.bf16.mxu0 0
    %210 = vmatpush2.bf16.msra.mxu0 0
    %211 = vmatprep.subr.bf16.mxu0 0
    %212 = vmatpush2.bf16.msra.mxu0 0
    %213 = vmatprep.subr.bf16.mxu0 0
    %214 = vmatpush2.bf16.msra.mxu0 0
    %215 = vmatprep.subr.bf16.mxu0 0
    %216 = vmatpush2.bf16.msra.mxu0 0
    %217 = vmatprep.subr.bf16.mxu0 0
    %218 = vmatpush2.bf16.msra.mxu0 0
    %219 = vmatprep.subr.bf16.mxu0 0
    %220 = vmatpush2.bf16.msra.mxu0 0
    %221 = vmatprep.mubr.bf16.mxu0 0
    %222 = vmatmul.mubr.bf16.gmra.mxu0 %v187
    %v223 = vpop.f32.mrf.mxu0
    %v224 = vadd.f32 %v183, %v223
    %v225 = vpop.f32.mrf.mxu0
    %v226 = vpop.f32.mrf.mxu0
    %v227 = vadd.f32 %v183, %v226
    %v228 = vpop.f32.mrf.mxu0
    %229 = vdwg.mxu0
    %232 = vrot.lane.b32.xlu0 %v224, 112
    %v233 = vpop.permute.xlu0 %232
    %234 = vrot.lane.b32.xlu0 %v227, 112
    %v235 = vpop.permute.xlu0 %234
    %v238 = vpack.c.bf16 %v224, %v224
    %v239 = vpack.c.bf16 %v227, %v227
    %v240 = vpack.c.bf16 %v233, %v233
    %v241 = vpack.c.bf16 %v235, %v235
    %v242 = vld [vmem:[%s5] sm:$0x1]
    %v243 = vld [vmem:[%s5 + $0x1] sm:$0x1]
    %v244 = vld [vmem:[%s5 + $0x2] sm:$0x1]
    %v245 = vld [vmem:[%s5 + $0x3] sm:$0x1]
    %v250 = vlaneseq
    %v251 = vshrl.u32 %v250, 7
    %v252 = vsub.s32 0, %v251
    %v253 = vrot.slane %v242, %v252
    %v254 = vlaneseq
    %v255 = vshrl.u32 %v254, 7
    %v256 = vsub.s32 0, %v255
    %v257 = vrot.slane %v243, %v256
    %v258 = vlaneseq
    %v259 = vshrl.u32 %v258, 7
    %v260 = vsub.s32 0, %v259
    %v261 = vrot.slane %v244, %v260
    %v262 = vlaneseq
    %v263 = vshrl.u32 %v262, 7
    %v264 = vsub.s32 0, %v263
    %v265 = vrot.slane %v245, %v264
    %271 = vrot.lane.b32.xlu0 %v238, 96
    %v272 = vpop.permute.xlu0 %271
    %vm273 = vcmask 130048
    %v275 = vsel %vm273, %v238, 0
    %v278 = vsel %vm273, %v272, 0
    %280 = vmatprep.subr.bf16.mxu0 0
    %281 = vmatpush1.bf16.xpose.msra.mxu0 0
    %282 = vmatprep.subr.bf16.mxu0 0
    %283 = vmatpush1.bf16.xpose.msra.mxu0 0
    %284 = vmatprep.subr.bf16.mxu0 0
    %285 = vmatpush1.bf16.xpose.msra.mxu0 0
    %286 = vmatprep.subr.bf16.mxu0 0
    %287 = vmatpush1.bf16.xpose.msra.mxu0 0
    %288 = vmatprep.subr.bf16.mxu0 0
    %289 = vmatpush1.bf16.xpose.msra.mxu0 0
    %290 = vmatprep.subr.bf16.mxu0 0
    %291 = vmatpush1.bf16.xpose.msra.mxu0 0
    %292 = vmatprep.subr.bf16.mxu0 0
    %293 = vmatpush1.bf16.xpose.msra.mxu0 0
    %294 = vmatprep.subr.bf16.mxu0 0
    %295 = vmatpush1.bf16.xpose.msra.mxu0 %v278
    %296 = vmatprep.subr.bf16.mxu0 0
    %297 = vmatpush2.bf16.xpose.msra.mxu0 0
    %298 = vmatprep.subr.bf16.mxu0 0
    %299 = vmatpush2.bf16.xpose.msra.mxu0 0
    %300 = vmatprep.subr.bf16.mxu0 0
    %301 = vmatpush2.bf16.xpose.msra.mxu0 0
    %302 = vmatprep.subr.bf16.mxu0 0
    %303 = vmatpush2.bf16.xpose.msra.mxu0 0
    %304 = vmatprep.subr.bf16.mxu0 0
    %305 = vmatpush2.bf16.xpose.msra.mxu0 0
    %306 = vmatprep.subr.bf16.mxu0 0
    %307 = vmatpush2.bf16.xpose.msra.mxu0 0
    %308 = vmatprep.subr.bf16.mxu0 0
    %309 = vmatpush2.bf16.xpose.msra.mxu0 0
    %310 = vmatprep.subr.bf16.mxu0 0
    %311 = vmatpush2.bf16.xpose.msra.mxu0 0
    %312 = vmatprep.mubr.bf16.mxu0 0
    %313 = vmatmul.mubr.bf16.gmra.mxu0 %v275
    %v314 = vpop.f32.mrf.mxu0
    %v315 = vadd.f32 %v253, %v314
    %v316 = vpop.f32.mrf.mxu0
    %v317 = vpop.f32.mrf.mxu0
    %v318 = vpop.f32.mrf.mxu0
    %319 = vdwg.mxu0
    %321 = vrot.lane.b32.xlu0 %v239, 96
    %v322 = vpop.permute.xlu0 %321
    %v324 = vsel %vm273, %v239, 0
    %v327 = vsel %vm273, %v322, 0
    %329 = vmatprep.subr.bf16.mxu0 0
    %330 = vmatpush1.bf16.xpose.msra.mxu0 0
    %331 = vmatprep.subr.bf16.mxu0 0
    %332 = vmatpush1.bf16.xpose.msra.mxu0 0
    %333 = vmatprep.subr.bf16.mxu0 0
    %334 = vmatpush1.bf16.xpose.msra.mxu0 0
    %335 = vmatprep.subr.bf16.mxu0 0
    %336 = vmatpush1.bf16.xpose.msra.mxu0 0
    %337 = vmatprep.subr.bf16.mxu0 0
    %338 = vmatpush1.bf16.xpose.msra.mxu0 0
    %339 = vmatprep.subr.bf16.mxu0 0
    %340 = vmatpush1.bf16.xpose.msra.mxu0 0
    %341 = vmatprep.subr.bf16.mxu0 0
    %342 = vmatpush1.bf16.xpose.msra.mxu0 0
    %343 = vmatprep.subr.bf16.mxu0 0
    %344 = vmatpush1.bf16.xpose.msra.mxu0 %v327
    %345 = vmatprep.subr.bf16.mxu0 0
    %346 = vmatpush2.bf16.xpose.msra.mxu0 0
    %347 = vmatprep.subr.bf16.mxu0 0
    %348 = vmatpush2.bf16.xpose.msra.mxu0 0
    %349 = vmatprep.subr.bf16.mxu0 0
    %350 = vmatpush2.bf16.xpose.msra.mxu0 0
    %351 = vmatprep.subr.bf16.mxu0 0
    %352 = vmatpush2.bf16.xpose.msra.mxu0 0
    %353 = vmatprep.subr.bf16.mxu0 0
    %354 = vmatpush2.bf16.xpose.msra.mxu0 0
    %355 = vmatprep.subr.bf16.mxu0 0
    %356 = vmatpush2.bf16.xpose.msra.mxu0 0
    %357 = vmatprep.subr.bf16.mxu0 0
    %358 = vmatpush2.bf16.xpose.msra.mxu0 0
    %359 = vmatprep.subr.bf16.mxu0 0
    %360 = vmatpush2.bf16.xpose.msra.mxu0 0
    %361 = vmatprep.mubr.bf16.mxu0 0
    %362 = vmatmul.mubr.bf16.gmra.mxu0 %v324
    %v363 = vpop.f32.mrf.mxu0
    %v364 = vadd.f32 %v257, %v363
    %v365 = vpop.f32.mrf.mxu0
    %v366 = vpop.f32.mrf.mxu0
    %v367 = vpop.f32.mrf.mxu0
    %368 = vdwg.mxu0
    %370 = vrot.lane.b32.xlu0 %v240, 96
    %v371 = vpop.permute.xlu0 %370
    %v373 = vsel %vm273, %v240, 0
    %v376 = vsel %vm273, %v371, 0
    %378 = vmatprep.subr.bf16.mxu0 0
    %379 = vmatpush1.bf16.xpose.msra.mxu0 0
    %380 = vmatprep.subr.bf16.mxu0 0
    %381 = vmatpush1.bf16.xpose.msra.mxu0 0
    %382 = vmatprep.subr.bf16.mxu0 0
    %383 = vmatpush1.bf16.xpose.msra.mxu0 0
    %384 = vmatprep.subr.bf16.mxu0 0
    %385 = vmatpush1.bf16.xpose.msra.mxu0 0
    %386 = vmatprep.subr.bf16.mxu0 0
    %387 = vmatpush1.bf16.xpose.msra.mxu0 0
    %388 = vmatprep.subr.bf16.mxu0 0
    %389 = vmatpush1.bf16.xpose.msra.mxu0 0
    %390 = vmatprep.subr.bf16.mxu0 0
    %391 = vmatpush1.bf16.xpose.msra.mxu0 0
    %392 = vmatprep.subr.bf16.mxu0 0
    %393 = vmatpush1.bf16.xpose.msra.mxu0 %v376
    %394 = vmatprep.subr.bf16.mxu0 0
    %395 = vmatpush2.bf16.xpose.msra.mxu0 0
    %396 = vmatprep.subr.bf16.mxu0 0
    %397 = vmatpush2.bf16.xpose.msra.mxu0 0
    %398 = vmatprep.subr.bf16.mxu0 0
    %399 = vmatpush2.bf16.xpose.msra.mxu0 0
    %400 = vmatprep.subr.bf16.mxu0 0
    %401 = vmatpush2.bf16.xpose.msra.mxu0 0
    %402 = vmatprep.subr.bf16.mxu0 0
    %403 = vmatpush2.bf16.xpose.msra.mxu0 0
    %404 = vmatprep.subr.bf16.mxu0 0
    %405 = vmatpush2.bf16.xpose.msra.mxu0 0
    %406 = vmatprep.subr.bf16.mxu0 0
    %407 = vmatpush2.bf16.xpose.msra.mxu0 0
    %408 = vmatprep.subr.bf16.mxu0 0
    %409 = vmatpush2.bf16.xpose.msra.mxu0 0
    %410 = vmatprep.mubr.bf16.mxu0 0
    %411 = vmatmul.mubr.bf16.gmra.mxu0 %v373
    %v412 = vpop.f32.mrf.mxu0
    %v413 = vadd.f32 %v261, %v412
    %v414 = vpop.f32.mrf.mxu0
    %v415 = vpop.f32.mrf.mxu0
    %v416 = vpop.f32.mrf.mxu0
    %417 = vdwg.mxu0
    %419 = vrot.lane.b32.xlu0 %v241, 96
    %v420 = vpop.permute.xlu0 %419
    %v422 = vsel %vm273, %v241, 0
    %v425 = vsel %vm273, %v420, 0
    %427 = vmatprep.subr.bf16.mxu0 0
    %428 = vmatpush1.bf16.xpose.msra.mxu0 0
    %429 = vmatprep.subr.bf16.mxu0 0
    %430 = vmatpush1.bf16.xpose.msra.mxu0 0
    %431 = vmatprep.subr.bf16.mxu0 0
    %432 = vmatpush1.bf16.xpose.msra.mxu0 0
    %433 = vmatprep.subr.bf16.mxu0 0
    %434 = vmatpush1.bf16.xpose.msra.mxu0 0
    %435 = vmatprep.subr.bf16.mxu0 0
    %436 = vmatpush1.bf16.xpose.msra.mxu0 0
    %437 = vmatprep.subr.bf16.mxu0 0
    %438 = vmatpush1.bf16.xpose.msra.mxu0 0
    %439 = vmatprep.subr.bf16.mxu0 0
    %440 = vmatpush1.bf16.xpose.msra.mxu0 0
    %441 = vmatprep.subr.bf16.mxu0 0
    %442 = vmatpush1.bf16.xpose.msra.mxu0 %v425
    %443 = vmatprep.subr.bf16.mxu0 0
    %444 = vmatpush2.bf16.xpose.msra.mxu0 0
    %445 = vmatprep.subr.bf16.mxu0 0
    %446 = vmatpush2.bf16.xpose.msra.mxu0 0
    %447 = vmatprep.subr.bf16.mxu0 0
    %448 = vmatpush2.bf16.xpose.msra.mxu0 0
    %449 = vmatprep.subr.bf16.mxu0 0
    %450 = vmatpush2.bf16.xpose.msra.mxu0 0
    %451 = vmatprep.subr.bf16.mxu0 0
    %452 = vmatpush2.bf16.xpose.msra.mxu0 0
    %453 = vmatprep.subr.bf16.mxu0 0
    %454 = vmatpush2.bf16.xpose.msra.mxu0 0
    %455 = vmatprep.subr.bf16.mxu0 0
    %456 = vmatpush2.bf16.xpose.msra.mxu0 0
    %457 = vmatprep.subr.bf16.mxu0 0
    %458 = vmatpush2.bf16.xpose.msra.mxu0 0
    %459 = vmatprep.mubr.bf16.mxu0 0
    %460 = vmatmul.mubr.bf16.gmra.mxu0 %v422
    %v461 = vpop.f32.mrf.mxu0
    %v462 = vadd.f32 %v265, %v461
    %v463 = vpop.f32.mrf.mxu0
    %v464 = vpop.f32.mrf.mxu0
    %v465 = vpop.f32.mrf.mxu0
    %466 = vdwg.mxu0
    %vm467 = vcmask 64512
    %v468 = vsel %vm467, %v315, -inf
    %469 = vmax.xlane.f32.xlu0 %v468
    %v470 = vpop.xlane.xlu0 %469
    %v471 = vsel %vm467, %v364, -inf
    %472 = vmax.xlane.f32.xlu0 %v471
    %v473 = vpop.xlane.xlu0 %472
    %v474 = vsel %vm467, %v413, -inf
    %475 = vmax.xlane.f32.xlu0 %v474
    %v476 = vpop.xlane.xlu0 %475
    %v477 = vsel %vm467, %v462, -inf
    %478 = vmax.xlane.f32.xlu0 %v477
    %v479 = vpop.xlane.xlu0 %478
    %v480 = vsub.f32 %v315, %v470
    %v481 = vsub.f32 %v364, %v473
    %v482 = vsub.f32 %v413, %v476
    %v483 = vsub.f32 %v462, %v479
    %v484 = vmul.f32 %v480, 1.442695
    %v485 = vpow.pop %v484
    %v486 = vmul.f32 %v481, 1.442695
    %v487 = vpow.pop %v486
    %v488 = vmul.f32 %v482, 1.442695
    %v489 = vpow.pop %v488
    %v490 = vmul.f32 %v483, 1.442695
    %v491 = vpow.pop %v490
    %v492 = vsel %vm467, %v485, 0.0
    %493 = vadd.xlane.f32.xlu0 %v492
    %v494 = vpop.xlane.xlu0 %493
    %v495 = vsel %vm467, %v487, 0.0
    %496 = vadd.xlane.f32.xlu0 %v495
    %v497 = vpop.xlane.xlu0 %496
    %v498 = vsel %vm467, %v489, 0.0
    %499 = vadd.xlane.f32.xlu0 %v498
    %v500 = vpop.xlane.xlu0 %499
    %v501 = vsel %vm467, %v491, 0.0
    %502 = vadd.xlane.f32.xlu0 %v501
    %v503 = vpop.xlane.xlu0 %502
    %v504 = vrcp.pop %v494
    %v505 = vmul.f32 %v485, %v504
    %v506 = vrcp.pop %v497
    %v507 = vmul.f32 %v487, %v506
    %v508 = vrcp.pop %v500
    %v509 = vmul.f32 %v489, %v508
    %v510 = vrcp.pop %v503
    %v511 = vmul.f32 %v491, %v510
    %v512 = vpack.c.bf16 %v505, %v505
    %v513 = vpack.c.bf16 %v507, %v507
    %v514 = vpack.c.bf16 %v509, %v509
    %v515 = vpack.c.bf16 %v511, %v511
    %516 = vrot.lane.b32.xlu0 %v238, 64
    %v517 = vpop.permute.xlu0 %516
    %v519 = vsel %vm467, %v512, 0
    %vm521 = vcmask 1043456
    %v523 = vsel %vm521, %v517, 0
    %525 = vmatprep.subr.bf16.mxu0 0
    %526 = vmatpush1.bf16.msra.mxu0 0
    %527 = vmatprep.subr.bf16.mxu0 0
    %528 = vmatpush1.bf16.msra.mxu0 0
    %529 = vmatprep.subr.bf16.mxu0 0
    %530 = vmatpush1.bf16.msra.mxu0 0
    %531 = vmatprep.subr.bf16.mxu0 0
    %532 = vmatpush1.bf16.msra.mxu0 0
    %533 = vmatprep.subr.bf16.mxu0 0
    %534 = vmatpush1.bf16.msra.mxu0 0
    %535 = vmatprep.subr.bf16.mxu0 0
    %536 = vmatpush1.bf16.msra.mxu0 0
    %537 = vmatprep.subr.bf16.mxu0 0
    %538 = vmatpush1.bf16.msra.mxu0 0
    %539 = vmatprep.subr.bf16.mxu0 0
    %540 = vmatpush1.bf16.msra.mxu0 %v523
    %541 = vmatprep.subr.bf16.mxu0 0
    %542 = vmatpush2.bf16.msra.mxu0 0
    %543 = vmatprep.subr.bf16.mxu0 0
    %544 = vmatpush2.bf16.msra.mxu0 0
    %545 = vmatprep.subr.bf16.mxu0 0
    %546 = vmatpush2.bf16.msra.mxu0 0
    %547 = vmatprep.subr.bf16.mxu0 0
    %548 = vmatpush2.bf16.msra.mxu0 0
    %549 = vmatprep.subr.bf16.mxu0 0
    %550 = vmatpush2.bf16.msra.mxu0 0
    %551 = vmatprep.subr.bf16.mxu0 0
    %552 = vmatpush2.bf16.msra.mxu0 0
    %553 = vmatprep.subr.bf16.mxu0 0
    %554 = vmatpush2.bf16.msra.mxu0 0
    %555 = vmatprep.subr.bf16.mxu0 0
    %556 = vmatpush2.bf16.msra.mxu0 0
    %557 = vmatprep.mubr.bf16.mxu0 0
    %558 = vmatmul.mubr.bf16.gmra.mxu0 %v519
    %v559 = vpop.f32.mrf.mxu0
    %v560 = vadd.f32 0.0, %v559
    %v561 = vpop.f32.mrf.mxu0
    %v562 = vpop.f32.mrf.mxu0
    %v563 = vpop.f32.mrf.mxu0
    %564 = vdwg.mxu0
    %565 = vrot.lane.b32.xlu0 %v239, 64
    %v566 = vpop.permute.xlu0 %565
    %v568 = vsel %vm467, %v513, 0
    %v571 = vsel %vm521, %v566, 0
    %573 = vmatprep.subr.bf16.mxu0 0
    %574 = vmatpush1.bf16.msra.mxu0 0
    %575 = vmatprep.subr.bf16.mxu0 0
    %576 = vmatpush1.bf16.msra.mxu0 0
    %577 = vmatprep.subr.bf16.mxu0 0
    %578 = vmatpush1.bf16.msra.mxu0 0
    %579 = vmatprep.subr.bf16.mxu0 0
    %580 = vmatpush1.bf16.msra.mxu0 0
    %581 = vmatprep.subr.bf16.mxu0 0
    %582 = vmatpush1.bf16.msra.mxu0 0
    %583 = vmatprep.subr.bf16.mxu0 0
    %584 = vmatpush1.bf16.msra.mxu0 0
    %585 = vmatprep.subr.bf16.mxu0 0
    %586 = vmatpush1.bf16.msra.mxu0 0
    %587 = vmatprep.subr.bf16.mxu0 0
    %588 = vmatpush1.bf16.msra.mxu0 %v571
    %589 = vmatprep.subr.bf16.mxu0 0
    %590 = vmatpush2.bf16.msra.mxu0 0
    %591 = vmatprep.subr.bf16.mxu0 0
    %592 = vmatpush2.bf16.msra.mxu0 0
    %593 = vmatprep.subr.bf16.mxu0 0
    %594 = vmatpush2.bf16.msra.mxu0 0
    %595 = vmatprep.subr.bf16.mxu0 0
    %596 = vmatpush2.bf16.msra.mxu0 0
    %597 = vmatprep.subr.bf16.mxu0 0
    %598 = vmatpush2.bf16.msra.mxu0 0
    %599 = vmatprep.subr.bf16.mxu0 0
    %600 = vmatpush2.bf16.msra.mxu0 0
    %601 = vmatprep.subr.bf16.mxu0 0
    %602 = vmatpush2.bf16.msra.mxu0 0
    %603 = vmatprep.subr.bf16.mxu0 0
    %604 = vmatpush2.bf16.msra.mxu0 0
    %605 = vmatprep.mubr.bf16.mxu0 0
    %606 = vmatmul.mubr.bf16.gmra.mxu0 %v568
    %v607 = vpop.f32.mrf.mxu0
    %v608 = vadd.f32 0.0, %v607
    %v609 = vpop.f32.mrf.mxu0
    %v610 = vpop.f32.mrf.mxu0
    %v611 = vpop.f32.mrf.mxu0
    %612 = vdwg.mxu0
    %613 = vrot.lane.b32.xlu0 %v240, 64
    %v614 = vpop.permute.xlu0 %613
    %v616 = vsel %vm467, %v514, 0
    %v619 = vsel %vm521, %v614, 0
    %621 = vmatprep.subr.bf16.mxu0 0
    %622 = vmatpush1.bf16.msra.mxu0 0
    %623 = vmatprep.subr.bf16.mxu0 0
    %624 = vmatpush1.bf16.msra.mxu0 0
    %625 = vmatprep.subr.bf16.mxu0 0
    %626 = vmatpush1.bf16.msra.mxu0 0
    %627 = vmatprep.subr.bf16.mxu0 0
    %628 = vmatpush1.bf16.msra.mxu0 0
    %629 = vmatprep.subr.bf16.mxu0 0
    %630 = vmatpush1.bf16.msra.mxu0 0
    %631 = vmatprep.subr.bf16.mxu0 0
    %632 = vmatpush1.bf16.msra.mxu0 0
    %633 = vmatprep.subr.bf16.mxu0 0
    %634 = vmatpush1.bf16.msra.mxu0 0
    %635 = vmatprep.subr.bf16.mxu0 0
    %636 = vmatpush1.bf16.msra.mxu0 %v619
    %637 = vmatprep.subr.bf16.mxu0 0
    %638 = vmatpush2.bf16.msra.mxu0 0
    %639 = vmatprep.subr.bf16.mxu0 0
    %640 = vmatpush2.bf16.msra.mxu0 0
    %641 = vmatprep.subr.bf16.mxu0 0
    %642 = vmatpush2.bf16.msra.mxu0 0
    %643 = vmatprep.subr.bf16.mxu0 0
    %644 = vmatpush2.bf16.msra.mxu0 0
    %645 = vmatprep.subr.bf16.mxu0 0
    %646 = vmatpush2.bf16.msra.mxu0 0
    %647 = vmatprep.subr.bf16.mxu0 0
    %648 = vmatpush2.bf16.msra.mxu0 0
    %649 = vmatprep.subr.bf16.mxu0 0
    %650 = vmatpush2.bf16.msra.mxu0 0
    %651 = vmatprep.subr.bf16.mxu0 0
    %652 = vmatpush2.bf16.msra.mxu0 0
    %653 = vmatprep.mubr.bf16.mxu0 0
    %654 = vmatmul.mubr.bf16.gmra.mxu0 %v616
    %v655 = vpop.f32.mrf.mxu0
    %v656 = vadd.f32 0.0, %v655
    %v657 = vpop.f32.mrf.mxu0
    %v658 = vpop.f32.mrf.mxu0
    %v659 = vpop.f32.mrf.mxu0
    %660 = vdwg.mxu0
    %661 = vrot.lane.b32.xlu0 %v241, 64
    %v662 = vpop.permute.xlu0 %661
    %v664 = vsel %vm467, %v515, 0
    %v667 = vsel %vm521, %v662, 0
    %669 = vmatprep.subr.bf16.mxu0 0
    %670 = vmatpush1.bf16.msra.mxu0 0
    %671 = vmatprep.subr.bf16.mxu0 0
    %672 = vmatpush1.bf16.msra.mxu0 0
    %673 = vmatprep.subr.bf16.mxu0 0
    %674 = vmatpush1.bf16.msra.mxu0 0
    %675 = vmatprep.subr.bf16.mxu0 0
    %676 = vmatpush1.bf16.msra.mxu0 0
    %677 = vmatprep.subr.bf16.mxu0 0
    %678 = vmatpush1.bf16.msra.mxu0 0
    %679 = vmatprep.subr.bf16.mxu0 0
    %680 = vmatpush1.bf16.msra.mxu0 0
    %681 = vmatprep.subr.bf16.mxu0 0
    %682 = vmatpush1.bf16.msra.mxu0 0
    %683 = vmatprep.subr.bf16.mxu0 0
    %684 = vmatpush1.bf16.msra.mxu0 %v667
    %685 = vmatprep.subr.bf16.mxu0 0
    %686 = vmatpush2.bf16.msra.mxu0 0
    %687 = vmatprep.subr.bf16.mxu0 0
    %688 = vmatpush2.bf16.msra.mxu0 0
    %689 = vmatprep.subr.bf16.mxu0 0
    %690 = vmatpush2.bf16.msra.mxu0 0
    %691 = vmatprep.subr.bf16.mxu0 0
    %692 = vmatpush2.bf16.msra.mxu0 0
    %693 = vmatprep.subr.bf16.mxu0 0
    %694 = vmatpush2.bf16.msra.mxu0 0
    %695 = vmatprep.subr.bf16.mxu0 0
    %696 = vmatpush2.bf16.msra.mxu0 0
    %697 = vmatprep.subr.bf16.mxu0 0
    %698 = vmatpush2.bf16.msra.mxu0 0
    %699 = vmatprep.subr.bf16.mxu0 0
    %700 = vmatpush2.bf16.msra.mxu0 0
    %701 = vmatprep.mubr.bf16.mxu0 0
    %702 = vmatmul.mubr.bf16.gmra.mxu0 %v664
    %v703 = vpop.f32.mrf.mxu0
    %v704 = vadd.f32 0.0, %v703
    %v705 = vpop.f32.mrf.mxu0
    %v706 = vpop.f32.mrf.mxu0
    %v707 = vpop.f32.mrf.mxu0
    %708 = vdwg.mxu0
    %711 = vrot.lane.b32.xlu0 %v656, 16
    %v712 = vpop.permute.xlu0 %711
    %713 = vrot.lane.b32.xlu0 %v704, 16
    %v714 = vpop.permute.xlu0 %713
    %v717 = vsel %vm273, %v560, %v712
    %v718 = vsel %vm273, %v608, %v714
    %v719 = vld [vmem:[%s11] sm:$0xff]
    %v720 = vld [vmem:[%s11 + $0x8] sm:$0xff]
    %v721 = vld [vmem:[%s11 + $0x10] sm:$0xff]
    %v722 = vld [vmem:[%s11 + $0x18] sm:$0xff]
    %v723 = vpack.c.bf16 %v718, %v717
    %v724 = vpack.c.bf16 %v720, %v719
    %v725 = vpack.c.bf16 %v722, %v721
    %v727 = vsel %vm185, %v723, 0
    %729 = vmatprep.subr.bf16.mxu0 0
    %730 = vmatpush1.bf16.msra.mxu0 0
    %731 = vmatprep.subr.bf16.mxu0 0
    %732 = vmatpush1.bf16.msra.mxu0 0
    %733 = vmatprep.subr.bf16.mxu0 0
    %734 = vmatpush1.bf16.msra.mxu0 0
    %735 = vmatprep.subr.bf16.mxu0 0
    %736 = vmatpush1.bf16.msra.mxu0 0
    %737 = vmatprep.subr.bf16.mxu0 0
    %738 = vmatpush1.bf16.msra.mxu0 0
    %739 = vmatprep.subr.bf16.mxu0 0
    %740 = vmatpush1.bf16.msra.mxu0 0
    %741 = vmatprep.subr.bf16.mxu0 0
    %742 = vmatpush1.bf16.msra.mxu0 %v725
    %743 = vmatprep.subr.bf16.mxu0 0
    %744 = vmatpush1.bf16.msra.mxu0 %v724
    %745 = vmatprep.subr.bf16.mxu0 0
    %746 = vmatpush2.bf16.msra.mxu0 0
    %747 = vmatprep.subr.bf16.mxu0 0
    %748 = vmatpush2.bf16.msra.mxu0 0
    %749 = vmatprep.subr.bf16.mxu0 0
    %750 = vmatpush2.bf16.msra.mxu0 0
    %751 = vmatprep.subr.bf16.mxu0 0
    %752 = vmatpush2.bf16.msra.mxu0 0
    %753 = vmatprep.subr.bf16.mxu0 0
    %754 = vmatpush2.bf16.msra.mxu0 0
    %755 = vmatprep.subr.bf16.mxu0 0
    %756 = vmatpush2.bf16.msra.mxu0 0
    %757 = vmatprep.subr.bf16.mxu0 0
    %758 = vmatpush2.bf16.msra.mxu0 0
    %759 = vmatprep.subr.bf16.mxu0 0
    %760 = vmatpush2.bf16.msra.mxu0 0
    %761 = vmatprep.mubr.bf16.mxu0 0
    %762 = vmatmul.mubr.bf16.gmra.mxu0 %v727
    %v763 = vpop.f32.mrf.mxu0
    %v764 = vadd.f32 0.0, %v763
    %v765 = vpop.f32.mrf.mxu0
    %v766 = vpop.f32.mrf.mxu0
    %v767 = vadd.f32 0.0, %v766
    %v768 = vpop.f32.mrf.mxu0
    %769 = vdwg.mxu0
    %v770 = vadd.f32 %v169, %v764
    %v771 = vadd.f32 %v170, %v767
    %v772 = vld [vmem:[%s13] sm:$0x1]
    %v774 = vlaneseq
    %v775 = vshrl.u32 %v774, 7
    %v776 = vsub.s32 0, %v775
    %v777 = vrot.slane %v772, %v776
    %v779 = vadd.f32 %v770, %v777
    %v780 = vadd.f32 %v771, %v777
    %v781 = vld [vmem:[%s15] sm:$0x1]
    %v782 = vld [vmem:[%s17] sm:$0x1]
    %v783 = vsel %vm185, %v779, 0.0
    %784 = vadd.xlane.f32.xlu0 %v783
    %v785 = vpop.xlane.xlu0 %784
    %v786 = vsel %vm185, %v780, 0.0
    %787 = vadd.xlane.f32.xlu0 %v786
    %v788 = vpop.xlane.xlu0 %787
    %v789 = vrcp.pop 32.0
    %v790 = vmul.f32 %v785, %v789
    %v791 = vmul.f32 %v788, %v789
    %v792 = vsub.f32 %v779, %v790
    %v793 = vsub.f32 %v780, %v791
    %v794 = vmul.f32 %v792, %v792
    %v795 = vmul.f32 %v793, %v793
    %v796 = vsel %vm185, %v794, 0.0
    %797 = vadd.xlane.f32.xlu0 %v796
    %v798 = vpop.xlane.xlu0 %797
    %v799 = vsel %vm185, %v795, 0.0
    %800 = vadd.xlane.f32.xlu0 %v799
    %v801 = vpop.xlane.xlu0 %800
    %v802 = vmul.f32 %v798, %v789
    %v803 = vmul.f32 %v801, %v789
    %v804 = vadd.f32 %v802, 1e-12
    %v805 = vadd.f32 %v803, 1e-12
    %v806 = vrsqrt.pop %v804
    %v807 = vrsqrt.pop %v805
    %v808 = vmul.f32 %v792, %v806
    %v809 = vmul.f32 %v793, %v807
    %v811 = vlaneseq
    %v812 = vshrl.u32 %v811, 7
    %v813 = vsub.s32 0, %v812
    %v814 = vrot.slane %v781, %v813
    %v816 = vmul.f32 %v808, %v814
    %v817 = vmul.f32 %v809, %v814
    %v819 = vlaneseq
    %v820 = vshrl.u32 %v819, 7
    %v821 = vsub.s32 0, %v820
    %v822 = vrot.slane %v782, %v821
    %v824 = vadd.f32 %v816, %v822
    %v825 = vadd.f32 %v817, %v822
    %v826 = vld [vmem:[%s19] sm:$0xff]
    %v827 = vld [vmem:[%s19 + $0x8] sm:$0xff]
    %v828 = vld [vmem:[%s19 + $0x10] sm:$0xff]
    %v829 = vld [vmem:[%s19 + $0x18] sm:$0xff]
    %v830 = vpack.c.bf16 %v825, %v824
    %v831 = vpack.c.bf16 %v827, %v826
    %v832 = vpack.c.bf16 %v829, %v828
    %v833 = vld [vmem:[%s21] sm:$0x1]
    %v835 = vlaneseq
    %v836 = vshrl.u32 %v835, 7
    %v837 = vsub.s32 0, %v836
    %v838 = vrot.slane %v833, %v837
    %v841 = vsel %vm185, %v830, 0
    %843 = vmatprep.subr.bf16.mxu0 0
    %844 = vmatpush1.bf16.msra.mxu0 0
    %845 = vmatprep.subr.bf16.mxu0 0
    %846 = vmatpush1.bf16.msra.mxu0 0
    %847 = vmatprep.subr.bf16.mxu0 0
    %848 = vmatpush1.bf16.msra.mxu0 0
    %849 = vmatprep.subr.bf16.mxu0 0
    %850 = vmatpush1.bf16.msra.mxu0 0
    %851 = vmatprep.subr.bf16.mxu0 0
    %852 = vmatpush1.bf16.msra.mxu0 0
    %853 = vmatprep.subr.bf16.mxu0 0
    %854 = vmatpush1.bf16.msra.mxu0 0
    %855 = vmatprep.subr.bf16.mxu0 0
    %856 = vmatpush1.bf16.msra.mxu0 %v832
    %857 = vmatprep.subr.bf16.mxu0 0
    %858 = vmatpush1.bf16.msra.mxu0 %v831
    %859 = vmatprep.subr.bf16.mxu0 0
    %860 = vmatpush2.bf16.msra.mxu0 0
    %861 = vmatprep.subr.bf16.mxu0 0
    %862 = vmatpush2.bf16.msra.mxu0 0
    %863 = vmatprep.subr.bf16.mxu0 0
    %864 = vmatpush2.bf16.msra.mxu0 0
    %865 = vmatprep.subr.bf16.mxu0 0
    %866 = vmatpush2.bf16.msra.mxu0 0
    %867 = vmatprep.subr.bf16.mxu0 0
    %868 = vmatpush2.bf16.msra.mxu0 0
    %869 = vmatprep.subr.bf16.mxu0 0
    %870 = vmatpush2.bf16.msra.mxu0 0
    %871 = vmatprep.subr.bf16.mxu0 0
    %872 = vmatpush2.bf16.msra.mxu0 0
    %873 = vmatprep.subr.bf16.mxu0 0
    %874 = vmatpush2.bf16.msra.mxu0 0
    %875 = vmatprep.mubr.bf16.mxu0 0
    %876 = vmatmul.mubr.bf16.gmra.mxu0 %v841
    %v877 = vpop.f32.mrf.mxu0
    %v878 = vadd.f32 %v838, %v877
    %v879 = vpop.f32.mrf.mxu0
    %v880 = vpop.f32.mrf.mxu0
    %v881 = vadd.f32 %v838, %v880
    %v882 = vpop.f32.mrf.mxu0
    %883 = vdwg.mxu0
    %v884 = vmul.f32 %v878, %v878
    %v885 = vmul.f32 %v881, %v881
    %v886 = vmul.f32 %v878, %v884
    %v887 = vmul.f32 %v881, %v885
    %v888 = vmul.f32 %v886, 0.044715
    %v889 = vmul.f32 %v887, 0.044715
    %v890 = vadd.f32 %v878, %v888
    %v891 = vadd.f32 %v881, %v889
    %v892 = vmul.f32 %v890, 0.7978846
    %v893 = vmul.f32 %v891, 0.7978846
    %v894 = vtanh.pop %v892
    %v895 = vtanh.pop %v893
    %v896 = vadd.f32 %v894, 1.0
    %v897 = vadd.f32 %v895, 1.0
    %v898 = vmul.f32 %v896, 0.5
    %v899 = vmul.f32 %v897, 0.5
    %v900 = vmul.f32 %v878, %v898
    %v901 = vmul.f32 %v881, %v899
    %v902 = vld [vmem:[%s23] sm:$0xff]
    %v903 = vld [vmem:[%s23 + $0x8] sm:$0xff]
    %v904 = vld [vmem:[%s23 + $0x10] sm:$0xff]
    %v905 = vld [vmem:[%s23 + $0x18] sm:$0xff]
    %v906 = vld [vmem:[%s23 + $0x20] sm:$0xff]
    %v907 = vld [vmem:[%s23 + $0x28] sm:$0xff]
    %v908 = vld [vmem:[%s23 + $0x30] sm:$0xff]
    %v909 = vld [vmem:[%s23 + $0x38] sm:$0xff]
    %v910 = vpack.c.bf16 %v901, %v900
    %v911 = vpack.c.bf16 %v903, %v902
    %v912 = vpack.c.bf16 %v905, %v904
    %v913 = vpack.c.bf16 %v907, %v906
    %v914 = vpack.c.bf16 %v909, %v908
    %vm915 = vcmask 523264
    %v917 = vsel %vm915, %v910, 0
    %919 = vmatprep.subr.bf16.mxu0 0
    %920 = vmatpush1.bf16.msra.mxu0 0
    %921 = vmatprep.subr.bf16.mxu0 0
    %922 = vmatpush1.bf16.msra.mxu0 0
    %923 = vmatprep.subr.bf16.mxu0 0
    %924 = vmatpush1.bf16.msra.mxu0 0
    %925 = vmatprep.subr.bf16.mxu0 0
    %926 = vmatpush1.bf16.msra.mxu0 0
    %927 = vmatprep.subr.bf16.mxu0 0
    %928 = vmatpush1.bf16.msra.mxu0 %v914
    %929 = vmatprep.subr.bf16.mxu0 0
    %930 = vmatpush1.bf16.msra.mxu0 %v913
    %931 = vmatprep.subr.bf16.mxu0 0
    %932 = vmatpush1.bf16.msra.mxu0 %v912
    %933 = vmatprep.subr.bf16.mxu0 0
    %934 = vmatpush1.bf16.msra.mxu0 %v911
    %935 = vmatprep.subr.bf16.mxu0 0
    %936 = vmatpush2.bf16.msra.mxu0 0
    %937 = vmatprep.subr.bf16.mxu0 0
    %938 = vmatpush2.bf16.msra.mxu0 0
    %939 = vmatprep.subr.bf16.mxu0 0
    %940 = vmatpush2.bf16.msra.mxu0 0
    %941 = vmatprep.subr.bf16.mxu0 0
    %942 = vmatpush2.bf16.msra.mxu0 0
    %943 = vmatprep.subr.bf16.mxu0 0
    %944 = vmatpush2.bf16.msra.mxu0 0
    %945 = vmatprep.subr.bf16.mxu0 0
    %946 = vmatpush2.bf16.msra.mxu0 0
    %947 = vmatprep.subr.bf16.mxu0 0
    %948 = vmatpush2.bf16.msra.mxu0 0
    %949 = vmatprep.subr.bf16.mxu0 0
    %950 = vmatpush2.bf16.msra.mxu0 0
    %951 = vmatprep.mubr.bf16.mxu0 0
    %952 = vmatmul.mubr.bf16.gmra.mxu0 %v917
    %v953 = vpop.f32.mrf.mxu0
    %v954 = vadd.f32 0.0, %v953
    %v955 = vpop.f32.mrf.mxu0
    %v956 = vpop.f32.mrf.mxu0
    %v957 = vadd.f32 0.0, %v956
    %v958 = vpop.f32.mrf.mxu0
    %959 = vdwg.mxu0
    %v960 = vadd.f32 %v824, %v954
    %v961 = vadd.f32 %v825, %v957
    %v962 = vld [vmem:[%s25] sm:$0x1]
    %v964 = vlaneseq
    %v965 = vshrl.u32 %v964, 7
    %v966 = vsub.s32 0, %v965
    %v967 = vrot.slane %v962, %v966
    %v969 = vadd.f32 %v960, %v967
    %v970 = vadd.f32 %v961, %v967
    %v971 = vld [vmem:[%s27] sm:$0x1]
    %v972 = vld [vmem:[%s29] sm:$0x1]
    %v973 = vsel %vm185, %v969, 0.0
    %974 = vadd.xlane.f32.xlu0 %v973
    %v975 = vpop.xlane.xlu0 %974
    %v976 = vsel %vm185, %v970, 0.0
    %977 = vadd.xlane.f32.xlu0 %v976
    %v978 = vpop.xlane.xlu0 %977
    %v979 = vmul.f32 %v975, %v789
    %v980 = vmul.f32 %v978, %v789
    %v981 = vsub.f32 %v969, %v979
    %v982 = vsub.f32 %v970, %v980
    %v983 = vmul.f32 %v981, %v981
    %v984 = vmul.f32 %v982, %v982
    %v985 = vsel %vm185, %v983, 0.0
    %986 = vadd.xlane.f32.xlu0 %v985
    %v987 = vpop.xlane.xlu0 %986
    %v988 = vsel %vm185, %v984, 0.0
    %989 = vadd.xlane.f32.xlu0 %v988
    %v990 = vpop.xlane.xlu0 %989
    %v991 = vmul.f32 %v987, %v789
    %v992 = vmul.f32 %v990, %v789
    %v993 = vadd.f32 %v991, 1e-12
    %v994 = vadd.f32 %v992, 1e-12
    %v995 = vrsqrt.pop %v993
    %v996 = vrsqrt.pop %v994
    %v997 = vmul.f32 %v981, %v995
    %v998 = vmul.f32 %v982, %v996
    %v1000 = vlaneseq
    %v1001 = vshrl.u32 %v1000, 7
    %v1002 = vsub.s32 0, %v1001
    %v1003 = vrot.slane %v971, %v1002
    %v1005 = vmul.f32 %v997, %v1003
    %v1006 = vmul.f32 %v998, %v1003
    %v1008 = vlaneseq
    %v1009 = vshrl.u32 %v1008, 7
    %v1010 = vsub.s32 0, %v1009
    %v1011 = vrot.slane %v972, %v1010
    %v1013 = vadd.f32 %v1005, %v1011
    %v1014 = vadd.f32 %v1006, %v1011
    %1015 = vst.msk [vmem:[#allocation2] sm:$0xff] %vm185, %v1013
    %1016 = vst.msk [vmem:[#allocation2 + $0x8] sm:$0xff] %vm185, %v1014
    %v1018 = vrot.slane %v1014, 7
    %vm1020 = vcmask 1040384
    %v1021 = vsel %vm1020, %v1013, %v1018
    %v1022 = vld [vmem:[%s31] sm:$0xff]
    %v1023 = vld [vmem:[%s31 + $0x8] sm:$0xff]
    %v1024 = vld [vmem:[%s31 + $0x10] sm:$0xff]
    %v1025 = vld [vmem:[%s31 + $0x18] sm:$0xff]
    %v1026 = vpack.c.bf16 %v1021, %v1021
    %v1027 = vpack.c.bf16 %v1023, %v1022
    %v1028 = vpack.c.bf16 %v1025, %v1024
    %v1029 = vld [vmem:[%s33] sm:$0x1]
    %v1031 = vlaneseq
    %v1032 = vshrl.u32 %v1031, 7
    %v1033 = vsub.s32 0, %v1032
    %v1034 = vrot.slane %v1029, %v1033
    %v1037 = vsel %vm185, %v1026, 0
    %1039 = vmatprep.subr.bf16.mxu0 0
    %1040 = vmatpush1.bf16.msra.mxu0 0
    %1041 = vmatprep.subr.bf16.mxu0 0
    %1042 = vmatpush1.bf16.msra.mxu0 0
    %1043 = vmatprep.subr.bf16.mxu0 0
    %1044 = vmatpush1.bf16.msra.mxu0 0
    %1045 = vmatprep.subr.bf16.mxu0 0
    %1046 = vmatpush1.bf16.msra.mxu0 0
    %1047 = vmatprep.subr.bf16.mxu0 0
    %1048 = vmatpush1.bf16.msra.mxu0 0
    %1049 = vmatprep.subr.bf16.mxu0 0
    %1050 = vmatpush1.bf16.msra.mxu0 0
    %1051 = vmatprep.subr.bf16.mxu0 0
    %1052 = vmatpush1.bf16.msra.mxu0 %v1028
    %1053 = vmatprep.subr.bf16.mxu0 0
    %1054 = vmatpush1.bf16.msra.mxu0 %v1027
    %1055 = vmatprep.subr.bf16.mxu0 0
    %1056 = vmatpush2.bf16.msra.mxu0 0
    %1057 = vmatprep.subr.bf16.mxu0 0
    %1058 = vmatpush2.bf16.msra.mxu0 0
    %1059 = vmatprep.subr.bf16.mxu0 0
    %1060 = vmatpush2.bf16.msra.mxu0 0
    %1061 = vmatprep.subr.bf16.mxu0 0
    %1062 = vmatpush2.bf16.msra.mxu0 0
    %1063 = vmatprep.subr.bf16.mxu0 0
    %1064 = vmatpush2.bf16.msra.mxu0 0
    %1065 = vmatprep.subr.bf16.mxu0 0
    %1066 = vmatpush2.bf16.msra.mxu0 0
    %1067 = vmatprep.subr.bf16.mxu0 0
    %1068 = vmatpush2.bf16.msra.mxu0 0
    %1069 = vmatprep.subr.bf16.mxu0 0
    %1070 = vmatpush2.bf16.msra.mxu0 0
    %1071 = vmatprep.mubr.bf16.mxu0 0
    %1072 = vmatmul.mubr.bf16.gmra.mxu0 %v1037
    %v1073 = vpop.f32.mrf.mxu0
    %v1074 = vadd.f32 %v1034, %v1073
    %v1075 = vpop.f32.mrf.mxu0
    %v1076 = vpop.f32.mrf.mxu0
    %v1077 = vpop.f32.mrf.mxu0
    %1078 = vdwg.mxu0
    %v1079 = vtanh.pop %v1074
    %v1080 = vld [vmem:[%s35] sm:$0xff]
    %v1081 = vld [vmem:[%s35 + $0x8] sm:$0xff]
    %v1082 = vld [vmem:[%s37] sm:$0xff]
    %v1083 = vld [vmem:[%s37 + $0x8] sm:$0xff]
    %v1084 = vld [vmem:[%s37 + $0x10] sm:$0xff]
    %v1085 = vld [vmem:[%s37 + $0x18] sm:$0xff]
    %v1086 = vpack.c.bf16 %v1081, %v1080
    %v1087 = vpack.c.bf16 %v1083, %v1082
    %v1088 = vpack.c.bf16 %v1085, %v1084
    %v1089 = vld [vmem:[%s39] sm:$0x1]
    %v1091 = vlaneseq
    %v1092 = vshrl.u32 %v1091, 7
    %v1093 = vsub.s32 0, %v1092
    %v1094 = vrot.slane %v1089, %v1093
    %v1097 = vsel %vm185, %v1086, 0
    %1099 = vmatprep.subr.bf16.mxu0 0
    %1100 = vmatpush1.bf16.msra.mxu0 0
    %1101 = vmatprep.subr.bf16.mxu0 0
    %1102 = vmatpush1.bf16.msra.mxu0 0
    %1103 = vmatprep.subr.bf16.mxu0 0
    %1104 = vmatpush1.bf16.msra.mxu0 0
    %1105 = vmatprep.subr.bf16.mxu0 0
    %1106 = vmatpush1.bf16.msra.mxu0 0
    %1107 = vmatprep.subr.bf16.mxu0 0
    %1108 = vmatpush1.bf16.msra.mxu0 0
    %1109 = vmatprep.subr.bf16.mxu0 0
    %1110 = vmatpush1.bf16.msra.mxu0 0
    %1111 = vmatprep.subr.bf16.mxu0 0
    %1112 = vmatpush1.bf16.msra.mxu0 %v1088
    %1113 = vmatprep.subr.bf16.mxu0 0
    %1114 = vmatpush1.bf16.msra.mxu0 %v1087
    %1115 = vmatprep.subr.bf16.mxu0 0
    %1116 = vmatpush2.bf16.msra.mxu0 0
    %1117 = vmatprep.subr.bf16.mxu0 0
    %1118 = vmatpush2.bf16.msra.mxu0 0
    %1119 = vmatprep.subr.bf16.mxu0 0
    %1120 = vmatpush2.bf16.msra.mxu0 0
    %1121 = vmatprep.subr.bf16.mxu0 0
    %1122 = vmatpush2.bf16.msra.mxu0 0
    %1123 = vmatprep.subr.bf16.mxu0 0
    %1124 = vmatpush2.bf16.msra.mxu0 0
    %1125 = vmatprep.subr.bf16.mxu0 0
    %1126 = vmatpush2.bf16.msra.mxu0 0
    %1127 = vmatprep.subr.bf16.mxu0 0
    %1128 = vmatpush2.bf16.msra.mxu0 0
    %1129 = vmatprep.subr.bf16.mxu0 0
    %1130 = vmatpush2.bf16.msra.mxu0 0
    %1131 = vmatprep.mubr.bf16.mxu0 0
    %1132 = vmatmul.mubr.bf16.gmra.mxu0 %v1097
    %v1133 = vpop.f32.mrf.mxu0
    %v1134 = vadd.f32 %v1094, %v1133
    %v1135 = vpop.f32.mrf.mxu0
    %v1136 = vpop.f32.mrf.mxu0
    %v1137 = vadd.f32 %v1094, %v1136
    %v1138 = vpop.f32.mrf.mxu0
    %1139 = vdwg.mxu0
    %v1140 = vld [vmem:[%s41] sm:$0xff]
    %v1141 = vld [vmem:[%s41 + $0x8] sm:$0xff]
    %v1142 = vld [vmem:[%s41 + $0x10] sm:$0xff]
    %v1143 = vld [vmem:[%s41 + $0x18] sm:$0xff]
    %v1144 = vpack.c.bf16 %v1141, %v1140
    %v1145 = vpack.c.bf16 %v1143, %v1142
    %v1147 = vsel %vm185, 0, 0
    %1149 = vmatprep.subr.bf16.mxu0 0
    %1150 = vmatpush1.bf16.msra.mxu0 0
    %1151 = vmatprep.subr.bf16.mxu0 0
    %1152 = vmatpush1.bf16.msra.mxu0 0
    %1153 = vmatprep.subr.bf16.mxu0 0
    %1154 = vmatpush1.bf16.msra.mxu0 0
    %1155 = vmatprep.subr.bf16.mxu0 0
    %1156 = vmatpush1.bf16.msra.mxu0 0
    %1157 = vmatprep.subr.bf16.mxu0 0
    %1158 = vmatpush1.bf16.msra.mxu0 0
    %1159 = vmatprep.subr.bf16.mxu0 0
    %1160 = vmatpush1.bf16.msra.mxu0 0
    %1161 = vmatprep.subr.bf16.mxu0 0
    %1162 = vmatpush1.bf16.msra.mxu0 %v1145
    %1163 = vmatprep.subr.bf16.mxu0 0
    %1164 = vmatpush1.bf16.msra.mxu0 %v1144
    %1165 = vmatprep.subr.bf16.mxu0 0
    %1166 = vmatpush2.bf16.msra.mxu0 0
    %1167 = vmatprep.subr.bf16.mxu0 0
    %1168 = vmatpush2.bf16.msra.mxu0 0
    %1169 = vmatprep.subr.bf16.mxu0 0
    %1170 = vmatpush2.bf16.msra.mxu0 0
    %1171 = vmatprep.subr.bf16.mxu0 0
    %1172 = vmatpush2.bf16.msra.mxu0 0
    %1173 = vmatprep.subr.bf16.mxu0 0
    %1174 = vmatpush2.bf16.msra.mxu0 0
    %1175 = vmatprep.subr.bf16.mxu0 0
    %1176 = vmatpush2.bf16.msra.mxu0 0
    %1177 = vmatprep.subr.bf16.mxu0 0
    %1178 = vmatpush2.bf16.msra.mxu0 0
    %1179 = vmatprep.subr.bf16.mxu0 0
    %1180 = vmatpush2.bf16.msra.mxu0 0
    %1181 = vmatprep.mubr.bf16.mxu0 0
    %1182 = vmatmul.mubr.bf16.gmra.mxu0 %v1147
    %v1183 = vpop.f32.mrf.mxu0
    %v1184 = vadd.f32 0.0, %v1183
    %v1185 = vpop.f32.mrf.mxu0
    %v1186 = vpop.f32.mrf.mxu0
    %v1187 = vpop.f32.mrf.mxu0
    %1188 = vdwg.mxu0
    %v1189 = vadd.f32 %v1134, %v1184
    %v1190 = vxor.u32 %v1189, 2147483648
    %v1191 = vmul.f32 %v1190, 1.442695
    %v1192 = vpow.pop %v1191
    %v1193 = vadd.f32 %v1192, 1.0
    %v1194 = vrcp.pop %v1193
    %v1195 = vmul.f32 1.0, %v1194
    %v1196 = vtanh.pop %v1189
    %v1197 = vmul.f32 %v1195, 0.0
    %1199 = vrot.lane.b32.xlu0 %v1196, 64
    %v1200 = vpop.permute.xlu0 %1199
    %v1202 = vmul.f32 %v1195, %v1200
    %1204 = vrot.lane.b32.xlu0 %v1202, 32
    %v1205 = vpop.permute.xlu0 %1204
    %v1207 = vadd.f32 %v1197, %v1205
    %v1208 = vtanh.pop %v1207
    %1210 = vrot.lane.b32.xlu0 %v1208, 64
    %v1211 = vpop.permute.xlu0 %1210
    %v1213 = vmul.f32 %v1195, %v1211
    %v1216 = vunpack.c.l.s4 1966171168
    %v1217 = vunpack.c.0.s8 %v1216
    %v1218 = vlaneseq
    %v1219 = vshrl.u32 %v1218, 7
    %v1220 = vsub.s32 %v1217, %v1219
    %v1221 = vrot.slane %v1213, %v1220
    %v1222 = vcombine.high %v1221, %v1221
    %v1224 = vunpack.c.l.s4 1966171168
    %v1225 = vunpack.c.0.s8 %v1224
    %v1226 = vlaneseq
    %v1227 = vshrl.u32 %v1226, 7
    %v1228 = vsub.s32 %v1225, %v1227
    %v1229 = vrot.slane %v1221, %v1228
    %v1231 = vunpack.c.l.s4 1966171168
    %v1232 = vunpack.c.0.s8 %v1231
    %v1233 = vlaneseq
    %v1234 = vshrl.u32 %v1233, 7
    %v1235 = vsub.s32 %v1232, %v1234
    %v1236 = vrot.slane %v1222, %v1235
    %v1237 = vlaneseq
    %v1238 = vshrl.u32 %v1237, 7
    %v1239 = vsub.s32 0, %v1238
    %v1240 = vrot.slane %v1229, %v1239
    %v1241 = vlaneseq
    %v1242 = vshrl.u32 %v1241, 7
    %v1243 = vsub.s32 0, %v1242
    %v1244 = vrot.slane %v1236, %v1243
    %1245 = vrot.lane.b32.xlu0 %v1240, 32
    %v1246 = vpop.permute.xlu0 %1245
    %1247 = vrot.lane.b32.xlu0 %v1244, 32
    %v1248 = vpop.permute.xlu0 %1247
    %vm1251 = vcmask 122880
    %1252 = vst.msk [vmem:[#allocation3] sm:$0x1] %vm1251, %v1246
    %1253 = vst.msk [vmem:[#allocation3 + $0x8] sm:$0x1] %vm1251, %v1248
    %vm1254 = vcmask 254080
    %1255 = vst.msk [vmem:[#allocation3 + $0x7] sm:$0x1] %vm1254, %v1246
    %1256 = vst.msk [vmem:[#allocation3 + $0xf] sm:$0x1] %vm1254, %v1248
    %v1257 = vpack.c.bf16 %v1213, %v1213
    %1259 = vrot.lane.b32.xlu0 %v1257, 32
    %v1260 = vpop.permute.xlu0 %1259
    %v1262 = vsel %vm185, %v1260, 0
    %1264 = vmatprep.subr.bf16.mxu0 0
    %1265 = vmatpush1.bf16.msra.mxu0 0
    %1266 = vmatprep.subr.bf16.mxu0 0
    %1267 = vmatpush1.bf16.msra.mxu0 0
    %1268 = vmatprep.subr.bf16.mxu0 0
    %1269 = vmatpush1.bf16.msra.mxu0 0
    %1270 = vmatprep.subr.bf16.mxu0 0
    %1271 = vmatpush1.bf16.msra.mxu0 0
    %1272 = vmatprep.subr.bf16.mxu0 0
    %1273 = vmatpush1.bf16.msra.mxu0 0
    %1274 = vmatprep.subr.bf16.mxu0 0
    %1275 = vmatpush1.bf16.msra.mxu0 0
    %1276 = vmatprep.subr.bf16.mxu0 0
    %1277 = vmatpush1.bf16.msra.mxu0 %v1145
    %1278 = vmatprep.subr.bf16.mxu0 0
    %1279 = vmatpush1.bf16.msra.mxu0 %v1144
    %1280 = vmatprep.subr.bf16.mxu0 0
    %1281 = vmatpush2.bf16.msra.mxu0 0
    %1282 = vmatprep.subr.bf16.mxu0 0
    %1283 = vmatpush2.bf16.msra.mxu0 0
    %1284 = vmatprep.subr.bf16.mxu0 0
    %1285 = vmatpush2.bf16.msra.mxu0 0
    %1286 = vmatprep.subr.bf16.mxu0 0
    %1287 = vmatpush2.bf16.msra.mxu0 0
    %1288 = vmatprep.subr.bf16.mxu0 0
    %1289 = vmatpush2.bf16.msra.mxu0 0
    %1290 = vmatprep.subr.bf16.mxu0 0
    %1291 = vmatpush2.bf16.msra.mxu0 0
    %1292 = vmatprep.subr.bf16.mxu0 0
    %1293 = vmatpush2.bf16.msra.mxu0 0
    %1294 = vmatprep.subr.bf16.mxu0 0
    %1295 = vmatpush2.bf16.msra.mxu0 0
    %1296 = vmatprep.mubr.bf16.mxu0 0
    %1297 = vmatmul.mubr.bf16.gmra.mxu0 %v1262
    %v1298 = vpop.f32.mrf.mxu0
    %v1299 = vadd.f32 0.0, %v1298
    %v1300 = vpop.f32.mrf.mxu0
    %v1301 = vpop.f32.mrf.mxu0
    %v1302 = vpop.f32.mrf.mxu0
    %1303 = vdwg.mxu0
    %v1305 = vrot.slane %v1299, 6
    %v1307 = vadd.f32 %v1134, %v1305
    %v1308 = vxor.u32 %v1307, 2147483648
    %v1309 = vmul.f32 %v1308, 1.442695
    %v1310 = vpow.pop %v1309
    %v1311 = vadd.f32 %v1310, 1.0
    %v1312 = vrcp.pop %v1311
    %v1313 = vmul.f32 1.0, %v1312
    %v1314 = vtanh.pop %v1307
    %v1316 = vrot.slane %v1207, 6
    %v1318 = vmul.f32 %v1313, %v1316
    %1320 = vrot.lane.b32.xlu0 %v1314, 64
    %v1321 = vpop.permute.xlu0 %1320
    %v1323 = vmul.f32 %v1313, %v1321
    %1325 = vrot.lane.b32.xlu0 %v1323, 32
    %v1326 = vpop.permute.xlu0 %1325
    %v1328 = vadd.f32 %v1318, %v1326
    %v1329 = vtanh.pop %v1328
    %1331 = vrot.lane.b32.xlu0 %v1329, 64
    %v1332 = vpop.permute.xlu0 %1331
    %v1334 = vmul.f32 %v1313, %v1332
    %v1337 = vunpack.c.l.s4 1966171168
    %v1338 = vunpack.c.0.s8 %v1337
    %v1339 = vlaneseq
    %v1340 = vshrl.u32 %v1339, 7
    %v1341 = vsub.s32 %v1338, %v1340
    %v1342 = vrot.slane %v1334, %v1341
    %v1343 = vcombine.high %v1342, %v1342
    %v1345 = vunpack.c.l.s4 1966171168
    %v1346 = vunpack.c.0.s8 %v1345
    %v1347 = vlaneseq
    %v1348 = vshrl.u32 %v1347, 7
    %v1349 = vsub.s32 %v1346, %v1348
    %v1350 = vrot.slane %v1342, %v1349
    %v1352 = vunpack.c.l.s4 1966171168
    %v1353 = vunpack.c.0.s8 %v1352
    %v1354 = vlaneseq
    %v1355 = vshrl.u32 %v1354, 7
    %v1356 = vsub.s32 %v1353, %v1355
    %v1357 = vrot.slane %v1343, %v1356
    %v1358 = vcombine.high %v1350, %v1350
    %v1359 = vcombine.high %v1357, %v1357
    %v1360 = vlaneseq
    %v1361 = vshrl.u32 %v1360, 7
    %v1362 = vsub.s32 0, %v1361
    %v1363 = vrot.slane %v1358, %v1362
    %v1364 = vlaneseq
    %v1365 = vshrl.u32 %v1364, 7
    %v1366 = vsub.s32 0, %v1365
    %v1367 = vrot.slane %v1359, %v1366
    %1368 = vrot.lane.b32.xlu0 %v1363, 32
    %v1369 = vpop.permute.xlu0 %1368
    %1370 = vrot.lane.b32.xlu0 %v1367, 32
    %v1371 = vpop.permute.xlu0 %1370
    %1374 = vst.msk [vmem:[#allocation3 + $0x1] sm:$0x1] %vm1251, %v1369
    %1375 = vst.msk [vmem:[#allocation3 + $0x9] sm:$0x1] %vm1251, %v1371
    %1376 = vst.msk [vmem:[#allocation3 + $0x6] sm:$0x1] %vm1254, %v1369
    %1377 = vst.msk [vmem:[#allocation3 + $0xe] sm:$0x1] %vm1254, %v1371
    %v1378 = vpack.c.bf16 %v1334, %v1334
    %v1380 = vrot.slane %v1378, 1
    %1381 = vrot.lane.b32.xlu0 %v1380, 32
    %v1382 = vpop.permute.xlu0 %1381
    %v1384 = vsel %vm185, %v1382, 0
    %1386 = vmatprep.subr.bf16.mxu0 0
    %1387 = vmatpush1.bf16.msra.mxu0 0
    %1388 = vmatprep.subr.bf16.mxu0 0
    %1389 = vmatpush1.bf16.msra.mxu0 0
    %1390 = vmatprep.subr.bf16.mxu0 0
    %1391 = vmatpush1.bf16.msra.mxu0 0
    %1392 = vmatprep.subr.bf16.mxu0 0
    %1393 = vmatpush1.bf16.msra.mxu0 0
    %1394 = vmatprep.subr.bf16.mxu0 0
    %1395 = vmatpush1.bf16.msra.mxu0 0
    %1396 = vmatprep.subr.bf16.mxu0 0
    %1397 = vmatpush1.bf16.msra.mxu0 0
    %1398 = vmatprep.subr.bf16.mxu0 0
    %1399 = vmatpush1.bf16.msra.mxu0 %v1145
    %1400 = vmatprep.subr.bf16.mxu0 0
    %1401 = vmatpush1.bf16.msra.mxu0 %v1144
    %1402 = vmatprep.subr.bf16.mxu0 0
    %1403 = vmatpush2.bf16.msra.mxu0 0
    %1404 = vmatprep.subr.bf16.mxu0 0
    %1405 = vmatpush2.bf16.msra.mxu0 0
    %1406 = vmatprep.subr.bf16.mxu0 0
    %1407 = vmatpush2.bf16.msra.mxu0 0
    %1408 = vmatprep.subr.bf16.mxu0 0
    %1409 = vmatpush2.bf16.msra.mxu0 0
    %1410 = vmatprep.subr.bf16.mxu0 0
    %1411 = vmatpush2.bf16.msra.mxu0 0
    %1412 = vmatprep.subr.bf16.mxu0 0
    %1413 = vmatpush2.bf16.msra.mxu0 0
    %1414 = vmatprep.subr.bf16.mxu0 0
    %1415 = vmatpush2.bf16.msra.mxu0 0
    %1416 = vmatprep.subr.bf16.mxu0 0
    %1417 = vmatpush2.bf16.msra.mxu0 0
    %1418 = vmatprep.mubr.bf16.mxu0 0
    %1419 = vmatmul.mubr.bf16.gmra.mxu0 %v1384
    %v1420 = vpop.f32.mrf.mxu0
    %v1421 = vadd.f32 0.0, %v1420
    %v1422 = vpop.f32.mrf.mxu0
    %v1423 = vpop.f32.mrf.mxu0
    %v1424 = vpop.f32.mrf.mxu0
    %1425 = vdwg.mxu0
    %v1427 = vrot.slane %v1421, 4
    %v1429 = vadd.f32 %v1134, %v1427
    %v1430 = vxor.u32 %v1429, 2147483648
    %v1431 = vmul.f32 %v1430, 1.442695
    %v1432 = vpow.pop %v1431
    %v1433 = vadd.f32 %v1432, 1.0
    %v1434 = vrcp.pop %v1433
    %v1435 = vmul.f32 1.0, %v1434
    %v1436 = vtanh.pop %v1429
    %v1438 = vrot.slane %v1328, 6
    %v1440 = vmul.f32 %v1435, %v1438
    %1442 = vrot.lane.b32.xlu0 %v1436, 64
    %v1443 = vpop.permute.xlu0 %1442
    %v1445 = vmul.f32 %v1435, %v1443
    %1447 = vrot.lane.b32.xlu0 %v1445, 32
    %v1448 = vpop.permute.xlu0 %1447
    %v1450 = vadd.f32 %v1440, %v1448
    %v1451 = vtanh.pop %v1450
    %1453 = vrot.lane.b32.xlu0 %v1451, 64
    %v1454 = vpop.permute.xlu0 %1453
    %v1456 = vmul.f32 %v1435, %v1454
    %v1458 = vcombine.high %v1456, %v1456
    %v1460 = vunpack.c.l.s4 1966171168
    %v1461 = vunpack.c.0.s8 %v1460
    %v1462 = vlaneseq
    %v1463 = vshrl.u32 %v1462, 7
    %v1464 = vsub.s32 %v1461, %v1463
    %v1465 = vrot.slane %v1458, %v1464
    %v1466 = vcombine.high %v1465, %v1465
    %v1468 = vunpack.c.l.s4 1966171168
    %v1469 = vunpack.c.0.s8 %v1468
    %v1470 = vlaneseq
    %v1471 = vshrl.u32 %v1470, 7
    %v1472 = vsub.s32 %v1469, %v1471
    %v1473 = vrot.slane %v1465, %v1472
    %v1475 = vunpack.c.l.s4 1966171168
    %v1476 = vunpack.c.0.s8 %v1475
    %v1477 = vlaneseq
    %v1478 = vshrl.u32 %v1477, 7
    %v1479 = vsub.s32 %v1476, %v1478
    %v1480 = vrot.slane %v1466, %v1479
    %v1481 = vlaneseq
    %v1482 = vshrl.u32 %v1481, 7
    %v1483 = vsub.s32 0, %v1482
    %v1484 = vrot.slane %v1473, %v1483
    %v1485 = vlaneseq
    %v1486 = vshrl.u32 %v1485, 7
    %v1487 = vsub.s32 0, %v1486
    %v1488 = vrot.slane %v1480, %v1487
    %1489 = vrot.lane.b32.xlu0 %v1484, 32
    %v1490 = vpop.permute.xlu0 %1489
    %1491 = vrot.lane.b32.xlu0 %v1488, 32
    %v1492 = vpop.permute.xlu0 %1491
    %1495 = vst.msk [vmem:[#allocation3 + $0x2] sm:$0x1] %vm1251, %v1490
    %1496 = vst.msk [vmem:[#allocation3 + $0xa] sm:$0x1] %vm1251, %v1492
    %1497 = vst.msk [vmem:[#allocation3 + $0x5] sm:$0x1] %vm1254, %v1490
    %1498 = vst.msk [vmem:[#allocation3 + $0xd] sm:$0x1] %vm1254, %v1492
    %v1499 = vpack.c.bf16 %v1456, %v1456
    %v1501 = vrot.slane %v1499, 2
    %1502 = vrot.lane.b32.xlu0 %v1501, 32
    %v1503 = vpop.permute.xlu0 %1502
    %v1505 = vsel %vm185, %v1503, 0
    %1507 = vmatprep.subr.bf16.mxu0 0
    %1508 = vmatpush1.bf16.msra.mxu0 0
    %1509 = vmatprep.subr.bf16.mxu0 0
    %1510 = vmatpush1.bf16.msra.mxu0 0
    %1511 = vmatprep.subr.bf16.mxu0 0
    %1512 = vmatpush1.bf16.msra.mxu0 0
    %1513 = vmatprep.subr.bf16.mxu0 0
    %1514 = vmatpush1.bf16.msra.mxu0 0
    %1515 = vmatprep.subr.bf16.mxu0 0
    %1516 = vmatpush1.bf16.msra.mxu0 0
    %1517 = vmatprep.subr.bf16.mxu0 0
    %1518 = vmatpush1.bf16.msra.mxu0 0
    %1519 = vmatprep.subr.bf16.mxu0 0
    %1520 = vmatpush1.bf16.msra.mxu0 %v1145
    %1521 = vmatprep.subr.bf16.mxu0 0
    %1522 = vmatpush1.bf16.msra.mxu0 %v1144
    %1523 = vmatprep.subr.bf16.mxu0 0
    %1524 = vmatpush2.bf16.msra.mxu0 0
    %1525 = vmatprep.subr.bf16.mxu0 0
    %1526 = vmatpush2.bf16.msra.mxu0 0
    %1527 = vmatprep.subr.bf16.mxu0 0
    %1528 = vmatpush2.bf16.msra.mxu0 0
    %1529 = vmatprep.subr.bf16.mxu0 0
    %1530 = vmatpush2.bf16.msra.mxu0 0
    %1531 = vmatprep.subr.bf16.mxu0 0
    %1532 = vmatpush2.bf16.msra.mxu0 0
    %1533 = vmatprep.subr.bf16.mxu0 0
    %1534 = vmatpush2.bf16.msra.mxu0 0
    %1535 = vmatprep.subr.bf16.mxu0 0
    %1536 = vmatpush2.bf16.msra.mxu0 0
    %1537 = vmatprep.subr.bf16.mxu0 0
    %1538 = vmatpush2.bf16.msra.mxu0 0
    %1539 = vmatprep.mubr.bf16.mxu0 0
    %1540 = vmatmul.mubr.bf16.gmra.mxu0 %v1505
    %v1541 = vpop.f32.mrf.mxu0
    %v1542 = vadd.f32 0.0, %v1541
    %v1543 = vpop.f32.mrf.mxu0
    %v1544 = vpop.f32.mrf.mxu0
    %v1545 = vpop.f32.mrf.mxu0
    %1546 = vdwg.mxu0
    %v1548 = vrot.slane %v1542, 2
    %v1550 = vadd.f32 %v1134, %v1548
    %v1551 = vxor.u32 %v1550, 2147483648
    %v1552 = vmul.f32 %v1551, 1.442695
    %v1553 = vpow.pop %v1552
    %v1554 = vadd.f32 %v1553, 1.0
    %v1555 = vrcp.pop %v1554
    %v1556 = vmul.f32 1.0, %v1555
    %v1557 = vtanh.pop %v1550
    %v1559 = vrot.slane %v1450, 6
    %v1561 = vmul.f32 %v1556, %v1559
    %1563 = vrot.lane.b32.xlu0 %v1557, 64
    %v1564 = vpop.permute.xlu0 %1563
    %v1566 = vmul.f32 %v1556, %v1564
    %1568 = vrot.lane.b32.xlu0 %v1566, 32
    %v1569 = vpop.permute.xlu0 %1568
    %v1571 = vadd.f32 %v1561, %v1569
    %v1572 = vtanh.pop %v1571
    %1574 = vrot.lane.b32.xlu0 %v1572, 64
    %v1575 = vpop.permute.xlu0 %1574
    %v1577 = vmul.f32 %v1556, %v1575
    %v1579 = vcombine.high %v1577, %v1577
    %v1581 = vunpack.c.l.s4 1966171168
    %v1582 = vunpack.c.0.s8 %v1581
    %v1583 = vlaneseq
    %v1584 = vshrl.u32 %v1583, 7
    %v1585 = vsub.s32 %v1582, %v1584
    %v1586 = vrot.slane %v1579, %v1585
    %v1587 = vcombine.high %v1586, %v1586
    %v1589 = vunpack.c.l.s4 1966171168
    %v1590 = vunpack.c.0.s8 %v1589
    %v1591 = vlaneseq
    %v1592 = vshrl.u32 %v1591, 7
    %v1593 = vsub.s32 %v1590, %v1592
    %v1594 = vrot.slane %v1586, %v1593
    %v1596 = vunpack.c.l.s4 1966171168
    %v1597 = vunpack.c.0.s8 %v1596
    %v1598 = vlaneseq
    %v1599 = vshrl.u32 %v1598, 7
    %v1600 = vsub.s32 %v1597, %v1599
    %v1601 = vrot.slane %v1587, %v1600
    %v1602 = vcombine.high %v1594, %v1594
    %v1603 = vcombine.high %v1601, %v1601
    %v1604 = vlaneseq
    %v1605 = vshrl.u32 %v1604, 7
    %v1606 = vsub.s32 0, %v1605
    %v1607 = vrot.slane %v1602, %v1606
    %v1608 = vlaneseq
    %v1609 = vshrl.u32 %v1608, 7
    %v1610 = vsub.s32 0, %v1609
    %v1611 = vrot.slane %v1603, %v1610
    %1612 = vrot.lane.b32.xlu0 %v1607, 32
    %v1613 = vpop.permute.xlu0 %1612
    %1614 = vrot.lane.b32.xlu0 %v1611, 32
    %v1615 = vpop.permute.xlu0 %1614
    %1618 = vst.msk [vmem:[#allocation3 + $0x3] sm:$0x1] %vm1251, %v1613
    %1619 = vst.msk [vmem:[#allocation3 + $0xb] sm:$0x1] %vm1251, %v1615
    %1620 = vst.msk [vmem:[#allocation3 + $0x4] sm:$0x1] %vm1254, %v1613
    %1621 = vst.msk [vmem:[#allocation3 + $0xc] sm:$0x1] %vm1254, %v1615
    %v1622 = vpack.c.bf16 %v1577, %v1577
    %v1624 = vrot.slane %v1622, 3
    %1625 = vrot.lane.b32.xlu0 %v1624, 32
    %v1626 = vpop.permute.xlu0 %1625
    %v1628 = vsel %vm185, %v1626, 0
    %1630 = vmatprep.subr.bf16.mxu0 0
    %1631 = vmatpush1.bf16.msra.mxu0 0
    %1632 = vmatprep.subr.bf16.mxu0 0
    %1633 = vmatpush1.bf16.msra.mxu0 0
    %1634 = vmatprep.subr.bf16.mxu0 0
    %1635 = vmatpush1.bf16.msra.mxu0 0
    %1636 = vmatprep.subr.bf16.mxu0 0
    %1637 = vmatpush1.bf16.msra.mxu0 0
    %1638 = vmatprep.subr.bf16.mxu0 0
    %1639 = vmatpush1.bf16.msra.mxu0 0
    %1640 = vmatprep.subr.bf16.mxu0 0
    %1641 = vmatpush1.bf16.msra.mxu0 0
    %1642 = vmatprep.subr.bf16.mxu0 0
    %1643 = vmatpush1.bf16.msra.mxu0 %v1145
    %1644 = vmatprep.subr.bf16.mxu0 0
    %1645 = vmatpush1.bf16.msra.mxu0 %v1144
    %1646 = vmatprep.subr.bf16.mxu0 0
    %1647 = vmatpush2.bf16.msra.mxu0 0
    %1648 = vmatprep.subr.bf16.mxu0 0
    %1649 = vmatpush2.bf16.msra.mxu0 0
    %1650 = vmatprep.subr.bf16.mxu0 0
    %1651 = vmatpush2.bf16.msra.mxu0 0
    %1652 = vmatprep.subr.bf16.mxu0 0
    %1653 = vmatpush2.bf16.msra.mxu0 0
    %1654 = vmatprep.subr.bf16.mxu0 0
    %1655 = vmatpush2.bf16.msra.mxu0 0
    %1656 = vmatprep.subr.bf16.mxu0 0
    %1657 = vmatpush2.bf16.msra.mxu0 0
    %1658 = vmatprep.subr.bf16.mxu0 0
    %1659 = vmatpush2.bf16.msra.mxu0 0
    %1660 = vmatprep.subr.bf16.mxu0 0
    %1661 = vmatpush2.bf16.msra.mxu0 0
    %1662 = vmatprep.mubr.bf16.mxu0 0
    %1663 = vmatmul.mubr.bf16.gmra.mxu0 %v1628
    %v1664 = vpop.f32.mrf.mxu0
    %v1665 = vadd.f32 0.0, %v1664
    %v1666 = vpop.f32.mrf.mxu0
    %v1667 = vpop.f32.mrf.mxu0
    %v1668 = vpop.f32.mrf.mxu0
    %1669 = vdwg.mxu0
    %v1670 = vadd.f32 %v1137, %v1665
    %v1671 = vxor.u32 %v1670, 2147483648
    %v1672 = vmul.f32 %v1671, 1.442695
    %v1673 = vpow.pop %v1672
    %v1674 = vadd.f32 %v1673, 1.0
    %v1675 = vrcp.pop %v1674
    %v1676 = vmul.f32 1.0, %v1675
    %v1677 = vtanh.pop %v1670
    %v1679 = vrot.slane %v1571, 6
    %v1681 = vmul.f32 %v1676, %v1679
    %1683 = vrot.lane.b32.xlu0 %v1677, 64
    %v1684 = vpop.permute.xlu0 %1683
    %v1686 = vmul.f32 %v1676, %v1684
    %1688 = vrot.lane.b32.xlu0 %v1686, 32
    %v1689 = vpop.permute.xlu0 %1688
    %v1691 = vadd.f32 %v1681, %v1689
    %v1692 = vtanh.pop %v1691
    %1694 = vrot.lane.b32.xlu0 %v1692, 64
    %v1695 = vpop.permute.xlu0 %1694
    %v1697 = vmul.f32 %v1676, %v1695
    %v1700 = vunpack.c.l.s4 1966171168
    %v1701 = vunpack.c.0.s8 %v1700
    %v1702 = vlaneseq
    %v1703 = vshrl.u32 %v1702, 7
    %v1704 = vsub.s32 %v1701, %v1703
    %v1705 = vrot.slane %v1697, %v1704
    %v1706 = vcombine.high %v1705, %v1705
    %v1708 = vunpack.c.l.s4 1966171168
    %v1709 = vunpack.c.0.s8 %v1708
    %v1710 = vlaneseq
    %v1711 = vshrl.u32 %v1710, 7
    %v1712 = vsub.s32 %v1709, %v1711
    %v1713 = vrot.slane %v1705, %v1712
    %v1715 = vunpack.c.l.s4 1966171168
    %v1716 = vunpack.c.0.s8 %v1715
    %v1717 = vlaneseq
    %v1718 = vshrl.u32 %v1717, 7
    %v1719 = vsub.s32 %v1716, %v1718
    %v1720 = vrot.slane %v1706, %v1719
    %v1721 = vlaneseq
    %v1722 = vshrl.u32 %v1721, 7
    %v1723 = vsub.s32 0, %v1722
    %v1724 = vrot.slane %v1713, %v1723
    %v1725 = vlaneseq
    %v1726 = vshrl.u32 %v1725, 7
    %v1727 = vsub.s32 0, %v1726
    %v1728 = vrot.slane %v1720, %v1727
    %1729 = vrot.lane.b32.xlu0 %v1724, 32
    %v1730 = vpop.permute.xlu0 %1729
    %1731 = vrot.lane.b32.xlu0 %v1728, 32
    %v1732 = vpop.permute.xlu0 %1731
    %1735 = vst.msk [vmem:[#allocation3 + $0x4] sm:$0x1] %vm1251, %v1730
    %1736 = vst.msk [vmem:[#allocation3 + $0xc] sm:$0x1] %vm1251, %v1732
    %1737 = vst.msk [vmem:[#allocation3 + $0x3] sm:$0x1] %vm1254, %v1730
    %1738 = vst.msk [vmem:[#allocation3 + $0xb] sm:$0x1] %vm1254, %v1732
    %v1739 = vpack.c.bf16 %v1697, %v1697
    %1741 = vrot.lane.b32.xlu0 %v1739, 32
    %v1742 = vpop.permute.xlu0 %1741
    %v1744 = vsel %vm185, %v1742, 0
    %1746 = vmatprep.subr.bf16.mxu0 0
    %1747 = vmatpush1.bf16.msra.mxu0 0
    %1748 = vmatprep.subr.bf16.mxu0 0
    %1749 = vmatpush1.bf16.msra.mxu0 0
    %1750 = vmatprep.subr.bf16.mxu0 0
    %1751 = vmatpush1.bf16.msra.mxu0 0
    %1752 = vmatprep.subr.bf16.mxu0 0
    %1753 = vmatpush1.bf16.msra.mxu0 0
    %1754 = vmatprep.subr.bf16.mxu0 0
    %1755 = vmatpush1.bf16.msra.mxu0 0
    %1756 = vmatprep.subr.bf16.mxu0 0
    %1757 = vmatpush1.bf16.msra.mxu0 0
    %1758 = vmatprep.subr.bf16.mxu0 0
    %1759 = vmatpush1.bf16.msra.mxu0 %v1145
    %1760 = vmatprep.subr.bf16.mxu0 0
    %1761 = vmatpush1.bf16.msra.mxu0 %v1144
    %1762 = vmatprep.subr.bf16.mxu0 0
    %1763 = vmatpush2.bf16.msra.mxu0 0
    %1764 = vmatprep.subr.bf16.mxu0 0
    %1765 = vmatpush2.bf16.msra.mxu0 0
    %1766 = vmatprep.subr.bf16.mxu0 0
    %1767 = vmatpush2.bf16.msra.mxu0 0
    %1768 = vmatprep.subr.bf16.mxu0 0
    %1769 = vmatpush2.bf16.msra.mxu0 0
    %1770 = vmatprep.subr.bf16.mxu0 0
    %1771 = vmatpush2.bf16.msra.mxu0 0
    %1772 = vmatprep.subr.bf16.mxu0 0
    %1773 = vmatpush2.bf16.msra.mxu0 0
    %1774 = vmatprep.subr.bf16.mxu0 0
    %1775 = vmatpush2.bf16.msra.mxu0 0
    %1776 = vmatprep.subr.bf16.mxu0 0
    %1777 = vmatpush2.bf16.msra.mxu0 0
    %1778 = vmatprep.mubr.bf16.mxu0 0
    %1779 = vmatmul.mubr.bf16.gmra.mxu0 %v1744
    %v1780 = vpop.f32.mrf.mxu0
    %v1781 = vadd.f32 0.0, %v1780
    %v1782 = vpop.f32.mrf.mxu0
    %v1783 = vpop.f32.mrf.mxu0
    %v1784 = vpop.f32.mrf.mxu0
    %1785 = vdwg.mxu0
    %v1787 = vrot.slane %v1781, 6
    %v1789 = vadd.f32 %v1137, %v1787
    %v1790 = vxor.u32 %v1789, 2147483648
    %v1791 = vmul.f32 %v1790, 1.442695
    %v1792 = vpow.pop %v1791
    %v1793 = vadd.f32 %v1792, 1.0
    %v1794 = vrcp.pop %v1793
    %v1795 = vmul.f32 1.0, %v1794
    %v1796 = vtanh.pop %v1789
    %v1798 = vrot.slane %v1691, 6
    %v1800 = vmul.f32 %v1795, %v1798
    %1802 = vrot.lane.b32.xlu0 %v1796, 64
    %v1803 = vpop.permute.xlu0 %1802
    %v1805 = vmul.f32 %v1795, %v1803
    %1807 = vrot.lane.b32.xlu0 %v1805, 32
    %v1808 = vpop.permute.xlu0 %1807
    %v1810 = vadd.f32 %v1800, %v1808
    %v1811 = vtanh.pop %v1810
    %1813 = vrot.lane.b32.xlu0 %v1811, 64
    %v1814 = vpop.permute.xlu0 %1813
    %v1816 = vmul.f32 %v1795, %v1814
    %v1819 = vunpack.c.l.s4 1966171168
    %v1820 = vunpack.c.0.s8 %v1819
    %v1821 = vlaneseq
    %v1822 = vshrl.u32 %v1821, 7
    %v1823 = vsub.s32 %v1820, %v1822
    %v1824 = vrot.slane %v1816, %v1823
    %v1825 = vcombine.high %v1824, %v1824
    %v1827 = vunpack.c.l.s4 1966171168
    %v1828 = vunpack.c.0.s8 %v1827
    %v1829 = vlaneseq
    %v1830 = vshrl.u32 %v1829, 7
    %v1831 = vsub.s32 %v1828, %v1830
    %v1832 = vrot.slane %v1824, %v1831
    %v1834 = vunpack.c.l.s4 1966171168
    %v1835 = vunpack.c.0.s8 %v1834
    %v1836 = vlaneseq
    %v1837 = vshrl.u32 %v1836, 7
    %v1838 = vsub.s32 %v1835, %v1837
    %v1839 = vrot.slane %v1825, %v1838
    %v1840 = vcombine.high %v1832, %v1832
    %v1841 = vcombine.high %v1839, %v1839
    %v1842 = vlaneseq
    %v1843 = vshrl.u32 %v1842, 7
    %v1844 = vsub.s32 0, %v1843
    %v1845 = vrot.slane %v1840, %v1844
    %v1846 = vlaneseq
    %v1847 = vshrl.u32 %v1846, 7
    %v1848 = vsub.s32 0, %v1847
    %v1849 = vrot.slane %v1841, %v1848
    %1850 = vrot.lane.b32.xlu0 %v1845, 32
    %v1851 = vpop.permute.xlu0 %1850
    %1852 = vrot.lane.b32.xlu0 %v1849, 32
    %v1853 = vpop.permute.xlu0 %1852
    %1856 = vst.msk [vmem:[#allocation3 + $0x5] sm:$0x1] %vm1251, %v1851
    %1857 = vst.msk [vmem:[#allocation3 + $0xd] sm:$0x1] %vm1251, %v1853
    %1858 = vst.msk [vmem:[#allocation3 + $0x2] sm:$0x1] %vm1254, %v1851
    %1859 = vst.msk [vmem:[#allocation3 + $0xa] sm:$0x1] %vm1254, %v1853
    %v1860 = vpack.c.bf16 %v1816, %v1816
    %v1862 = vrot.slane %v1860, 1
    %1863 = vrot.lane.b32.xlu0 %v1862, 32
    %v1864 = vpop.permute.xlu0 %1863
    %v1866 = vsel %vm185, %v1864, 0
    %1868 = vmatprep.subr.bf16.mxu0 0
    %1869 = vmatpush1.bf16.msra.mxu0 0
    %1870 = vmatprep.subr.bf16.mxu0 0
    %1871 = vmatpush1.bf16.msra.mxu0 0
    %1872 = vmatprep.subr.bf16.mxu0 0
    %1873 = vmatpush1.bf16.msra.mxu0 0
    %1874 = vmatprep.subr.bf16.mxu0 0
    %1875 = vmatpush1.bf16.msra.mxu0 0
    %1876 = vmatprep.subr.bf16.mxu0 0
    %1877 = vmatpush1.bf16.msra.mxu0 0
    %1878 = vmatprep.subr.bf16.mxu0 0
    %1879 = vmatpush1.bf16.msra.mxu0 0
    %1880 = vmatprep.subr.bf16.mxu0 0
    %1881 = vmatpush1.bf16.msra.mxu0 %v1145
    %1882 = vmatprep.subr.bf16.mxu0 0
    %1883 = vmatpush1.bf16.msra.mxu0 %v1144
    %1884 = vmatprep.subr.bf16.mxu0 0
    %1885 = vmatpush2.bf16.msra.mxu0 0
    %1886 = vmatprep.subr.bf16.mxu0 0
    %1887 = vmatpush2.bf16.msra.mxu0 0
    %1888 = vmatprep.subr.bf16.mxu0 0
    %1889 = vmatpush2.bf16.msra.mxu0 0
    %1890 = vmatprep.subr.bf16.mxu0 0
    %1891 = vmatpush2.bf16.msra.mxu0 0
    %1892 = vmatprep.subr.bf16.mxu0 0
    %1893 = vmatpush2.bf16.msra.mxu0 0
    %1894 = vmatprep.subr.bf16.mxu0 0
    %1895 = vmatpush2.bf16.msra.mxu0 0
    %1896 = vmatprep.subr.bf16.mxu0 0
    %1897 = vmatpush2.bf16.msra.mxu0 0
    %1898 = vmatprep.subr.bf16.mxu0 0
    %1899 = vmatpush2.bf16.msra.mxu0 0
    %1900 = vmatprep.mubr.bf16.mxu0 0
    %1901 = vmatmul.mubr.bf16.gmra.mxu0 %v1866
    %v1902 = vpop.f32.mrf.mxu0
    %v1903 = vadd.f32 0.0, %v1902
    %v1904 = vpop.f32.mrf.mxu0
    %v1905 = vpop.f32.mrf.mxu0
    %v1906 = vpop.f32.mrf.mxu0
    %1907 = vdwg.mxu0
    %v1909 = vrot.slane %v1903, 4
    %v1911 = vadd.f32 %v1137, %v1909
    %v1912 = vxor.u32 %v1911, 2147483648
    %v1913 = vmul.f32 %v1912, 1.442695
    %v1914 = vpow.pop %v1913
    %v1915 = vadd.f32 %v1914, 1.0
    %v1916 = vrcp.pop %v1915
    %v1917 = vmul.f32 1.0, %v1916
    %v1918 = vtanh.pop %v1911
    %v1920 = vrot.slane %v1810, 6
    %v1922 = vmul.f32 %v1917, %v1920
    %1924 = vrot.lane.b32.xlu0 %v1918, 64
    %v1925 = vpop.permute.xlu0 %1924
    %v1927 = vmul.f32 %v1917, %v1925
    %1929 = vrot.lane.b32.xlu0 %v1927, 32
    %v1930 = vpop.permute.xlu0 %1929
    %v1932 = vadd.f32 %v1922, %v1930
    %v1933 = vtanh.pop %v1932
    %1935 = vrot.lane.b32.xlu0 %v1933, 64
    %v1936 = vpop.permute.xlu0 %1935
    %v1938 = vmul.f32 %v1917, %v1936
    %v1940 = vcombine.high %v1938, %v1938
    %v1942 = vunpack.c.l.s4 1966171168
    %v1943 = vunpack.c.0.s8 %v1942
    %v1944 = vlaneseq
    %v1945 = vshrl.u32 %v1944, 7
    %v1946 = vsub.s32 %v1943, %v1945
    %v1947 = vrot.slane %v1940, %v1946
    %v1948 = vcombine.high %v1947, %v1947
    %v1950 = vunpack.c.l.s4 1966171168
    %v1951 = vunpack.c.0.s8 %v1950
    %v1952 = vlaneseq
    %v1953 = vshrl.u32 %v1952, 7
    %v1954 = vsub.s32 %v1951, %v1953
    %v1955 = vrot.slane %v1947, %v1954
    %v1957 = vunpack.c.l.s4 1966171168
    %v1958 = vunpack.c.0.s8 %v1957
    %v1959 = vlaneseq
    %v1960 = vshrl.u32 %v1959, 7
    %v1961 = vsub.s32 %v1958, %v1960
    %v1962 = vrot.slane %v1948, %v1961
    %v1963 = vlaneseq
    %v1964 = vshrl.u32 %v1963, 7
    %v1965 = vsub.s32 0, %v1964
    %v1966 = vrot.slane %v1955, %v1965
    %v1967 = vlaneseq
    %v1968 = vshrl.u32 %v1967, 7
    %v1969 = vsub.s32 0, %v1968
    %v1970 = vrot.slane %v1962, %v1969
    %1971 = vrot.lane.b32.xlu0 %v1966, 32
    %v1972 = vpop.permute.xlu0 %1971
    %1973 = vrot.lane.b32.xlu0 %v1970, 32
    %v1974 = vpop.permute.xlu0 %1973
    %1977 = vst.msk [vmem:[#allocation3 + $0x6] sm:$0x1] %vm1251, %v1972
    %1978 = vst.msk [vmem:[#allocation3 + $0xe] sm:$0x1] %vm1251, %v1974
    %1979 = vst.msk [vmem:[#allocation3 + $0x1] sm:$0x1] %vm1254, %v1972
    %1980 = vst.msk [vmem:[#allocation3 + $0x9] sm:$0x1] %vm1254, %v1974
    %v1981 = vpack.c.bf16 %v1938, %v1938
    %v1983 = vrot.slane %v1981, 2
    %1984 = vrot.lane.b32.xlu0 %v1983, 32
    %v1985 = vpop.permute.xlu0 %1984
    %v1987 = vsel %vm185, %v1985, 0
    %1989 = vmatprep.subr.bf16.mxu0 0
    %1990 = vmatpush1.bf16.msra.mxu0 0
    %1991 = vmatprep.subr.bf16.mxu0 0
    %1992 = vmatpush1.bf16.msra.mxu0 0
    %1993 = vmatprep.subr.bf16.mxu0 0
    %1994 = vmatpush1.bf16.msra.mxu0 0
    %1995 = vmatprep.subr.bf16.mxu0 0
    %1996 = vmatpush1.bf16.msra.mxu0 0
    %1997 = vmatprep.subr.bf16.mxu0 0
    %1998 = vmatpush1.bf16.msra.mxu0 0
    %1999 = vmatprep.subr.bf16.mxu0 0
    %2000 = vmatpush1.bf16.msra.mxu0 0
    %2001 = vmatprep.subr.bf16.mxu0 0
    %2002 = vmatpush1.bf16.msra.mxu0 %v1145
    %2003 = vmatprep.subr.bf16.mxu0 0
    %2004 = vmatpush1.bf16.msra.mxu0 %v1144
    %2005 = vmatprep.subr.bf16.mxu0 0
    %2006 = vmatpush2.bf16.msra.mxu0 0
    %2007 = vmatprep.subr.bf16.mxu0 0
    %2008 = vmatpush2.bf16.msra.mxu0 0
    %2009 = vmatprep.subr.bf16.mxu0 0
    %2010 = vmatpush2.bf16.msra.mxu0 0
    %2011 = vmatprep.subr.bf16.mxu0 0
    %2012 = vmatpush2.bf16.msra.mxu0 0
    %2013 = vmatprep.subr.bf16.mxu0 0
    %2014 = vmatpush2.bf16.msra.mxu0 0
    %2015 = vmatprep.subr.bf16.mxu0 0
    %2016 = vmatpush2.bf16.msra.mxu0 0
    %2017 = vmatprep.subr.bf16.mxu0 0
    %2018 = vmatpush2.bf16.msra.mxu0 0
    %2019 = vmatprep.subr.bf16.mxu0 0
    %2020 = vmatpush2.bf16.msra.mxu0 0
    %2021 = vmatprep.mubr.bf16.mxu0 0
    %2022 = vmatmul.mubr.bf16.gmra.mxu0 %v1987
    %v2023 = vpop.f32.mrf.mxu0
    %v2024 = vadd.f32 0.0, %v2023
    %v2025 = vpop.f32.mrf.mxu0
    %v2026 = vpop.f32.mrf.mxu0
    %v2027 = vpop.f32.mrf.mxu0
    %2028 = vdwg.mxu0
    %v2030 = vrot.slane %v2024, 2
    %v2032 = vadd.f32 %v1137, %v2030
    %v2033 = vxor.u32 %v2032, 2147483648
    %v2034 = vmul.f32 %v2033, 1.442695
    %v2035 = vpow.pop %v2034
    %v2036 = vadd.f32 %v2035, 1.0
    %v2037 = vrcp.pop %v2036
    %v2038 = vmul.f32 1.0, %v2037
    %v2039 = vtanh.pop %v2032
    %v2041 = vrot.slane %v1932, 6
    %v2043 = vmul.f32 %v2038, %v2041
    %2045 = vrot.lane.b32.xlu0 %v2039, 64
    %v2046 = vpop.permute.xlu0 %2045
    %v2048 = vmul.f32 %v2038, %v2046
    %2050 = vrot.lane.b32.xlu0 %v2048, 32
    %v2051 = vpop.permute.xlu0 %2050
    %v2053 = vadd.f32 %v2043, %v2051
    %v2054 = vtanh.pop %v2053
    %2056 = vrot.lane.b32.xlu0 %v2054, 64
    %v2057 = vpop.permute.xlu0 %2056
    %v2059 = vmul.f32 %v2038, %v2057
    %v2061 = vcombine.high %v2059, %v2059
    %v2063 = vunpack.c.l.s4 1966171168
    %v2064 = vunpack.c.0.s8 %v2063
    %v2065 = vlaneseq
    %v2066 = vshrl.u32 %v2065, 7
    %v2067 = vsub.s32 %v2064, %v2066
    %v2068 = vrot.slane %v2061, %v2067
    %v2069 = vcombine.high %v2068, %v2068
    %v2071 = vunpack.c.l.s4 1966171168
    %v2072 = vunpack.c.0.s8 %v2071
    %v2073 = vlaneseq
    %v2074 = vshrl.u32 %v2073, 7
    %v2075 = vsub.s32 %v2072, %v2074
    %v2076 = vrot.slane %v2068, %v2075
    %v2078 = vunpack.c.l.s4 1966171168
    %v2079 = vunpack.c.0.s8 %v2078
    %v2080 = vlaneseq
    %v2081 = vshrl.u32 %v2080, 7
    %v2082 = vsub.s32 %v2079, %v2081
    %v2083 = vrot.slane %v2069, %v2082
    %v2084 = vcombine.high %v2076, %v2076
    %v2085 = vcombine.high %v2083, %v2083
    %v2086 = vlaneseq
    %v2087 = vshrl.u32 %v2086, 7
    %v2088 = vsub.s32 0, %v2087
    %v2089 = vrot.slane %v2084, %v2088
    %v2090 = vlaneseq
    %v2091 = vshrl.u32 %v2090, 7
    %v2092 = vsub.s32 0, %v2091
    %v2093 = vrot.slane %v2085, %v2092
    %2094 = vrot.lane.b32.xlu0 %v2089, 32
    %v2095 = vpop.permute.xlu0 %2094
    %2096 = vrot.lane.b32.xlu0 %v2093, 32
    %v2097 = vpop.permute.xlu0 %2096
    %2100 = vst.msk [vmem:[#allocation3 + $0x7] sm:$0x1] %vm1251, %v2095
    %2101 = vst.msk [vmem:[#allocation3 + $0xf] sm:$0x1] %vm1251, %v2097
    %2102 = vst.msk [vmem:[#allocation3] sm:$0x1] %vm1254, %v2095
    %2103 = vst.msk [vmem:[#allocation3 + $0x8] sm:$0x1] %vm1254, %v2097
    %v2104 = vld [vmem:[#allocation3] sm:$0xff]
    %v2105 = vld [vmem:[#allocation3 + $0x8] sm:$0xff]
    %v2106 = vld [vmem:[%s43] sm:$0xff]
    %v2107 = vld [vmem:[%s43 + $0x8] sm:$0xff]
    %v2108 = vld [vmem:[%s51] sm:$0xff]
    %v2109 = vld [vmem:[%s51 + $0x8] sm:$0xff]
    %v2110 = vld [vmem:[%s51 + $0x10] sm:$0xff]
    %v2111 = vld [vmem:[%s51 + $0x18] sm:$0xff]
    %v2112 = vpack.c.bf16 %v2105, %v2104
    %v2113 = vpack.c.bf16 %v2109, %v2108
    %v2114 = vpack.c.bf16 %v2111, %v2110
    %v2116 = vsel %vm185, %v2112, 0
    %2118 = vmatprep.subr.bf16.mxu0 0
    %2119 = vmatpush1.bf16.msra.mxu0 0
    %2120 = vmatprep.subr.bf16.mxu0 0
    %2121 = vmatpush1.bf16.msra.mxu0 0
    %2122 = vmatprep.subr.bf16.mxu0 0
    %2123 = vmatpush1.bf16.msra.mxu0 0
    %2124 = vmatprep.subr.bf16.mxu0 0
    %2125 = vmatpush1.bf16.msra.mxu0 0
    %2126 = vmatprep.subr.bf16.mxu0 0
    %2127 = vmatpush1.bf16.msra.mxu0 0
    %2128 = vmatprep.subr.bf16.mxu0 0
    %2129 = vmatpush1.bf16.msra.mxu0 0
    %2130 = vmatprep.subr.bf16.mxu0 0
    %2131 = vmatpush1.bf16.msra.mxu0 %v2114
    %2132 = vmatprep.subr.bf16.mxu0 0
    %2133 = vmatpush1.bf16.msra.mxu0 %v2113
    %2134 = vmatprep.subr.bf16.mxu0 0
    %2135 = vmatpush2.bf16.msra.mxu0 0
    %2136 = vmatprep.subr.bf16.mxu0 0
    %2137 = vmatpush2.bf16.msra.mxu0 0
    %2138 = vmatprep.subr.bf16.mxu0 0
    %2139 = vmatpush2.bf16.msra.mxu0 0
    %2140 = vmatprep.subr.bf16.mxu0 0
    %2141 = vmatpush2.bf16.msra.mxu0 0
    %2142 = vmatprep.subr.bf16.mxu0 0
    %2143 = vmatpush2.bf16.msra.mxu0 0
    %2144 = vmatprep.subr.bf16.mxu0 0
    %2145 = vmatpush2.bf16.msra.mxu0 0
    %2146 = vmatprep.subr.bf16.mxu0 0
    %2147 = vmatpush2.bf16.msra.mxu0 0
    %2148 = vmatprep.subr.bf16.mxu0 0
    %2149 = vmatpush2.bf16.msra.mxu0 0
    %2150 = vmatprep.mubr.bf16.mxu0 0
    %2151 = vmatmul.mubr.bf16.gmra.mxu0 %v2116
    %v2152 = vpop.f32.mrf.mxu0
    %v2153 = vadd.f32 0.0, %v2152
    %v2154 = vpop.f32.mrf.mxu0
    %v2155 = vpop.f32.mrf.mxu0
    %v2156 = vadd.f32 0.0, %v2155
    %v2157 = vpop.f32.mrf.mxu0
    %2158 = vdwg.mxu0
    %v2159 = vpack.c.bf16 %v2107, %v2106
    %v2160 = vpack.c.bf16 %v2156, %v2153
    %v2161 = vld [vmem:[%s53] sm:$0x1]
    %v2163 = vlaneseq
    %v2164 = vshrl.u32 %v2163, 7
    %v2165 = vsub.s32 0, %v2164
    %v2166 = vrot.slane %v2161, %v2165
    %v2169 = vsel %vm273, %v2159, 0
    %2171 = vmatprep.subr.bf16.mxu0 0
    %2172 = vmatpush1.bf16.msra.mxu0 0
    %2173 = vmatprep.subr.bf16.mxu0 0
    %2174 = vmatpush1.bf16.msra.mxu0 0
    %2175 = vmatprep.subr.bf16.mxu0 0
    %2176 = vmatpush1.bf16.msra.mxu0 0
    %2177 = vmatprep.subr.bf16.mxu0 0
    %2178 = vmatpush1.bf16.msra.mxu0 0
    %2179 = vmatprep.subr.bf16.mxu0 0
    %2180 = vmatpush1.bf16.msra.mxu0 0
    %2181 = vmatprep.subr.bf16.mxu0 0
    %2182 = vmatpush1.bf16.msra.mxu0 0
    %2183 = vmatprep.subr.bf16.mxu0 0
    %2184 = vmatpush1.bf16.msra.mxu0 0
    %2185 = vmatprep.subr.bf16.mxu0 0
    %2186 = vmatpush1.bf16.msra.mxu0 %v2160
    %2187 = vmatprep.subr.bf16.mxu0 0
    %2188 = vmatpush2.bf16.msra.mxu0 0
    %2189 = vmatprep.subr.bf16.mxu0 0
    %2190 = vmatpush2.bf16.msra.mxu0 0
    %2191 = vmatprep.subr.bf16.mxu0 0
    %2192 = vmatpush2.bf16.msra.mxu0 0
    %2193 = vmatprep.subr.bf16.mxu0 0
    %2194 = vmatpush2.bf16.msra.mxu0 0
    %2195 = vmatprep.subr.bf16.mxu0 0
    %2196 = vmatpush2.bf16.msra.mxu0 0
    %2197 = vmatprep.subr.bf16.mxu0 0
    %2198 = vmatpush2.bf16.msra.mxu0 0
    %2199 = vmatprep.subr.bf16.mxu0 0
    %2200 = vmatpush2.bf16.msra.mxu0 0
    %2201 = vmatprep.subr.bf16.mxu0 0
    %2202 = vmatpush2.bf16.msra.mxu0 0
    %2203 = vmatprep.mubr.bf16.mxu0 0
    %2204 = vmatmul.mubr.bf16.gmra.mxu0 %v2169
    %v2205 = vpop.f32.mrf.mxu0
    %v2206 = vadd.f32 %v2166, %v2205
    %v2207 = vpop.f32.mrf.mxu0
    %v2208 = vpop.f32.mrf.mxu0
    %v2209 = vadd.f32 %v2166, %v2208
    %v2210 = vpop.f32.mrf.mxu0
    %2211 = vdwg.mxu0
    %v2212 = vmax.f32 %v2206, 0.0
    %v2213 = vmax.f32 %v2209, 0.0
    %v2214 = vld [vmem:[%s45] sm:$0xff]
    %v2215 = vld [vmem:[%s45 + $0x8] sm:$0xff]
    %v2216 = vld [vmem:[%s55] sm:$0xff]
    %v2217 = vld [vmem:[%s55 + $0x8] sm:$0xff]
    %v2218 = vld [vmem:[%s55 + $0x10] sm:$0xff]
    %v2219 = vld [vmem:[%s55 + $0x18] sm:$0xff]
    %v2220 = vpack.c.bf16 %v2213, %v2212
    %v2221 = vpack.c.bf16 %v2217, %v2216
    %v2222 = vpack.c.bf16 %v2219, %v2218
    %v2224 = vsel %vm185, %v2220, 0
    %2226 = vmatprep.subr.bf16.mxu0 0
    %2227 = vmatpush1.bf16.msra.mxu0 0
    %2228 = vmatprep.subr.bf16.mxu0 0
    %2229 = vmatpush1.bf16.msra.mxu0 0
    %2230 = vmatprep.subr.bf16.mxu0 0
    %2231 = vmatpush1.bf16.msra.mxu0 0
    %2232 = vmatprep.subr.bf16.mxu0 0
    %2233 = vmatpush1.bf16.msra.mxu0 0
    %2234 = vmatprep.subr.bf16.mxu0 0
    %2235 = vmatpush1.bf16.msra.mxu0 0
    %2236 = vmatprep.subr.bf16.mxu0 0
    %2237 = vmatpush1.bf16.msra.mxu0 0
    %2238 = vmatprep.subr.bf16.mxu0 0
    %2239 = vmatpush1.bf16.msra.mxu0 %v2222
    %2240 = vmatprep.subr.bf16.mxu0 0
    %2241 = vmatpush1.bf16.msra.mxu0 %v2221
    %2242 = vmatprep.subr.bf16.mxu0 0
    %2243 = vmatpush2.bf16.msra.mxu0 0
    %2244 = vmatprep.subr.bf16.mxu0 0
    %2245 = vmatpush2.bf16.msra.mxu0 0
    %2246 = vmatprep.subr.bf16.mxu0 0
    %2247 = vmatpush2.bf16.msra.mxu0 0
    %2248 = vmatprep.subr.bf16.mxu0 0
    %2249 = vmatpush2.bf16.msra.mxu0 0
    %2250 = vmatprep.subr.bf16.mxu0 0
    %2251 = vmatpush2.bf16.msra.mxu0 0
    %2252 = vmatprep.subr.bf16.mxu0 0
    %2253 = vmatpush2.bf16.msra.mxu0 0
    %2254 = vmatprep.subr.bf16.mxu0 0
    %2255 = vmatpush2.bf16.msra.mxu0 0
    %2256 = vmatprep.subr.bf16.mxu0 0
    %2257 = vmatpush2.bf16.msra.mxu0 0
    %2258 = vmatprep.mubr.bf16.mxu0 0
    %2259 = vmatmul.mubr.bf16.gmra.mxu0 %v2224
    %v2260 = vpop.f32.mrf.mxu0
    %v2261 = vadd.f32 0.0, %v2260
    %v2262 = vpop.f32.mrf.mxu0
    %v2263 = vpop.f32.mrf.mxu0
    %v2264 = vadd.f32 0.0, %v2263
    %v2265 = vpop.f32.mrf.mxu0
    %2266 = vdwg.mxu0
    %v2267 = vpack.c.bf16 %v2215, %v2214
    %v2268 = vpack.c.bf16 %v2264, %v2261
    %v2269 = vld [vmem:[%s57] sm:$0x1]
    %v2271 = vlaneseq
    %v2272 = vshrl.u32 %v2271, 7
    %v2273 = vsub.s32 0, %v2272
    %v2274 = vrot.slane %v2269, %v2273
    %v2277 = vsel %vm273, %v2267, 0
    %2279 = vmatprep.subr.bf16.mxu0 0
    %2280 = vmatpush1.bf16.msra.mxu0 0
    %2281 = vmatprep.subr.bf16.mxu0 0
    %2282 = vmatpush1.bf16.msra.mxu0 0
    %2283 = vmatprep.subr.bf16.mxu0 0
    %2284 = vmatpush1.bf16.msra.mxu0 0
    %2285 = vmatprep.subr.bf16.mxu0 0
    %2286 = vmatpush1.bf16.msra.mxu0 0
    %2287 = vmatprep.subr.bf16.mxu0 0
    %2288 = vmatpush1.bf16.msra.mxu0 0
    %2289 = vmatprep.subr.bf16.mxu0 0
    %2290 = vmatpush1.bf16.msra.mxu0 0
    %2291 = vmatprep.subr.bf16.mxu0 0
    %2292 = vmatpush1.bf16.msra.mxu0 0
    %2293 = vmatprep.subr.bf16.mxu0 0
    %2294 = vmatpush1.bf16.msra.mxu0 %v2268
    %2295 = vmatprep.subr.bf16.mxu0 0
    %2296 = vmatpush2.bf16.msra.mxu0 0
    %2297 = vmatprep.subr.bf16.mxu0 0
    %2298 = vmatpush2.bf16.msra.mxu0 0
    %2299 = vmatprep.subr.bf16.mxu0 0
    %2300 = vmatpush2.bf16.msra.mxu0 0
    %2301 = vmatprep.subr.bf16.mxu0 0
    %2302 = vmatpush2.bf16.msra.mxu0 0
    %2303 = vmatprep.subr.bf16.mxu0 0
    %2304 = vmatpush2.bf16.msra.mxu0 0
    %2305 = vmatprep.subr.bf16.mxu0 0
    %2306 = vmatpush2.bf16.msra.mxu0 0
    %2307 = vmatprep.subr.bf16.mxu0 0
    %2308 = vmatpush2.bf16.msra.mxu0 0
    %2309 = vmatprep.subr.bf16.mxu0 0
    %2310 = vmatpush2.bf16.msra.mxu0 0
    %2311 = vmatprep.mubr.bf16.mxu0 0
    %2312 = vmatmul.mubr.bf16.gmra.mxu0 %v2277
    %v2313 = vpop.f32.mrf.mxu0
    %v2314 = vadd.f32 %v2274, %v2313
    %v2315 = vpop.f32.mrf.mxu0
    %v2316 = vpop.f32.mrf.mxu0
    %v2317 = vadd.f32 %v2274, %v2316
    %v2318 = vpop.f32.mrf.mxu0
    %2319 = vdwg.mxu0
    %v2320 = vmax.f32 %v2314, 0.0
    %v2321 = vmax.f32 %v2317, 0.0
    %v2322 = vld [vmem:[%s47] sm:$0xff]
    %v2323 = vld [vmem:[%s47 + $0x8] sm:$0xff]
    %v2324 = vld [vmem:[%s59] sm:$0xff]
    %v2325 = vld [vmem:[%s59 + $0x8] sm:$0xff]
    %v2326 = vld [vmem:[%s59 + $0x10] sm:$0xff]
    %v2327 = vld [vmem:[%s59 + $0x18] sm:$0xff]
    %v2328 = vpack.c.bf16 %v2325, %v2324
    %v2329 = vpack.c.bf16 %v2327, %v2326
    %2330 = vmatprep.subr.bf16.mxu0 0
    %2331 = vmatpush1.bf16.msra.mxu0 0
    %2332 = vmatprep.subr.bf16.mxu0 0
    %2333 = vmatpush1.bf16.msra.mxu0 0
    %2334 = vmatprep.subr.bf16.mxu0 0
    %2335 = vmatpush1.bf16.msra.mxu0 0
    %2336 = vmatprep.subr.bf16.mxu0 0
    %2337 = vmatpush1.bf16.msra.mxu0 0
    %2338 = vmatprep.subr.bf16.mxu0 0
    %2339 = vmatpush1.bf16.msra.mxu0 0
    %2340 = vmatprep.subr.bf16.mxu0 0
    %2341 = vmatpush1.bf16.msra.mxu0 0
    %2342 = vmatprep.subr.bf16.mxu0 0
    %2343 = vmatpush1.bf16.msra.mxu0 %v2329
    %2344 = vmatprep.subr.bf16.mxu0 0
    %2345 = vmatpush1.bf16.msra.mxu0 %v2328
    %2346 = vmatprep.subr.bf16.mxu0 0
    %2347 = vmatpush2.bf16.msra.mxu0 0
    %2348 = vmatprep.subr.bf16.mxu0 0
    %2349 = vmatpush2.bf16.msra.mxu0 0
    %2350 = vmatprep.subr.bf16.mxu0 0
    %2351 = vmatpush2.bf16.msra.mxu0 0
    %2352 = vmatprep.subr.bf16.mxu0 0
    %2353 = vmatpush2.bf16.msra.mxu0 0
    %2354 = vmatprep.subr.bf16.mxu0 0
    %2355 = vmatpush2.bf16.msra.mxu0 0
    %2356 = vmatprep.subr.bf16.mxu0 0
    %2357 = vmatpush2.bf16.msra.mxu0 0
    %2358 = vmatprep.subr.bf16.mxu0 0
    %2359 = vmatpush2.bf16.msra.mxu0 0
    %2360 = vmatprep.subr.bf16.mxu0 0
    %2361 = vmatpush2.bf16.msra.mxu0 0
    %2362 = vmatprep.mubr.bf16.mxu0 0
    %2363 = vmatmul.mubr.bf16.gmra.mxu0 %v2116
    %v2364 = vpop.f32.mrf.mxu0
    %v2365 = vadd.f32 0.0, %v2364
    %v2366 = vpop.f32.mrf.mxu0
    %v2367 = vpop.f32.mrf.mxu0
    %v2368 = vadd.f32 0.0, %v2367
    %v2369 = vpop.f32.mrf.mxu0
    %2370 = vdwg.mxu0
    %v2371 = vpack.c.bf16 %v2323, %v2322
    %v2372 = vpack.c.bf16 %v2368, %v2365
    %v2373 = vld [vmem:[%s61] sm:$0x1]
    %v2375 = vlaneseq
    %v2376 = vshrl.u32 %v2375, 7
    %v2377 = vsub.s32 0, %v2376
    %v2378 = vrot.slane %v2373, %v2377
    %v2381 = vsel %vm273, %v2371, 0
    %2383 = vmatprep.subr.bf16.mxu0 0
    %2384 = vmatpush1.bf16.msra.mxu0 0
    %2385 = vmatprep.subr.bf16.mxu0 0
    %2386 = vmatpush1.bf16.msra.mxu0 0
    %2387 = vmatprep.subr.bf16.mxu0 0
    %2388 = vmatpush1.bf16.msra.mxu0 0
    %2389 = vmatprep.subr.bf16.mxu0 0
    %2390 = vmatpush1.bf16.msra.mxu0 0
    %2391 = vmatprep.subr.bf16.mxu0 0
    %2392 = vmatpush1.bf16.msra.mxu0 0
    %2393 = vmatprep.subr.bf16.mxu0 0
    %2394 = vmatpush1.bf16.msra.mxu0 0
    %2395 = vmatprep.subr.bf16.mxu0 0
    %2396 = vmatpush1.bf16.msra.mxu0 0
    %2397 = vmatprep.subr.bf16.mxu0 0
    %2398 = vmatpush1.bf16.msra.mxu0 %v2372
    %2399 = vmatprep.subr.bf16.mxu0 0
    %2400 = vmatpush2.bf16.msra.mxu0 0
    %2401 = vmatprep.subr.bf16.mxu0 0
    %2402 = vmatpush2.bf16.msra.mxu0 0
    %2403 = vmatprep.subr.bf16.mxu0 0
    %2404 = vmatpush2.bf16.msra.mxu0 0
    %2405 = vmatprep.subr.bf16.mxu0 0
    %2406 = vmatpush2.bf16.msra.mxu0 0
    %2407 = vmatprep.subr.bf16.mxu0 0
    %2408 = vmatpush2.bf16.msra.mxu0 0
    %2409 = vmatprep.subr.bf16.mxu0 0
    %2410 = vmatpush2.bf16.msra.mxu0 0
    %2411 = vmatprep.subr.bf16.mxu0 0
    %2412 = vmatpush2.bf16.msra.mxu0 0
    %2413 = vmatprep.subr.bf16.mxu0 0
    %2414 = vmatpush2.bf16.msra.mxu0 0
    %2415 = vmatprep.mubr.bf16.mxu0 0
    %2416 = vmatmul.mubr.bf16.gmra.mxu0 %v2381
    %v2417 = vpop.f32.mrf.mxu0
    %v2418 = vadd.f32 %v2378, %v2417
    %v2419 = vpop.f32.mrf.mxu0
    %v2420 = vpop.f32.mrf.mxu0
    %v2421 = vadd.f32 %v2378, %v2420
    %v2422 = vpop.f32.mrf.mxu0
    %2423 = vdwg.mxu0
    %v2424 = vmax.f32 %v2418, 0.0
    %v2425 = vmax.f32 %v2421, 0.0
    %v2426 = vld [vmem:[%s49] sm:$0xff]
    %v2427 = vld [vmem:[%s49 + $0x8] sm:$0xff]
    %v2428 = vld [vmem:[%s63] sm:$0xff]
    %v2429 = vld [vmem:[%s63 + $0x8] sm:$0xff]
    %v2430 = vld [vmem:[%s63 + $0x10] sm:$0xff]
    %v2431 = vld [vmem:[%s63 + $0x18] sm:$0xff]
    %v2432 = vpack.c.bf16 %v2425, %v2424
    %v2433 = vpack.c.bf16 %v2429, %v2428
    %v2434 = vpack.c.bf16 %v2431, %v2430
    %v2436 = vsel %vm185, %v2432, 0
    %2438 = vmatprep.subr.bf16.mxu0 0
    %2439 = vmatpush1.bf16.msra.mxu0 0
    %2440 = vmatprep.subr.bf16.mxu0 0
    %2441 = vmatpush1.bf16.msra.mxu0 0
    %2442 = vmatprep.subr.bf16.mxu0 0
    %2443 = vmatpush1.bf16.msra.mxu0 0
    %2444 = vmatprep.subr.bf16.mxu0 0
    %2445 = vmatpush1.bf16.msra.mxu0 0
    %2446 = vmatprep.subr.bf16.mxu0 0
    %2447 = vmatpush1.bf16.msra.mxu0 0
    %2448 = vmatprep.subr.bf16.mxu0 0
    %2449 = vmatpush1.bf16.msra.mxu0 0
    %2450 = vmatprep.subr.bf16.mxu0 0
    %2451 = vmatpush1.bf16.msra.mxu0 %v2434
    %2452 = vmatprep.subr.bf16.mxu0 0
    %2453 = vmatpush1.bf16.msra.mxu0 %v2433
    %2454 = vmatprep.subr.bf16.mxu0 0
    %2455 = vmatpush2.bf16.msra.mxu0 0
    %2456 = vmatprep.subr.bf16.mxu0 0
    %2457 = vmatpush2.bf16.msra.mxu0 0
    %2458 = vmatprep.subr.bf16.mxu0 0
    %2459 = vmatpush2.bf16.msra.mxu0 0
    %2460 = vmatprep.subr.bf16.mxu0 0
    %2461 = vmatpush2.bf16.msra.mxu0 0
    %2462 = vmatprep.subr.bf16.mxu0 0
    %2463 = vmatpush2.bf16.msra.mxu0 0
    %2464 = vmatprep.subr.bf16.mxu0 0
    %2465 = vmatpush2.bf16.msra.mxu0 0
    %2466 = vmatprep.subr.bf16.mxu0 0
    %2467 = vmatpush2.bf16.msra.mxu0 0
    %2468 = vmatprep.subr.bf16.mxu0 0
    %2469 = vmatpush2.bf16.msra.mxu0 0
    %2470 = vmatprep.mubr.bf16.mxu0 0
    %2471 = vmatmul.mubr.bf16.gmra.mxu0 %v2436
    %v2472 = vpop.f32.mrf.mxu0
    %v2473 = vadd.f32 0.0, %v2472
    %v2474 = vpop.f32.mrf.mxu0
    %v2475 = vpop.f32.mrf.mxu0
    %v2476 = vadd.f32 0.0, %v2475
    %v2477 = vpop.f32.mrf.mxu0
    %2478 = vdwg.mxu0
    %v2479 = vpack.c.bf16 %v2427, %v2426
    %v2480 = vpack.c.bf16 %v2476, %v2473
    %v2481 = vld [vmem:[%s65] sm:$0x1]
    %v2483 = vlaneseq
    %v2484 = vshrl.u32 %v2483, 7
    %v2485 = vsub.s32 0, %v2484
    %v2486 = vrot.slane %v2481, %v2485
    %v2489 = vsel %vm273, %v2479, 0
    %2491 = vmatprep.subr.bf16.mxu0 0
    %2492 = vmatpush1.bf16.msra.mxu0 0
    %2493 = vmatprep.subr.bf16.mxu0 0
    %2494 = vmatpush1.bf16.msra.mxu0 0
    %2495 = vmatprep.subr.bf16.mxu0 0
    %2496 = vmatpush1.bf16.msra.mxu0 0
    %2497 = vmatprep.subr.bf16.mxu0 0
    %2498 = vmatpush1.bf16.msra.mxu0 0
    %2499 = vmatprep.subr.bf16.mxu0 0
    %2500 = vmatpush1.bf16.msra.mxu0 0
    %2501 = vmatprep.subr.bf16.mxu0 0
    %2502 = vmatpush1.bf16.msra.mxu0 0
    %2503 = vmatprep.subr.bf16.mxu0 0
    %2504 = vmatpush1.bf16.msra.mxu0 0
    %2505 = vmatprep.subr.bf16.mxu0 0
    %2506 = vmatpush1.bf16.msra.mxu0 %v2480
    %2507 = vmatprep.subr.bf16.mxu0 0
    %2508 = vmatpush2.bf16.msra.mxu0 0
    %2509 = vmatprep.subr.bf16.mxu0 0
    %2510 = vmatpush2.bf16.msra.mxu0 0
    %2511 = vmatprep.subr.bf16.mxu0 0
    %2512 = vmatpush2.bf16.msra.mxu0 0
    %2513 = vmatprep.subr.bf16.mxu0 0
    %2514 = vmatpush2.bf16.msra.mxu0 0
    %2515 = vmatprep.subr.bf16.mxu0 0
    %2516 = vmatpush2.bf16.msra.mxu0 0
    %2517 = vmatprep.subr.bf16.mxu0 0
    %2518 = vmatpush2.bf16.msra.mxu0 0
    %2519 = vmatprep.subr.bf16.mxu0 0
    %2520 = vmatpush2.bf16.msra.mxu0 0
    %2521 = vmatprep.subr.bf16.mxu0 0
    %2522 = vmatpush2.bf16.msra.mxu0 0
    %2523 = vmatprep.mubr.bf16.mxu0 0
    %2524 = vmatmul.mubr.bf16.gmra.mxu0 %v2489
    %v2525 = vpop.f32.mrf.mxu0
    %v2526 = vadd.f32 %v2486, %v2525
    %v2527 = vpop.f32.mrf.mxu0
    %v2528 = vpop.f32.mrf.mxu0
    %v2529 = vadd.f32 %v2486, %v2528
    %v2530 = vpop.f32.mrf.mxu0
    %2531 = vdwg.mxu0
    %v2532 = vmax.f32 %v2526, 0.0
    %v2533 = vmax.f32 %v2529, 0.0
    %v2534 = vld [vmem:[%s67] sm:$0xff]
    %v2535 = vld [vmem:[%s67 + $0x8] sm:$0xff]
    %v2536 = vld [vmem:[%s69] sm:$0xff]
    %v2537 = vld [vmem:[%s69 + $0x8] sm:$0xff]
    %2539 = vset.pattern.permute.xlu0 0
    %2540 = vperm.xlu0 %2539, %v2534
    %v2541 = vpop.permute.xlu0 %2540
    %2544 = vset.pattern.permute.xlu0 0
    %2545 = vperm.xlu0 %2544, %v2535
    %v2546 = vpop.permute.xlu0 %2545
    %v2548 = vmul.f32 %v2320, %v2541
    %v2549 = vmul.f32 %v2321, %v2546
    %v2550 = vsub.f32 1.0, %v2534
    %v2551 = vsub.f32 1.0, %v2535
    %v2552 = vmul.f32 %v2550, -1000.0
    %v2553 = vmul.f32 %v2551, -1000.0
    %2555 = vset.pattern.permute.xlu0 0
    %2556 = vperm.xlu0 %2555, %v2552
    %v2557 = vpop.permute.xlu0 %2556
    %2560 = vset.pattern.permute.xlu0 0
    %2561 = vperm.xlu0 %2560, %v2553
    %v2562 = vpop.permute.xlu0 %2561
    %v2564 = vadd.f32 %v2548, %v2557
    %v2565 = vadd.f32 %v2549, %v2562
    %v2566 = vsel %vm185, %v2564, -inf
    %v2567 = vrot.slane %v2566, 4
    %v2568 = vmax.f32 %v2566, %v2567
    %v2569 = vrot.slane %v2568, 2
    %v2570 = vmax.f32 %v2568, %v2569
    %v2571 = vrot.slane %v2570, 1
    %v2572 = vmax.f32 %v2570, %v2571
    %v2573 = vsel %vm185, %v2565, -inf
    %v2574 = vrot.slane %v2573, 4
    %v2575 = vmax.f32 %v2573, %v2574
    %v2576 = vrot.slane %v2575, 2
    %v2577 = vmax.f32 %v2575, %v2576
    %v2578 = vrot.slane %v2577, 1
    %v2579 = vmax.f32 %v2577, %v2578
    %v2583 = vunpack.c.l.s4 1983009808
    %v2584 = vunpack.c.0.s8 %v2583
    %v2585 = vlaneseq
    %v2586 = vshrl.u32 %v2585, 7
    %v2587 = vsub.s32 %v2584, %v2586
    %v2588 = vrot.slane %v2572, %v2587
    %v2590 = vunpack.c.l.s4 1983009808
    %v2591 = vunpack.c.0.s8 %v2590
    %v2592 = vlaneseq
    %v2593 = vshrl.u32 %v2592, 7
    %v2594 = vsub.s32 %v2591, %v2593
    %v2595 = vrot.slane %v2579, %v2594
    %vm2596 = vcmask 1044484
    %v2597 = vsel %vm2596, %v2588, %v2588
    %vm2598 = vcmask 1046534
    %v2599 = vsel %vm2598, %v2588, %v2597
    %v2600 = vrot.slane %v2595, 7
    %vm2601 = vcmask 1041409
    %v2602 = vsel %vm2601, %v2600, %v2599
    %vm2603 = vcmask 1043459
    %v2604 = vsel %vm2603, %v2600, %v2602
    %vm2605 = vcmask 1045509
    %v2606 = vsel %vm2605, %v2600, %v2604
    %vm2607 = vcmask 1047559
    %v2608 = vsel %vm2607, %v2600, %v2606
    %vm2610 = vcmask 254976
    %2611 = vst.msk [vmem:[#allocation4] sm:$0x3] %vm2610, %v2608
    %2613 = vset.pattern.permute.xlu0 0
    %2614 = vperm.xlu0 %2613, %v2536
    %v2615 = vpop.permute.xlu0 %2614
    %2618 = vset.pattern.permute.xlu0 0
    %2619 = vperm.xlu0 %2618, %v2537
    %v2620 = vpop.permute.xlu0 %2619
    %v2622 = vmul.f32 %v2320, %v2615
    %v2623 = vmul.f32 %v2321, %v2620
    %v2624 = vsub.f32 1.0, %v2536
    %v2625 = vsub.f32 1.0, %v2537
    %v2626 = vmul.f32 %v2624, -1000.0
    %v2627 = vmul.f32 %v2625, -1000.0
    %2629 = vset.pattern.permute.xlu0 0
    %2630 = vperm.xlu0 %2629, %v2626
    %v2631 = vpop.permute.xlu0 %2630
    %2634 = vset.pattern.permute.xlu0 0
    %2635 = vperm.xlu0 %2634, %v2627
    %v2636 = vpop.permute.xlu0 %2635
    %v2638 = vadd.f32 %v2622, %v2631
    %v2639 = vadd.f32 %v2623, %v2636
    %v2640 = vsel %vm185, %v2638, -inf
    %v2641 = vrot.slane %v2640, 4
    %v2642 = vmax.f32 %v2640, %v2641
    %v2643 = vrot.slane %v2642, 2
    %v2644 = vmax.f32 %v2642, %v2643
    %v2645 = vrot.slane %v2644, 1
    %v2646 = vmax.f32 %v2644, %v2645
    %v2647 = vsel %vm185, %v2639, -inf
    %v2648 = vrot.slane %v2647, 4
    %v2649 = vmax.f32 %v2647, %v2648
    %v2650 = vrot.slane %v2649, 2
    %v2651 = vmax.f32 %v2649, %v2650
    %v2652 = vrot.slane %v2651, 1
    %v2653 = vmax.f32 %v2651, %v2652
    %v2657 = vunpack.c.l.s4 1983009808
    %v2658 = vunpack.c.0.s8 %v2657
    %v2659 = vlaneseq
    %v2660 = vshrl.u32 %v2659, 7
    %v2661 = vsub.s32 %v2658, %v2660
    %v2662 = vrot.slane %v2646, %v2661
    %v2664 = vunpack.c.l.s4 1983009808
    %v2665 = vunpack.c.0.s8 %v2664
    %v2666 = vlaneseq
    %v2667 = vshrl.u32 %v2666, 7
    %v2668 = vsub.s32 %v2665, %v2667
    %v2669 = vrot.slane %v2653, %v2668
    %v2670 = vsel %vm2596, %v2662, %v2662
    %v2671 = vsel %vm2598, %v2662, %v2670
    %v2672 = vrot.slane %v2669, 7
    %v2673 = vsel %vm2601, %v2672, %v2671
    %v2674 = vsel %vm2603, %v2672, %v2673
    %v2675 = vsel %vm2605, %v2672, %v2674
    %v2676 = vsel %vm2607, %v2672, %v2675
    %2677 = vrot.lane.b32.xlu0 %v2676, 32
    %v2678 = vpop.permute.xlu0 %2677
    %vm2680 = vcmask 517376
    %2681 = vst.msk [vmem:[#allocation4] sm:$0x3] %vm2680, %v2678
    %v2682 = vmul.f32 %v2532, %v2541
    %v2683 = vmul.f32 %v2533, %v2546
    %v2684 = vadd.f32 %v2682, %v2557
    %v2685 = vadd.f32 %v2683, %v2562
    %v2686 = vsel %vm185, %v2684, -inf
    %v2687 = vrot.slane %v2686, 4
    %v2688 = vmax.f32 %v2686, %v2687
    %v2689 = vrot.slane %v2688, 2
    %v2690 = vmax.f32 %v2688, %v2689
    %v2691 = vrot.slane %v2690, 1
    %v2692 = vmax.f32 %v2690, %v2691
    %v2693 = vsel %vm185, %v2685, -inf
    %v2694 = vrot.slane %v2693, 4
    %v2695 = vmax.f32 %v2693, %v2694
    %v2696 = vrot.slane %v2695, 2
    %v2697 = vmax.f32 %v2695, %v2696
    %v2698 = vrot.slane %v2697, 1
    %v2699 = vmax.f32 %v2697, %v2698
    %v2703 = vunpack.c.l.s4 1983009808
    %v2704 = vunpack.c.0.s8 %v2703
    %v2705 = vlaneseq
    %v2706 = vshrl.u32 %v2705, 7
    %v2707 = vsub.s32 %v2704, %v2706
    %v2708 = vrot.slane %v2692, %v2707
    %v2710 = vunpack.c.l.s4 1983009808
    %v2711 = vunpack.c.0.s8 %v2710
    %v2712 = vlaneseq
    %v2713 = vshrl.u32 %v2712, 7
    %v2714 = vsub.s32 %v2711, %v2713
    %v2715 = vrot.slane %v2699, %v2714
    %v2716 = vsel %vm2596, %v2708, %v2708
    %v2717 = vsel %vm2598, %v2708, %v2716
    %v2718 = vrot.slane %v2715, 7
    %v2719 = vsel %vm2601, %v2718, %v2717
    %v2720 = vsel %vm2603, %v2718, %v2719
    %v2721 = vsel %vm2605, %v2718, %v2720
    %v2722 = vsel %vm2607, %v2718, %v2721
    %2723 = vrot.lane.b32.xlu0 %v2722, 64
    %v2724 = vpop.permute.xlu0 %2723
    %vm2726 = vcmask 779776
    %2727 = vst.msk [vmem:[#allocation4] sm:$0x3] %vm2726, %v2724
    %v2728 = vmul.f32 %v2532, %v2615
    %v2729 = vmul.f32 %v2533, %v2620
    %v2730 = vadd.f32 %v2728, %v2631
    %v2731 = vadd.f32 %v2729, %v2636
    %v2732 = vsel %vm185, %v2730, -inf
    %v2733 = vrot.slane %v2732, 4
    %v2734 = vmax.f32 %v2732, %v2733
    %v2735 = vrot.slane %v2734, 2
    %v2736 = vmax.f32 %v2734, %v2735
    %v2737 = vrot.slane %v2736, 1
    %v2738 = vmax.f32 %v2736, %v2737
    %v2739 = vsel %vm185, %v2731, -inf
    %v2740 = vrot.slane %v2739, 4
    %v2741 = vmax.f32 %v2739, %v2740
    %v2742 = vrot.slane %v2741, 2
    %v2743 = vmax.f32 %v2741, %v2742
    %v2744 = vrot.slane %v2743, 1
    %v2745 = vmax.f32 %v2743, %v2744
    %v2749 = vunpack.c.l.s4 1983009808
    %v2750 = vunpack.c.0.s8 %v2749
    %v2751 = vlaneseq
    %v2752 = vshrl.u32 %v2751, 7
    %v2753 = vsub.s32 %v2750, %v2752
    %v2754 = vrot.slane %v2738, %v2753
    %v2756 = vunpack.c.l.s4 1983009808
    %v2757 = vunpack.c.0.s8 %v2756
    %v2758 = vlaneseq
    %v2759 = vshrl.u32 %v2758, 7
    %v2760 = vsub.s32 %v2757, %v2759
    %v2761 = vrot.slane %v2745, %v2760
    %v2762 = vsel %vm2596, %v2754, %v2754
    %v2763 = vsel %vm2598, %v2754, %v2762
    %v2764 = vrot.slane %v2761, 7
    %v2765 = vsel %vm2601, %v2764, %v2763
    %v2766 = vsel %vm2603, %v2764, %v2765
    %v2767 = vsel %vm2605, %v2764, %v2766
    %v2768 = vsel %vm2607, %v2764, %v2767
    %2769 = vrot.lane.b32.xlu0 %v2768, 96
    %v2770 = vpop.permute.xlu0 %2769
    %vm2772 = vcmask 1042176
    %2773 = vst.msk [vmem:[#allocation4] sm:$0x3] %vm2772, %v2770
    %2774 = vst.msk [vmem:[#allocation4 + $0x2] sm:$0x3] %vm2610, %v1079
    %s2775 = sld [smem:[#allocation5]]
    %s2776 = scalar_lea.vmem [#allocation2], %s2775
    %v2777 = vld [vmem:[%s2776] sm:$0x1]
    %v2780 = vunpack.c.l.s4 1983009808
    %v2781 = vunpack.c.0.s8 %v2780
    %v2782 = vlaneseq
    %v2783 = vshrl.u32 %v2782, 7
    %v2784 = vsub.s32 %v2781, %v2783
    %v2785 = vrot.slane %v2777, %v2784
    %2786 = vrot.lane.b32.xlu0 %v2785, 32
    %v2787 = vpop.permute.xlu0 %2786
    %vm2789 = vcmask 516352
    %2790 = vst.msk [vmem:[#allocation4 + $0x2] sm:$0x1] %vm2789, %v2787
    %s2791 = sld [smem:[#allocation5 + $0x1]]
    %s2792 = scalar_lea.vmem [#allocation2], %s2791
    %v2793 = vld [vmem:[%s2792] sm:$0x1]
    %v2796 = vunpack.c.l.s4 1983009808
    %v2797 = vunpack.c.0.s8 %v2796
    %v2798 = vlaneseq
    %v2799 = vshrl.u32 %v2798, 7
    %v2800 = vsub.s32 %v2797, %v2799
    %v2801 = vrot.slane %v2793, %v2800
    %2802 = vrot.lane.b32.xlu0 %v2801, 64
    %v2803 = vpop.permute.xlu0 %2802
    %vm2805 = vcmask 778752
    %2806 = vst.msk [vmem:[#allocation4 + $0x2] sm:$0x1] %vm2805, %v2803
    %s2807 = sld [smem:[#allocation5 + $0x2]]
    %s2808 = scalar_lea.vmem [#allocation2], %s2807
    %v2809 = vld [vmem:[%s2808] sm:$0x1]
    %v2812 = vunpack.c.l.s4 1983009808
    %v2813 = vunpack.c.0.s8 %v2812
    %v2814 = vlaneseq
    %v2815 = vshrl.u32 %v2814, 7
    %v2816 = vsub.s32 %v2813, %v2815
    %v2817 = vrot.slane %v2809, %v2816
    %2818 = vrot.lane.b32.xlu0 %v2817, 96
    %v2819 = vpop.permute.xlu0 %2818
    %vm2821 = vcmask 1041152
    %2822 = vst.msk [vmem:[#allocation4 + $0x2] sm:$0x1] %vm2821, %v2819
    %s2823 = sld [smem:[#allocation5 + $0x3]]
    %s2824 = scalar_lea.vmem [#allocation2], %s2823
    %v2825 = vld [vmem:[%s2824] sm:$0x1]
    %vm2826 = vcmask 253952
    %2827 = vst.msk [vmem:[#allocation4 + $0x4] sm:$0x1] %vm2826, %v2825
    %s2828 = sld [smem:[#allocation5 + $0x80]]
    %s2829 = sadd.s32 %s2828, 8
    %s2830 = scalar_lea.vmem [#allocation2], %s2829
    %v2831 = vld [vmem:[%s2830] sm:$0x1]
    %v2834 = vunpack.c.l.s4 1983009808
    %v2835 = vunpack.c.0.s8 %v2834
    %v2836 = vlaneseq
    %v2837 = vshrl.u32 %v2836, 7
    %v2838 = vsub.s32 %v2835, %v2837
    %v2839 = vrot.slane %v2831, %v2838
    %2840 = vrot.lane.b32.xlu0 %v2839, 32
    %v2841 = vpop.permute.xlu0 %2840
    %2843 = vst.msk [vmem:[#allocation4 + $0x3] sm:$0x1] %vm2789, %v2841
    %s2844 = sld [smem:[#allocation5 + $0x81]]
    %s2845 = sadd.s32 %s2844, 8
    %s2846 = scalar_lea.vmem [#allocation2], %s2845
    %v2847 = vld [vmem:[%s2846] sm:$0x1]
    %v2850 = vunpack.c.l.s4 1983009808
    %v2851 = vunpack.c.0.s8 %v2850
    %v2852 = vlaneseq
    %v2853 = vshrl.u32 %v2852, 7
    %v2854 = vsub.s32 %v2851, %v2853
    %v2855 = vrot.slane %v2847, %v2854
    %2856 = vrot.lane.b32.xlu0 %v2855, 64
    %v2857 = vpop.permute.xlu0 %2856
    %2859 = vst.msk [vmem:[#allocation4 + $0x3] sm:$0x1] %vm2805, %v2857
    %s2860 = sld [smem:[#allocation5 + $0x82]]
    %s2861 = sadd.s32 %s2860, 8
    %s2862 = scalar_lea.vmem [#allocation2], %s2861
    %v2863 = vld [vmem:[%s2862] sm:$0x1]
    %v2866 = vunpack.c.l.s4 1983009808
    %v2867 = vunpack.c.0.s8 %v2866
    %v2868 = vlaneseq
    %v2869 = vshrl.u32 %v2868, 7
    %v2870 = vsub.s32 %v2867, %v2869
    %v2871 = vrot.slane %v2863, %v2870
    %2872 = vrot.lane.b32.xlu0 %v2871, 96
    %v2873 = vpop.permute.xlu0 %2872
    %2875 = vst.msk [vmem:[#allocation4 + $0x3] sm:$0x1] %vm2821, %v2873
    %s2876 = sld [smem:[#allocation5 + $0x83]]
    %s2877 = sadd.s32 %s2876, 8
    %s2878 = scalar_lea.vmem [#allocation2], %s2877
    %v2879 = vld [vmem:[%s2878] sm:$0x1]
    %2880 = vst.msk [vmem:[#allocation4 + $0x5] sm:$0x1] %vm2826, %v2879
    %v2881 = vld [vmem:[#allocation4] sm:$0x3f]
    %v2882 = vld [vmem:[%s71] sm:$0xff]
    %v2883 = vld [vmem:[%s71 + $0x8] sm:$0xff]
    %v2884 = vld [vmem:[%s71 + $0x10] sm:$0xff]
    %v2885 = vld [vmem:[%s71 + $0x18] sm:$0xff]
    %v2886 = vld [vmem:[%s71 + $0x20] sm:$0xff]
    %v2887 = vld [vmem:[%s71 + $0x28] sm:$0xff]
    %v2888 = vld [vmem:[%s71 + $0x30] sm:$0xff]
    %v2889 = vld [vmem:[%s71 + $0x38] sm:$0xff]
    %v2890 = vld [vmem:[%s71 + $0x40] sm:$0xff]
    %v2891 = vld [vmem:[%s71 + $0x48] sm:$0xff]
    %v2892 = vld [vmem:[%s71 + $0x50] sm:$0xff]
    %v2893 = vld [vmem:[%s71 + $0x58] sm:$0xff]
    %v2894 = vld [vmem:[%s71 + $0x60] sm:$0xff]
    %v2895 = vld [vmem:[%s71 + $0x68] sm:$0xff]
    %v2896 = vld [vmem:[%s71 + $0x70] sm:$0xff]
    %v2897 = vld [vmem:[%s71 + $0x78] sm:$0xff]
    %v2898 = vld [vmem:[%s71 + $0x80] sm:$0xff]
    %v2899 = vld [vmem:[%s71 + $0x88] sm:$0xff]
    %v2900 = vld [vmem:[%s71 + $0x90] sm:$0xff]
    %v2901 = vld [vmem:[%s71 + $0x98] sm:$0xff]
    %v2902 = vld [vmem:[%s71 + $0xa0] sm:$0xff]
    %v2903 = vld [vmem:[%s71 + $0xa8] sm:$0xff]
    %v2904 = vld [vmem:[%s71 + $0xb0] sm:$0xff]
    %v2905 = vld [vmem:[%s71 + $0xb8] sm:$0xff]
    %v2906 = vld [vmem:[%s71 + $0xc0] sm:$0xff]
    %v2907 = vld [vmem:[%s71 + $0xc8] sm:$0xff]
    %v2908 = vld [vmem:[%s71 + $0xd0] sm:$0xff]
    %v2909 = vld [vmem:[%s71 + $0xd8] sm:$0xff]
    %v2910 = vld [vmem:[%s71 + $0xe0] sm:$0xff]
    %v2911 = vld [vmem:[%s71 + $0xe8] sm:$0xff]
    %v2912 = vld [vmem:[%s71 + $0xf0] sm:$0xff]
    %v2913 = vld [vmem:[%s71 + $0xf8] sm:$0xff]
    %v2914 = vld [vmem:[%s71 + $0x100] sm:$0xff]
    %v2915 = vld [vmem:[%s71 + $0x108] sm:$0xff]
    %v2916 = vld [vmem:[%s71 + $0x110] sm:$0xff]
    %v2917 = vld [vmem:[%s71 + $0x118] sm:$0xff]
    %v2919 = vcombine.high %v2881, %v2881
    %v2921 = vunpack.c.l.s4 1983009808
    %v2922 = vunpack.c.0.s8 %v2921
    %v2923 = vlaneseq
    %v2924 = vshrl.u32 %v2923, 7
    %v2925 = vsub.s32 %v2922, %v2924
    %v2926 = vrot.slane %v2881, %v2925
    %v2928 = vunpack.c.l.s4 1983009808
    %v2929 = vunpack.c.0.s8 %v2928
    %v2930 = vlaneseq
    %v2931 = vshrl.u32 %v2930, 7
    %v2932 = vsub.s32 %v2929, %v2931
    %v2933 = vrot.slane %v2919, %v2932
    %v2934 = vcombine.high %v2926, %v2926
    %v2938 = vpack.c.bf16 %v2926, %v2926
    %v2939 = vpack.c.bf16 %v2934, %v2934
    %v2940 = vpack.c.bf16 %v2933, %v2933
    %v2941 = vpack.c.bf16 %v2883, %v2882
    %v2942 = vpack.c.bf16 %v2885, %v2884
    %v2943 = vpack.c.bf16 %v2887, %v2886
    %v2944 = vpack.c.bf16 %v2889, %v2888
    %v2945 = vpack.c.bf16 %v2891, %v2890
    %v2946 = vpack.c.bf16 %v2893, %v2892
    %v2947 = vpack.c.bf16 %v2895, %v2894
    %v2948 = vpack.c.bf16 %v2897, %v2896
    %v2949 = vpack.c.bf16 %v2899, %v2898
    %v2950 = vpack.c.bf16 %v2901, %v2900
    %v2951 = vpack.c.bf16 %v2903, %v2902
    %v2952 = vpack.c.bf16 %v2905, %v2904
    %v2953 = vpack.c.bf16 %v2907, %v2906
    %v2954 = vpack.c.bf16 %v2909, %v2908
    %v2955 = vpack.c.bf16 %v2911, %v2910
    %v2956 = vpack.c.bf16 %v2913, %v2912
    %v2957 = vpack.c.bf16 %v2915, %v2914
    %v2958 = vpack.c.bf16 %v2917, %v2916
    %v2959 = vld [vmem:[%s73] sm:$0x1]
    %v2961 = vlaneseq
    %v2962 = vshrl.u32 %v2961, 7
    %v2963 = vsub.s32 0, %v2962
    %v2964 = vrot.slane %v2959, %v2963
    %v2967 = vsel %vm185, %v2940, 0
    %2969 = vmatprep.subr.bf16.mxu0 0
    %2970 = vmatpush1.bf16.msra.mxu0 %v2948
    %2971 = vmatprep.subr.bf16.mxu0 0
    %2972 = vmatpush1.bf16.msra.mxu0 %v2947
    %2973 = vmatprep.subr.bf16.mxu0 0
    %2974 = vmatpush1.bf16.msra.mxu0 %v2946
    %2975 = vmatprep.subr.bf16.mxu0 0
    %2976 = vmatpush1.bf16.msra.mxu0 %v2945
    %2977 = vmatprep.subr.bf16.mxu0 0
    %2978 = vmatpush1.bf16.msra.mxu0 %v2944
    %2979 = vmatprep.subr.bf16.mxu0 0
    %2980 = vmatpush1.bf16.msra.mxu0 %v2943
    %2981 = vmatprep.subr.bf16.mxu0 0
    %2982 = vmatpush1.bf16.msra.mxu0 %v2942
    %2983 = vmatprep.subr.bf16.mxu0 0
    %2984 = vmatpush1.bf16.msra.mxu0 %v2941
    %2985 = vmatprep.subr.bf16.mxu0 0
    %2986 = vmatpush2.bf16.msra.mxu0 %v2956
    %2987 = vmatprep.subr.bf16.mxu0 0
    %2988 = vmatpush2.bf16.msra.mxu0 %v2955
    %2989 = vmatprep.subr.bf16.mxu0 0
    %2990 = vmatpush2.bf16.msra.mxu0 %v2954
    %2991 = vmatprep.subr.bf16.mxu0 0
    %2992 = vmatpush2.bf16.msra.mxu0 %v2953
    %2993 = vmatprep.subr.bf16.mxu0 0
    %2994 = vmatpush2.bf16.msra.mxu0 %v2952
    %2995 = vmatprep.subr.bf16.mxu0 0
    %2996 = vmatpush2.bf16.msra.mxu0 %v2951
    %2997 = vmatprep.subr.bf16.mxu0 0
    %2998 = vmatpush2.bf16.msra.mxu0 %v2950
    %2999 = vmatprep.subr.bf16.mxu0 0
    %3000 = vmatpush2.bf16.msra.mxu0 %v2949
    %3001 = vmatprep.mubr.bf16.mxu0 %v2939
    %3002 = vmatmul.mubr.bf16.gmra.mxu0 %v2938
    %v3003 = vpop.f32.mrf.mxu0
    %v3004 = vadd.f32 %v2964, %v3003
    %v3005 = vpop.f32.mrf.mxu0
    %v3006 = vpop.f32.mrf.mxu0
    %v3007 = vpop.f32.mrf.mxu0
    %3008 = vdwg.mxu0
    %3009 = vmatprep.subr.bf16.mxu0 0
    %3010 = vmatpush1.bf16.msra.mxu0 0
    %3011 = vmatprep.subr.bf16.mxu0 0
    %3012 = vmatpush1.bf16.msra.mxu0 0
    %3013 = vmatprep.subr.bf16.mxu0 0
    %3014 = vmatpush1.bf16.msra.mxu0 0
    %3015 = vmatprep.subr.bf16.mxu0 0
    %3016 = vmatpush1.bf16.msra.mxu0 0
    %3017 = vmatprep.subr.bf16.mxu0 0
    %3018 = vmatpush1.bf16.msra.mxu0 0
    %3019 = vmatprep.subr.bf16.mxu0 0
    %3020 = vmatpush1.bf16.msra.mxu0 0
    %3021 = vmatprep.subr.bf16.mxu0 0
    %3022 = vmatpush1.bf16.msra.mxu0 %v2958
    %3023 = vmatprep.subr.bf16.mxu0 0
    %3024 = vmatpush1.bf16.msra.mxu0 %v2957
    %3025 = vmatprep.subr.bf16.mxu0 0
    %3026 = vmatpush2.bf16.msra.mxu0 0
    %3027 = vmatprep.subr.bf16.mxu0 0
    %3028 = vmatpush2.bf16.msra.mxu0 0
    %3029 = vmatprep.subr.bf16.mxu0 0
    %3030 = vmatpush2.bf16.msra.mxu0 0
    %3031 = vmatprep.subr.bf16.mxu0 0
    %3032 = vmatpush2.bf16.msra.mxu0 0
    %3033 = vmatprep.subr.bf16.mxu0 0
    %3034 = vmatpush2.bf16.msra.mxu0 0
    %3035 = vmatprep.subr.bf16.mxu0 0
    %3036 = vmatpush2.bf16.msra.mxu0 0
    %3037 = vmatprep.subr.bf16.mxu0 0
    %3038 = vmatpush2.bf16.msra.mxu0 0
    %3039 = vmatprep.subr.bf16.mxu0 0
    %3040 = vmatpush2.bf16.msra.mxu0 0
    %3041 = vmatprep.mubr.bf16.mxu0 0
    %3042 = vmatmul.mubr.bf16.gmra.mxu0 %v2967
    %v3043 = vpop.f32.mrf.mxu0
    %v3044 = vadd.f32 %v3004, %v3043
    %v3045 = vpop.f32.mrf.mxu0
    %v3046 = vpop.f32.mrf.mxu0
    %v3047 = vpop.f32.mrf.mxu0
    %3048 = vdwg.mxu0
    %vm3049 = vcmask 33792
    %3050 = vst.msk [vmem:[#allocation8] sm:$0x3] %vm3049, %v3044
    // Predicated region
    $region154: #{model_forward.1} parent=1 // pred_check
      _
    $region155: #{model_forward.1} parent=1 // pred_check_branch
      %3052 = sbr.rel (0) target = $region157
    $region156: #{model_forward.1} parent=1 // pred_region
      %s3054 = ssub.s32 32, 32
      %3055 = vsyncadd [#allocation6], %s3054
      %s3057 = sshll.u32 [#allocation8], 4
      %s3058 = int_to_ptr.vmem [resolvable:$true] %s3057
      %3060 = dma.vmem_to_hbm [thread:$0]  %s3058, 32, %s75, [#allocation6]
    $region157: #{model_forward.1} parent=1 // pred_fallthru
      _
    // Predicated region
    $region158: #{model_forward.1} parent=1 // pred_check
      _
    $region159: #{model_forward.1} parent=1 // pred_check_branch
      %3062 = sbr.rel (0) target = $region161
    $region160: #{model_forward.1} parent=1 // pred_region
      %3063 = dma.done [#allocation6], 32
    $region161: #{model_forward.1} parent=1 // pred_fallthru
      _
    %3064 = vsyncpa [#allocation6], 1
    %3065 = vsyncpa [#allocation7], 1

</llo_original>
